<compile_context>
chip_gen: v7x
topology: tpu7x:2x2x1
jax: 0.10.0
libtpu: 0.0.40
codegen_flags: <defaults>
</compile_context>

<pallas_src>
import jax
import jax.numpy as jnp
from jax.experimental import pallas as pl
from jax.experimental.pallas import tpu as pltpu

FEATURE_DIM = 32   # decoder input width  (feature_dim in the module)
INPUT_DIM = 64     # decoder output width (input_dim in the module)
OUT_P = 128        # lane-padded output width (unmasked final store)
H1, H2, H3 = 2000, 500, 500           # logical hidden widths (PyTorch module)
H1P, H2P, H3P = 2048, 512, 512        # lane-padded hidden widths
TK = 1024                             # layer-2 reduction chunk per grid step
NK = H1P // TK                        # 2 grid steps


def decoder_kernel(x_ref,
                   w1_ref, b1_ref,
                   w2_ref, b2_ref,
                   w3_ref, b3_ref,
                   w4_ref, b4_ref,
                   o_ref,
                   h1_ref, acc_ref):
    k = pl.program_id(0)

    # Step 0: layer 1 over the full padded width, cached as bf16 for layer 2.
    @pl.when(k == 0)
    def _():
        h1 = jnp.dot(x_ref[...].astype(jnp.bfloat16), w1_ref[...],
                     preferred_element_type=jnp.float32)
        h1_ref[...] = jnp.maximum(h1 + b1_ref[...], 0.0).astype(jnp.bfloat16)
        acc_ref[...] = jnp.zeros_like(acc_ref)

    # Layer 2 partial reduction over H1: acc += h1[:, chunk] @ W2[chunk, :]
    start = pl.multiple_of(k * TK, TK)
    h1_chunk = h1_ref[:, pl.ds(start, TK)]
    acc_ref[...] += jnp.dot(h1_chunk, w2_ref[...],
                            preferred_element_type=jnp.float32)

    # Last step: finish layer 2, then layers 3 and 4 (epilogue).
    @pl.when(k == pl.num_programs(0) - 1)
    def _():
        h2 = jnp.maximum(acc_ref[...] + b2_ref[...], 0.0)
        h3 = jnp.dot(h2.astype(jnp.bfloat16), w3_ref[...],
                     preferred_element_type=jnp.float32)
        h3 = jnp.maximum(h3 + b3_ref[...], 0.0)
        h4 = jnp.dot(h3.astype(jnp.bfloat16), w4_ref[...],
                     preferred_element_type=jnp.float32)
        o_ref[...] = (h4 + b4_ref[...]).astype(o_ref.dtype)


def _fixed(shape):
    # Full-array block, same block for every grid step (VMEM-resident).
    return pl.BlockSpec(shape, lambda k, _s=shape: tuple(0 for _ in _s))


def decoder_forward(x, prepped):
    """x: (B, FEATURE_DIM) f32; prepped: output of prepare_params()."""
    w1, b1, w2, b2, w3, b3, w4, b4 = prepped
    B = x.shape[0]

    in_specs = [
        _fixed((B, FEATURE_DIM)),                    # x        (resident)
        _fixed((FEATURE_DIM, H1P)),                  # W1       (resident)
        _fixed((1, H1P)),                            # b1       (resident)
        pl.BlockSpec((TK, H2P), lambda k: (k, 0)),   # W2 row chunk (streamed)
        _fixed((1, H2P)),                            # b2
        _fixed((H2P, H3P)),                          # W3
        _fixed((1, H3P)),                            # b3
        _fixed((H3P, OUT_P)),                        # W4 (lane-padded)
        _fixed((1, OUT_P)),                          # b4 (lane-padded)
    ]

    out = pl.pallas_call(
        decoder_kernel,
        out_shape=jax.ShapeDtypeStruct((B, OUT_P), jnp.float32),
        grid=(NK,),
        in_specs=in_specs,
        out_specs=_fixed((B, OUT_P)),
        scratch_shapes=[
            pltpu.VMEM((B, H1P), jnp.bfloat16),   # cached layer-1 activations
            pltpu.VMEM((B, H2P), jnp.float32),    # layer-2 f32 accumulator
        ],
        compiler_params=pltpu.CompilerParams(
            dimension_semantics=("arbitrary",)),   # K reduction is sequential
    )(x, w1, b1, w2, b2, w3, b3, w4, b4)

    return out[:, :INPUT_DIM]


def _pad_to(a, shape):
    pads = [(0, t - s) for s, t in zip(a.shape, shape)]
    return jnp.pad(a, pads)


def prepare_params(params):
    """Zero-pad hidden/output dims to lane multiples; weights -> bf16, biases -> f32.

    Zero padding keeps the math identical: padded layer-1/2/3 outputs are
    relu(0 + 0) = 0 and the corresponding padded weight rows/cols are zero, so
    they contribute nothing downstream.  Call once; reuse across forward passes.
    """
    (w1, b1), (w2, b2), (w3, b3), (w4, b4) = params
    w1 = _pad_to(w1, (FEATURE_DIM, H1P)).astype(jnp.bfloat16)
    b1 = _pad_to(b1, (1, H1P)).astype(jnp.float32)
    w2 = _pad_to(w2, (H1P, H2P)).astype(jnp.bfloat16)
    b2 = _pad_to(b2, (1, H2P)).astype(jnp.float32)
    w3 = _pad_to(w3, (H2P, H3P)).astype(jnp.bfloat16)
    b3 = _pad_to(b3, (1, H3P)).astype(jnp.float32)
    w4 = _pad_to(w4, (H3P, OUT_P)).astype(jnp.bfloat16)
    b4 = _pad_to(b4, (1, OUT_P)).astype(jnp.float32)
    return (w1, b1, w2, b2, w3, b3, w4, b4)


def init_params(key, feature_dim, input_dim):
    """Deterministic synthetic params; shapes match the nn.Linear layers."""
    dims = [(feature_dim, H1), (H1, H2), (H2, H3), (H3, input_dim)]
    params = []
    for i, (fan_in, fan_out) in enumerate(dims):
        kw, kb, key = jax.random.split(jax.random.fold_in(key, i), 3)
        bound = 1.0 / jnp.sqrt(fan_in)  # PyTorch default Linear init range
        w = jax.random.uniform(kw, (fan_in, fan_out), jnp.float32, -bound, bound)
        b = jax.random.uniform(kb, (1, fan_out), jnp.float32, -bound, bound)
        params.append((w, b))
    return params


def decoder_reference_f32(x, params):
    """Pure f32 reference on the original (unpadded) params."""
    h = x
    for i, (w, b) in enumerate(params):
        h = h @ w + b
        if i < len(params) - 1:
            h = jnp.maximum(h, 0.0)
    return h


def decoder_reference_bf16(x, prepped):
    """Reference matching the kernel's precision pipeline (bf16 in, f32 acc)."""
    w1, b1, w2, b2, w3, b3, w4, b4 = prepped

    def lin(h, w, b):
        return jnp.dot(h.astype(jnp.bfloat16), w,
                       preferred_element_type=jnp.float32) + b

    h = jnp.maximum(lin(x, w1, b1), 0.0)
    h = jnp.maximum(lin(h, w2, b2), 0.0)
    h = jnp.maximum(lin(h, w3, b3), 0.0)
    return lin(h, w4, b4)[:, :INPUT_DIM]


if __name__ == "__main__":
    key = jax.random.PRNGKey(0)
    kx, kp = jax.random.split(key)

    batch = 8
    x = jax.random.normal(kx, (batch, FEATURE_DIM), jnp.float32)
    params = init_params(kp, FEATURE_DIM, INPUT_DIM)
    prepped = prepare_params(params)   # pad + cast once, amortized over calls

    out = jax.block_until_ready(decoder_forward(x, prepped))
    assert out.shape == (batch, INPUT_DIM)

    # Tight check against a reference that uses the same bf16/f32 pipeline.
    ref_bf16 = decoder_reference_bf16(x, prepped)
    assert jnp.allclose(out, ref_bf16, atol=1e-3, rtol=1e-3), \
        "mismatch vs bf16-pipeline reference"

    # Loose sanity check against the full-f32 original-module math.
    ref_f32 = decoder_reference_f32(x, params)
    assert jnp.allclose(out, ref_f32, atol=1e-1, rtol=1e-1), \
        "mismatch vs f32 reference"

    print("KERNEL_OK")
</pallas_src>

<mosaic_0001>
module attributes {stable_mosaic.version = 11 : i64} {
  func.func @decoder_kernel(%arg0: i32, %arg1: memref<8x32xf32, #tpu.memory_space<vmem>>, %arg2: memref<32x2048xbf16, #tpu.memory_space<vmem>>, %arg3: memref<1x2048xf32, #tpu.memory_space<vmem>>, %arg4: memref<1024x512xbf16, #tpu.memory_space<vmem>>, %arg5: memref<1x512xf32, #tpu.memory_space<vmem>>, %arg6: memref<512x512xbf16, #tpu.memory_space<vmem>>, %arg7: memref<1x512xf32, #tpu.memory_space<vmem>>, %arg8: memref<512x128xbf16, #tpu.memory_space<vmem>>, %arg9: memref<1x128xf32, #tpu.memory_space<vmem>>, %arg10: memref<8x128xf32, #tpu.memory_space<vmem>>, %arg11: memref<8x2048xbf16, #tpu.memory_space<vmem>>, %arg12: memref<8x512xf32, #tpu.memory_space<vmem>>) attributes {dimension_semantics = [#tpu.dimension_semantics<arbitrary>], iteration_bounds = array<i64: 2>, scalar_prefetch = 0 : i64, scratch_operands = 2 : i64, tpu.core_type = #tpu.core_type<tc>, window_params = [{pipeline_mode = #tpu.pipeline_mode<synchronous>, transform_indices = @transform_0, window_bounds = array<i64: 8, 32>}, {pipeline_mode = #tpu.pipeline_mode<synchronous>, transform_indices = @transform_1, window_bounds = array<i64: 32, 2048>}, {pipeline_mode = #tpu.pipeline_mode<synchronous>, transform_indices = @transform_2, window_bounds = array<i64: 1, 2048>}, {transform_indices = @transform_3, window_bounds = array<i64: 1024, 512>}, {pipeline_mode = #tpu.pipeline_mode<synchronous>, transform_indices = @transform_4, window_bounds = array<i64: 1, 512>}, {pipeline_mode = #tpu.pipeline_mode<synchronous>, transform_indices = @transform_5, window_bounds = array<i64: 512, 512>}, {pipeline_mode = #tpu.pipeline_mode<synchronous>, transform_indices = @transform_6, window_bounds = array<i64: 1, 512>}, {pipeline_mode = #tpu.pipeline_mode<synchronous>, transform_indices = @transform_7, window_bounds = array<i64: 512, 128>}, {pipeline_mode = #tpu.pipeline_mode<synchronous>, transform_indices = @transform_8, window_bounds = array<i64: 1, 128>}, {pipeline_mode = #tpu.pipeline_mode<synchronous>, transform_indices = @transform_9, window_bounds = array<i64: 8, 128>}]} {
    %c0_i32 = arith.constant 0 : i32
    %0 = arith.cmpi eq, %arg0, %c0_i32 : i32
    %1 = arith.extui %0 : i1 to i32
    %c0_i32_0 = arith.constant 0 : i32
    %2 = arith.cmpi ne, %1, %c0_i32_0 : i32
    scf.if %2 {
      %c0_8 = arith.constant 0 : index
      %c0_9 = arith.constant 0 : index
      %15 = vector.load %arg1[%c0_8, %c0_9] : memref<8x32xf32, #tpu.memory_space<vmem>>, vector<8x32xf32>
      %16 = arith.truncf %15 : vector<8x32xf32> to vector<8x32xbf16>
      %c0_10 = arith.constant 0 : index
      %c0_11 = arith.constant 0 : index
      %17 = vector.load %arg2[%c0_10, %c0_11] : memref<32x2048xbf16, #tpu.memory_space<vmem>>, vector<32x2048xbf16>
      %cst_12 = arith.constant dense<0.000000e+00> : vector<8x2048xf32>
      %18 = tpu.matmul %16, %17, %cst_12 {dimension_numbers = #tpu.dot_dimension_numbers<[1], [0], [0], [1], [0, 0, 1, 1], [], []>} : vector<8x32xbf16>, vector<32x2048xbf16>, vector<8x2048xf32> -> vector<8x2048xf32>
      %c0_13 = arith.constant 0 : index
      %c0_14 = arith.constant 0 : index
      %19 = vector.load %arg3[%c0_13, %c0_14] : memref<1x2048xf32, #tpu.memory_space<vmem>>, vector<1x2048xf32>
      %20 = vector.broadcast %19 : vector<1x2048xf32> to vector<8x2048xf32>
      %21 = arith.addf %18, %20 : vector<8x2048xf32>
      %cst_15 = arith.constant 0.000000e+00 : f32
      %22 = vector.broadcast %cst_15 : f32 to vector<8x2048xf32>
      %23 = arith.maximumf %21, %22 : vector<8x2048xf32>
      %24 = arith.truncf %23 : vector<8x2048xf32> to vector<8x2048xbf16>
      %c0_16 = arith.constant 0 : index
      %c0_17 = arith.constant 0 : index
      %25 = vector.load %arg11[%c0_16, %c0_17] : memref<8x2048xbf16, #tpu.memory_space<vmem>>, vector<8x2048xbf16>
      tpu.vector_store %arg11[%c0_16, %c0_17], %24 {strides = array<i32>} : memref<8x2048xbf16, #tpu.memory_space<vmem>>, vector<8x2048xbf16>,
      %cst_18 = arith.constant 0.000000e+00 : f32
      %26 = vector.broadcast %cst_18 : f32 to vector<8x512xf32>
      %c0_19 = arith.constant 0 : index
      %c0_20 = arith.constant 0 : index
      %27 = vector.load %arg12[%c0_19, %c0_20] : memref<8x512xf32, #tpu.memory_space<vmem>>, vector<8x512xf32>
      tpu.vector_store %arg12[%c0_19, %c0_20], %26 {strides = array<i32>} : memref<8x512xf32, #tpu.memory_space<vmem>>, vector<8x512xf32>,
    } else {
    }
    %c1024_i32 = arith.constant 1024 : i32
    %3 = arith.muli %arg0, %c1024_i32 : i32
    %4 = tpu.assume_multiple %3, 1024 : i32
    %c0 = arith.constant 0 : index
    %5 = arith.index_cast %4 : i32 to index
    %6 = vector.load %arg11[%c0, %5] : memref<8x2048xbf16, #tpu.memory_space<vmem>>, vector<8x1024xbf16>
    %c0_1 = arith.constant 0 : index
    %c0_2 = arith.constant 0 : index
    %7 = vector.load %arg12[%c0_1, %c0_2] : memref<8x512xf32, #tpu.memory_space<vmem>>, vector<8x512xf32>
    %c0_3 = arith.constant 0 : index
    %c0_4 = arith.constant 0 : index
    %8 = vector.load %arg4[%c0_3, %c0_4] : memref<1024x512xbf16, #tpu.memory_space<vmem>>, vector<1024x512xbf16>
    %cst = arith.constant dense<0.000000e+00> : vector<8x512xf32>
    %9 = tpu.matmul %6, %8, %cst {dimension_numbers = #tpu.dot_dimension_numbers<[1], [0], [0], [1], [0, 0, 1, 1], [], []>} : vector<8x1024xbf16>, vector<1024x512xbf16>, vector<8x512xf32> -> vector<8x512xf32>
    %10 = arith.addf %7, %9 : vector<8x512xf32>
    %c0_5 = arith.constant 0 : index
    %c0_6 = arith.constant 0 : index
    %11 = vector.load %arg12[%c0_5, %c0_6] : memref<8x512xf32, #tpu.memory_space<vmem>>, vector<8x512xf32>
    tpu.vector_store %arg12[%c0_5, %c0_6], %10 {strides = array<i32>} : memref<8x512xf32, #tpu.memory_space<vmem>>, vector<8x512xf32>,
    %c1_i32 = arith.constant 1 : i32
    %12 = arith.cmpi eq, %arg0, %c1_i32 : i32
    %13 = arith.extui %12 : i1 to i32
    %c0_i32_7 = arith.constant 0 : i32
    %14 = arith.cmpi ne, %13, %c0_i32_7 : i32
    scf.if %14 {
      %c0_8 = arith.constant 0 : index
      %c0_9 = arith.constant 0 : index
      %15 = vector.load %arg12[%c0_8, %c0_9] : memref<8x512xf32, #tpu.memory_space<vmem>>, vector<8x512xf32>
      %c0_10 = arith.constant 0 : index
      %c0_11 = arith.constant 0 : index
      %16 = vector.load %arg5[%c0_10, %c0_11] : memref<1x512xf32, #tpu.memory_space<vmem>>, vector<1x512xf32>
      %17 = vector.broadcast %16 : vector<1x512xf32> to vector<8x512xf32>
      %18 = arith.addf %15, %17 : vector<8x512xf32>
      %cst_12 = arith.constant 0.000000e+00 : f32
      %19 = vector.broadcast %cst_12 : f32 to vector<8x512xf32>
      %20 = arith.maximumf %18, %19 : vector<8x512xf32>
      %21 = arith.truncf %20 : vector<8x512xf32> to vector<8x512xbf16>
      %c0_13 = arith.constant 0 : index
      %c0_14 = arith.constant 0 : index
      %22 = vector.load %arg6[%c0_13, %c0_14] : memref<512x512xbf16, #tpu.memory_space<vmem>>, vector<512x512xbf16>
      %cst_15 = arith.constant dense<0.000000e+00> : vector<8x512xf32>
      %23 = tpu.matmul %21, %22, %cst_15 {dimension_numbers = #tpu.dot_dimension_numbers<[1], [0], [0], [1], [0, 0, 1, 1], [], []>} : vector<8x512xbf16>, vector<512x512xbf16>, vector<8x512xf32> -> vector<8x512xf32>
      %c0_16 = arith.constant 0 : index
      %c0_17 = arith.constant 0 : index
      %24 = vector.load %arg7[%c0_16, %c0_17] : memref<1x512xf32, #tpu.memory_space<vmem>>, vector<1x512xf32>
      %25 = vector.broadcast %24 : vector<1x512xf32> to vector<8x512xf32>
      %26 = arith.addf %23, %25 : vector<8x512xf32>
      %cst_18 = arith.constant 0.000000e+00 : f32
      %27 = vector.broadcast %cst_18 : f32 to vector<8x512xf32>
      %28 = arith.maximumf %26, %27 : vector<8x512xf32>
      %29 = arith.truncf %28 : vector<8x512xf32> to vector<8x512xbf16>
      %c0_19 = arith.constant 0 : index
      %c0_20 = arith.constant 0 : index
      %30 = vector.load %arg8[%c0_19, %c0_20] : memref<512x128xbf16, #tpu.memory_space<vmem>>, vector<512x128xbf16>
      %cst_21 = arith.constant dense<0.000000e+00> : vector<8x128xf32>
      %31 = tpu.matmul %29, %30, %cst_21 {dimension_numbers = #tpu.dot_dimension_numbers<[1], [0], [0], [1], [0, 0, 1, 1], [], []>} : vector<8x512xbf16>, vector<512x128xbf16>, vector<8x128xf32> -> vector<8x128xf32>
      %c0_22 = arith.constant 0 : index
      %c0_23 = arith.constant 0 : index
      %32 = vector.load %arg9[%c0_22, %c0_23] : memref<1x128xf32, #tpu.memory_space<vmem>>, vector<1x128xf32>
      %33 = vector.broadcast %32 : vector<1x128xf32> to vector<8x128xf32>
      %34 = arith.addf %31, %33 : vector<8x128xf32>
      %c0_24 = arith.constant 0 : index
      %c0_25 = arith.constant 0 : index
      %35 = vector.load %arg10[%c0_24, %c0_25] : memref<8x128xf32, #tpu.memory_space<vmem>>, vector<8x128xf32>
      tpu.vector_store %arg10[%c0_24, %c0_25], %34 {strides = array<i32>} : memref<8x128xf32, #tpu.memory_space<vmem>>, vector<8x128xf32>,
    } else {
    }
    return
  }
  func.func @transform_0(%arg0: i32) -> (i32, i32) {
    %c0_i32 = arith.constant 0 : i32
    %c0_i32_0 = arith.constant 0 : i32
    %c0_i32_1 = arith.constant 0 : i32
    return %c0_i32, %c0_i32_0 : i32, i32
  }
  func.func @transform_1(%arg0: i32) -> (i32, i32) {
    %c0_i32 = arith.constant 0 : i32
    %c0_i32_0 = arith.constant 0 : i32
    %c0_i32_1 = arith.constant 0 : i32
    return %c0_i32, %c0_i32_0 : i32, i32
  }
  func.func @transform_2(%arg0: i32) -> (i32, i32) {
    %c0_i32 = arith.constant 0 : i32
    %c0_i32_0 = arith.constant 0 : i32
    %c0_i32_1 = arith.constant 0 : i32
    return %c0_i32, %c0_i32_0 : i32, i32
  }
  func.func @transform_3(%arg0: i32) -> (i32, i32) {
    %c0_i32 = arith.constant 0 : i32
    %c0_i32_0 = arith.constant 0 : i32
    return %arg0, %c0_i32 : i32, i32
  }
  func.func @transform_4(%arg0: i32) -> (i32, i32) {
    %c0_i32 = arith.constant 0 : i32
    %c0_i32_0 = arith.constant 0 : i32
    %c0_i32_1 = arith.constant 0 : i32
    return %c0_i32, %c0_i32_0 : i32, i32
  }
  func.func @transform_5(%arg0: i32) -> (i32, i32) {
    %c0_i32 = arith.constant 0 : i32
    %c0_i32_0 = arith.constant 0 : i32
    %c0_i32_1 = arith.constant 0 : i32
    return %c0_i32, %c0_i32_0 : i32, i32
  }
  func.func @transform_6(%arg0: i32) -> (i32, i32) {
    %c0_i32 = arith.constant 0 : i32
    %c0_i32_0 = arith.constant 0 : i32
    %c0_i32_1 = arith.constant 0 : i32
    return %c0_i32, %c0_i32_0 : i32, i32
  }
  func.func @transform_7(%arg0: i32) -> (i32, i32) {
    %c0_i32 = arith.constant 0 : i32
    %c0_i32_0 = arith.constant 0 : i32
    %c0_i32_1 = arith.constant 0 : i32
    return %c0_i32, %c0_i32_0 : i32, i32
  }
  func.func @transform_8(%arg0: i32) -> (i32, i32) {
    %c0_i32 = arith.constant 0 : i32
    %c0_i32_0 = arith.constant 0 : i32
    %c0_i32_1 = arith.constant 0 : i32
    return %c0_i32, %c0_i32_0 : i32, i32
  }
  func.func @transform_9(%arg0: i32) -> (i32, i32) {
    %c0_i32 = arith.constant 0 : i32
    %c0_i32_0 = arith.constant 0 : i32
    %c0_i32_1 = arith.constant 0 : i32
    return %c0_i32, %c0_i32_0 : i32, i32
  }
}

</mosaic_0001>

<llo_original>
// kernel: tpu_custom_call.1
$region0: #{tpu_custom_call.1}
  #allocation0 [shape = 'u32[]', space=smem, size = 0x4, offset = 0x4, fixed_abs, tag = 'smem constant byte address 0x4 - core index']
  #allocation1 [shape = 'u32[144,128]{1,0:T(1,128)}', space=vmem, size = 0x12000, scoped, tag = 'internal scratch']
  #allocation2 [shape = 'bf16[8,2048]{1,0:T(8,128)(2,1)}', space=vmem, size = 0x8000, scoped, tag = 'scratch operand']
  #allocation3 [shape = 'f32[8,512]{1,0:T(8,128)}', space=vmem, size = 0x4000, scoped, tag = 'scratch operand']
  %s0 = inlined_call_operand.hbm [shape: f32[8,32], index: 0, kind: input, shape index: {}]
  %s1 = inlined_call_operand.hbm [shape: bf16[32,2048], index: 1, kind: input, shape index: {}]
  %s2 = inlined_call_operand.hbm [shape: f32[1,2048], index: 2, kind: input, shape index: {}]
  %s3 = inlined_call_operand.hbm [shape: bf16[2048,512], index: 3, kind: input, shape index: {}]
  %s4 = inlined_call_operand.hbm [shape: f32[1,512], index: 4, kind: input, shape index: {}]
  %s5 = inlined_call_operand.hbm [shape: bf16[512,512], index: 5, kind: input, shape index: {}]
  %s6 = inlined_call_operand.hbm [shape: f32[1,512], index: 6, kind: input, shape index: {}]
  %s7 = inlined_call_operand.hbm [shape: bf16[512,128], index: 7, kind: input, shape index: {}]
  %s8 = inlined_call_operand.hbm [shape: f32[1,128], index: 8, kind: input, shape index: {}]
  %s9 = inlined_call_operand.hbm [shape: f32[8,128], index: 9, kind: output, shape index: {}]
  %s10 = sld [smem:[#allocation0]]
  $region113: #{tpu_custom_call.1} parent=0
    _
  %s12 = ssub.s32 1, %s10
  %s13 = scalar_select 0, %s12, %s10
  $region1: #{tpu_custom_call.1} parent=0
    #allocation4 [shape = 'u8[4096]{0}', space=vmem, size = 0x1000, scoped, tag = 'input window, operand 0, single buffered']
    #allocation5 [shape = 's32[2]{0}', space=sflag, size = 0x8, scoped, tag = 'scoped memory for tpu_custom_call.1']
    #allocation6 [shape = 's32[2]{0}', space=sflag, size = 0x8, scoped, tag = 'scoped memory for tpu_custom_call.1']
    #allocation7 [shape = 'u8[131072]{0}', space=vmem, size = 0x20000, scoped, tag = 'input window, operand 1, single buffered']
    #allocation8 [shape = 's32[1]{0}', space=sflag, size = 0x4, scoped, tag = 'scoped memory for tpu_custom_call.1']
    #allocation9 [shape = 'u8[8192]{0}', space=vmem, size = 0x2000, scoped, tag = 'input window, operand 2, single buffered']
    #allocation10 [shape = 'u8[2097152]{0}', space=vmem, size = 0x200000, scoped, tag = 'input window, operand 3']
    #allocation11 [shape = 's32[2]{0}', space=sflag, size = 0x8, scoped, tag = 'scoped memory for tpu_custom_call.1']
    #allocation12 [shape = 'u8[2048]{0}', space=vmem, size = 0x800, scoped, tag = 'input window, operand 4, single buffered']
    #allocation13 [shape = 'u8[524288]{0}', space=vmem, size = 0x80000, scoped, tag = 'input window, operand 5, single buffered']
    #allocation14 [shape = 's32[1]{0}', space=sflag, size = 0x4, scoped, tag = 'scoped memory for tpu_custom_call.1']
    #allocation15 [shape = 'u8[2048]{0}', space=vmem, size = 0x800, scoped, tag = 'input window, operand 6, single buffered']
    #allocation16 [shape = 'u8[131072]{0}', space=vmem, size = 0x20000, scoped, tag = 'input window, operand 7, single buffered']
    #allocation17 [shape = 's32[1]{0}', space=sflag, size = 0x4, scoped, tag = 'scoped memory for tpu_custom_call.1']
    #allocation18 [shape = 'u8[512]{0}', space=vmem, size = 0x400, scoped, tag = 'input window, operand 8, single buffered']
    #allocation19 [shape = 'u8[4096]{0}', space=vmem, size = 0x1000, scoped, tag = 'output window, operand 0, single buffered']
    %14 = vsyncpa [#allocation5], 0
    %15 = vsyncpa [#allocation8], 0
    %16 = vsyncpa [#allocation11], 0
    %s17 = scalar_lea.sflag [#allocation11], 1
    %18 = vsyncpa %s17, 0
    %19 = vsyncpa [#allocation14], 0
    %20 = vsyncpa [#allocation17], 0
    %21 = vsyncpa [#allocation6], 0
    loop: start=0, step=1, limit=4
    $region2: #{tpu_custom_call.1} parent=1 // loop_pre_header
      _
    $region3: #{tpu_custom_call.1} parent=1 // loop_header
      %s23 = sphi 0, %s27
      %p24 = scmp.ge.s32.totalorder %s23, 4
      %s31 = sphi 0, %s31
      %s33 = sphi 0, %s31
      %s34 = sphi 0, %s33
      %s48 = sphi 0, %s34
      %s52 = sphi 0, %s52
      %s54 = sphi 0, %s52
      %s55 = sphi 0, %s54
      %s69 = sphi 0, %s55
      %s73 = sphi 0, %s73
      %s75 = sphi 0, %s73
      %s76 = sphi 0, %s75
      %s90 = sphi 0, %s76
      %s96 = sphi 0, %s98
      %s99 = sphi 0, %s96
      %s100 = sphi 0, %s99
      %s116 = sphi 0, %s100
      %s120 = sphi 0, %s120
      %s122 = sphi 0, %s120
      %s123 = sphi 0, %s122
      %s137 = sphi 0, %s123
      %s141 = sphi 0, %s141
      %s143 = sphi 0, %s141
      %s144 = sphi 0, %s143
      %s158 = sphi 0, %s144
      %s162 = sphi 0, %s162
      %s164 = sphi 0, %s162
      %s165 = sphi 0, %s164
      %s179 = sphi 0, %s165
      %s183 = sphi 0, %s183
      %s185 = sphi 0, %s183
      %s186 = sphi 0, %s185
      %s200 = sphi 0, %s186
      %s204 = sphi 0, %s204
      %s206 = sphi 0, %s204
      %s207 = sphi 0, %s206
      %s221 = sphi 0, %s207
      %s225 = sphi 0, %s225
      %s227 = sphi 0, %s225
      %s228 = sphi 0, %s227
      %s242 = sphi 0, %s228
    $region4: #{tpu_custom_call.1} parent=1 // loop_header_branch
      %26 = sbr.rel (%p24) target = $region8
    $region5: #{tpu_custom_call.1} parent=1 // loop_body
      %s28 = ssub.s32 %s23, 1
      %s29 = ssub.s32 %s23, 2
      %s30 = sadd.s32 %s23, 1
      %s32 = sadd.s32 %s31, 1
      %p35 = scmp.eq.s32.totalorder %s23, 1
      %p36 = scmp.ne.s32.totalorder %s31, %s33
      %p37 = scmp.eq.s32.totalorder %s23, 0
      %p38 = por %p36, %p37
      %p39 = scmp.ne.s32.totalorder %s31, %s33
      %p40 = scmp.eq.s32.totalorder %s28, 1
      %p41 = por %p39, %p40
      %p42 = scmp.ne.s32.totalorder %s33, %s34
      %p43 = scmp.eq.s32.totalorder %s28, 0
      %p44 = por %p42, %p43
      %p45 = scmp.ne.s32.totalorder %s33, %s34
      %p46 = scmp.eq.s32.totalorder %s29, 1
      %p47 = por %p45, %p46
      %p49 = scmp.ne.s32.totalorder %s34, %s48
      %p50 = scmp.eq.s32.totalorder %s29, 0
      %p51 = por %p49, %p50
      %s53 = sadd.s32 %s52, 1
      %p56 = scmp.eq.s32.totalorder %s23, 1
      %p57 = scmp.ne.s32.totalorder %s52, %s54
      %p58 = scmp.eq.s32.totalorder %s23, 0
      %p59 = por %p57, %p58
      %p60 = scmp.ne.s32.totalorder %s52, %s54
      %p61 = scmp.eq.s32.totalorder %s28, 1
      %p62 = por %p60, %p61
      %p63 = scmp.ne.s32.totalorder %s54, %s55
      %p64 = scmp.eq.s32.totalorder %s28, 0
      %p65 = por %p63, %p64
      %p66 = scmp.ne.s32.totalorder %s54, %s55
      %p67 = scmp.eq.s32.totalorder %s29, 1
      %p68 = por %p66, %p67
      %p70 = scmp.ne.s32.totalorder %s55, %s69
      %p71 = scmp.eq.s32.totalorder %s29, 0
      %p72 = por %p70, %p71
      %s74 = sadd.s32 %s73, 1
      %p77 = scmp.eq.s32.totalorder %s23, 1
      %p78 = scmp.ne.s32.totalorder %s73, %s75
      %p79 = scmp.eq.s32.totalorder %s23, 0
      %p80 = por %p78, %p79
      %p81 = scmp.ne.s32.totalorder %s73, %s75
      %p82 = scmp.eq.s32.totalorder %s28, 1
      %p83 = por %p81, %p82
      %p84 = scmp.ne.s32.totalorder %s75, %s76
      %p85 = scmp.eq.s32.totalorder %s28, 0
      %p86 = por %p84, %p85
      %p87 = scmp.ne.s32.totalorder %s75, %s76
      %p88 = scmp.eq.s32.totalorder %s29, 1
      %p89 = por %p87, %p88
      %p91 = scmp.ne.s32.totalorder %s76, %s90
      %p92 = scmp.eq.s32.totalorder %s29, 0
      %p93 = por %p91, %p92
      %s94 = ssub.s32 %s23, %s30
      %p95 = scmp.eq.s32.totalorder %s94, 0
      %s97 = sadd.s32 %s96, 1
      %s98 = scalar_select %p95, %s96, %s97
      %p101 = pneg %p95
      %p102 = scmp.eq.s32.totalorder %s23, 1
      %p103 = por %p101, %p102
      %p104 = scmp.ne.s32.totalorder %s96, %s99
      %p105 = scmp.eq.s32.totalorder %s23, 0
      %p106 = por %p104, %p105
      %p107 = scmp.ne.s32.totalorder %s96, %s99
      %p108 = scmp.eq.s32.totalorder %s28, 1
      %p109 = por %p107, %p108
      %p110 = scmp.ne.s32.totalorder %s99, %s100
      %p111 = scmp.eq.s32.totalorder %s28, 0
      %p112 = por %p110, %p111
      %p113 = scmp.ne.s32.totalorder %s99, %s100
      %p114 = scmp.eq.s32.totalorder %s29, 1
      %p115 = por %p113, %p114
      %p117 = scmp.ne.s32.totalorder %s100, %s116
      %p118 = scmp.eq.s32.totalorder %s29, 0
      %p119 = por %p117, %p118
      %s121 = sadd.s32 %s120, 1
      %p124 = scmp.eq.s32.totalorder %s23, 1
      %p125 = scmp.ne.s32.totalorder %s120, %s122
      %p126 = scmp.eq.s32.totalorder %s23, 0
      %p127 = por %p125, %p126
      %p128 = scmp.ne.s32.totalorder %s120, %s122
      %p129 = scmp.eq.s32.totalorder %s28, 1
      %p130 = por %p128, %p129
      %p131 = scmp.ne.s32.totalorder %s122, %s123
      %p132 = scmp.eq.s32.totalorder %s28, 0
      %p133 = por %p131, %p132
      %p134 = scmp.ne.s32.totalorder %s122, %s123
      %p135 = scmp.eq.s32.totalorder %s29, 1
      %p136 = por %p134, %p135
      %p138 = scmp.ne.s32.totalorder %s123, %s137
      %p139 = scmp.eq.s32.totalorder %s29, 0
      %p140 = por %p138, %p139
      %s142 = sadd.s32 %s141, 1
      %p145 = scmp.eq.s32.totalorder %s23, 1
      %p146 = scmp.ne.s32.totalorder %s141, %s143
      %p147 = scmp.eq.s32.totalorder %s23, 0
      %p148 = por %p146, %p147
      %p149 = scmp.ne.s32.totalorder %s141, %s143
      %p150 = scmp.eq.s32.totalorder %s28, 1
      %p151 = por %p149, %p150
      %p152 = scmp.ne.s32.totalorder %s143, %s144
      %p153 = scmp.eq.s32.totalorder %s28, 0
      %p154 = por %p152, %p153
      %p155 = scmp.ne.s32.totalorder %s143, %s144
      %p156 = scmp.eq.s32.totalorder %s29, 1
      %p157 = por %p155, %p156
      %p159 = scmp.ne.s32.totalorder %s144, %s158
      %p160 = scmp.eq.s32.totalorder %s29, 0
      %p161 = por %p159, %p160
      %s163 = sadd.s32 %s162, 1
      %p166 = scmp.eq.s32.totalorder %s23, 1
      %p167 = scmp.ne.s32.totalorder %s162, %s164
      %p168 = scmp.eq.s32.totalorder %s23, 0
      %p169 = por %p167, %p168
      %p170 = scmp.ne.s32.totalorder %s162, %s164
      %p171 = scmp.eq.s32.totalorder %s28, 1
      %p172 = por %p170, %p171
      %p173 = scmp.ne.s32.totalorder %s164, %s165
      %p174 = scmp.eq.s32.totalorder %s28, 0
      %p175 = por %p173, %p174
      %p176 = scmp.ne.s32.totalorder %s164, %s165
      %p177 = scmp.eq.s32.totalorder %s29, 1
      %p178 = por %p176, %p177
      %p180 = scmp.ne.s32.totalorder %s165, %s179
      %p181 = scmp.eq.s32.totalorder %s29, 0
      %p182 = por %p180, %p181
      %s184 = sadd.s32 %s183, 1
      %p187 = scmp.eq.s32.totalorder %s23, 1
      %p188 = scmp.ne.s32.totalorder %s183, %s185
      %p189 = scmp.eq.s32.totalorder %s23, 0
      %p190 = por %p188, %p189
      %p191 = scmp.ne.s32.totalorder %s183, %s185
      %p192 = scmp.eq.s32.totalorder %s28, 1
      %p193 = por %p191, %p192
      %p194 = scmp.ne.s32.totalorder %s185, %s186
      %p195 = scmp.eq.s32.totalorder %s28, 0
      %p196 = por %p194, %p195
      %p197 = scmp.ne.s32.totalorder %s185, %s186
      %p198 = scmp.eq.s32.totalorder %s29, 1
      %p199 = por %p197, %p198
      %p201 = scmp.ne.s32.totalorder %s186, %s200
      %p202 = scmp.eq.s32.totalorder %s29, 0
      %p203 = por %p201, %p202
      %s205 = sadd.s32 %s204, 1
      %p208 = scmp.eq.s32.totalorder %s23, 1
      %p209 = scmp.ne.s32.totalorder %s204, %s206
      %p210 = scmp.eq.s32.totalorder %s23, 0
      %p211 = por %p209, %p210
      %p212 = scmp.ne.s32.totalorder %s204, %s206
      %p213 = scmp.eq.s32.totalorder %s28, 1
      %p214 = por %p212, %p213
      %p215 = scmp.ne.s32.totalorder %s206, %s207
      %p216 = scmp.eq.s32.totalorder %s28, 0
      %p217 = por %p215, %p216
      %p218 = scmp.ne.s32.totalorder %s206, %s207
      %p219 = scmp.eq.s32.totalorder %s29, 1
      %p220 = por %p218, %p219
      %p222 = scmp.ne.s32.totalorder %s207, %s221
      %p223 = scmp.eq.s32.totalorder %s29, 0
      %p224 = por %p222, %p223
      %s226 = sadd.s32 %s225, 1
      %p229 = scmp.eq.s32.totalorder %s23, 1
      %p230 = scmp.ne.s32.totalorder %s225, %s227
      %p231 = scmp.eq.s32.totalorder %s23, 0
      %p232 = por %p230, %p231
      %p233 = scmp.ne.s32.totalorder %s225, %s227
      %p234 = scmp.eq.s32.totalorder %s28, 1
      %p235 = por %p233, %p234
      %p236 = scmp.ne.s32.totalorder %s227, %s228
      %p237 = scmp.eq.s32.totalorder %s28, 0
      %p238 = por %p236, %p237
      %p239 = scmp.ne.s32.totalorder %s227, %s228
      %p240 = scmp.eq.s32.totalorder %s29, 1
      %p241 = por %p239, %p240
      %p243 = scmp.ne.s32.totalorder %s228, %s242
      %p244 = scmp.eq.s32.totalorder %s29, 0
      %p245 = por %p243, %p244
      %p246 = scmp.le.s32.totalorder 1, %s23
      %p247 = scmp.lt.s32.totalorder %s23, 3
      %p248 = pnand %p246, %p247
      %p249 = pneg %p248
      // Predicated region
      $region9: #{tpu_custom_call.1} parent=5 // pred_check
        _
      $region10: #{tpu_custom_call.1} parent=5 // pred_check_branch
        %251 = sbr.rel (%p248) target = $region12
      $region11: #{tpu_custom_call.1} parent=5 // pred_region
        %s252 = ssub.s32 %s23, 1
        // Predicated region
        $region13: #{tpu_custom_call.1} parent=11 // pred_check
          %p253 = pneg %p44
        $region14: #{tpu_custom_call.1} parent=11 // pred_check_branch
          %255 = sbr.rel (%p253) target = $region16
        $region15: #{tpu_custom_call.1} parent=11 // pred_region
          %s257 = ssub.s32 128, 128
          %258 = vsyncadd [#allocation5], %s257
          %s260 = sshll.u32 [#allocation4], 4
          %s261 = int_to_ptr.vmem [resolvable:$true] %s260
          %263 = dma.hbm_to_vmem [thread:$0]  %s0, 128, %s261, [#allocation5]
        $region16: #{tpu_custom_call.1} parent=11 // pred_fallthru
          _
        // Predicated region
        $region17: #{tpu_custom_call.1} parent=11 // pred_check
          %p264 = pneg %p65
        $region18: #{tpu_custom_call.1} parent=11 // pred_check_branch
          %266 = sbr.rel (%p264) target = $region20
        $region19: #{tpu_custom_call.1} parent=11 // pred_region
          %s268 = ssub.s32 4096, 4096
          %269 = vsyncadd [#allocation8], %s268
          %s270 = sshll.u32 [#allocation7], 4
          %s271 = int_to_ptr.vmem [resolvable:$true] %s270
          %276 = dma.hbm_to_vmem [thread:$0]  %s1, 4096, %s271, [#allocation8], 1024, 1024, 64
        $region20: #{tpu_custom_call.1} parent=11 // pred_fallthru
          _
        // Predicated region
        $region21: #{tpu_custom_call.1} parent=11 // pred_check
          %p277 = pneg %p86
        $region22: #{tpu_custom_call.1} parent=11 // pred_check_branch
          %279 = sbr.rel (%p277) target = $region24
        $region23: #{tpu_custom_call.1} parent=11 // pred_region
          %s281 = ssub.s32 256, 256
          %282 = vsyncadd [#allocation8], %s281
          %s284 = sshll.u32 [#allocation9], 4
          %s285 = int_to_ptr.vmem [resolvable:$true] %s284
          %287 = dma.hbm_to_vmem [thread:$0]  %s2, 256, %s285, [#allocation8]
        $region24: #{tpu_custom_call.1} parent=11 // pred_fallthru
          _
        // Predicated region
        $region25: #{tpu_custom_call.1} parent=11 // pred_check
          %p288 = pneg %p133
        $region26: #{tpu_custom_call.1} parent=11 // pred_check_branch
          %290 = sbr.rel (%p288) target = $region28
        $region27: #{tpu_custom_call.1} parent=11 // pred_region
          %s292 = ssub.s32 64, 64
          %293 = vsyncadd [#allocation11], %s292
          %s295 = sshll.u32 [#allocation12], 4
          %s296 = int_to_ptr.vmem [resolvable:$true] %s295
          %298 = dma.hbm_to_vmem [thread:$0]  %s4, 64, %s296, [#allocation11]
        $region28: #{tpu_custom_call.1} parent=11 // pred_fallthru
          _
        // Predicated region
        $region29: #{tpu_custom_call.1} parent=11 // pred_check
          %p299 = pneg %p154
        $region30: #{tpu_custom_call.1} parent=11 // pred_check_branch
          %301 = sbr.rel (%p299) target = $region32
        $region31: #{tpu_custom_call.1} parent=11 // pred_region
          %s303 = ssub.s32 16384, 16384
          %304 = vsyncadd [#allocation14], %s303
          %s305 = sshll.u32 [#allocation13], 4
          %s306 = int_to_ptr.vmem [resolvable:$true] %s305
          %311 = dma.hbm_to_vmem [thread:$0]  %s5, 16384, %s306, [#allocation14], 256, 256, 16
        $region32: #{tpu_custom_call.1} parent=11 // pred_fallthru
          _
        // Predicated region
        $region33: #{tpu_custom_call.1} parent=11 // pred_check
          %p312 = pneg %p175
        $region34: #{tpu_custom_call.1} parent=11 // pred_check_branch
          %314 = sbr.rel (%p312) target = $region36
        $region35: #{tpu_custom_call.1} parent=11 // pred_region
          %s316 = ssub.s32 64, 64
          %317 = vsyncadd [#allocation14], %s316
          %s319 = sshll.u32 [#allocation15], 4
          %s320 = int_to_ptr.vmem [resolvable:$true] %s319
          %322 = dma.hbm_to_vmem [thread:$0]  %s6, 64, %s320, [#allocation14]
        $region36: #{tpu_custom_call.1} parent=11 // pred_fallthru
          _
        // Predicated region
        $region37: #{tpu_custom_call.1} parent=11 // pred_check
          %p323 = pneg %p196
        $region38: #{tpu_custom_call.1} parent=11 // pred_check_branch
          %325 = sbr.rel (%p323) target = $region40
        $region39: #{tpu_custom_call.1} parent=11 // pred_region
          %s327 = ssub.s32 4096, 4096
          %328 = vsyncadd [#allocation17], %s327
          %s329 = sshll.u32 [#allocation16], 4
          %s330 = int_to_ptr.vmem [resolvable:$true] %s329
          %335 = dma.hbm_to_vmem [thread:$0]  %s7, 4096, %s330, [#allocation17], 64, 64, 4
        $region40: #{tpu_custom_call.1} parent=11 // pred_fallthru
          _
        // Predicated region
        $region41: #{tpu_custom_call.1} parent=11 // pred_check
          %p336 = pneg %p217
        $region42: #{tpu_custom_call.1} parent=11 // pred_check_branch
          %338 = sbr.rel (%p336) target = $region44
        $region43: #{tpu_custom_call.1} parent=11 // pred_region
          %s340 = ssub.s32 16, 16
          %341 = vsyncadd [#allocation17], %s340
          %s343 = sshll.u32 [#allocation18], 4
          %s344 = int_to_ptr.vmem [resolvable:$true] %s343
          %346 = dma.hbm_to_vmem [thread:$0]  %s8, 16, %s344, [#allocation17]
        $region44: #{tpu_custom_call.1} parent=11 // pred_fallthru
          _
      $region12: #{tpu_custom_call.1} parent=5 // pred_fallthru
        _
      %p347 = scmp.lt.s32.totalorder %s23, 2
      // Predicated region
      $region45: #{tpu_custom_call.1} parent=5 // pred_check
        %p348 = pneg %p347
      $region46: #{tpu_custom_call.1} parent=5 // pred_check_branch
        %350 = sbr.rel (%p348) target = $region48
      $region47: #{tpu_custom_call.1} parent=5 // pred_region
        // Predicated region
        $region49: #{tpu_custom_call.1} parent=47 // pred_check
          %p351 = pneg %p106
        $region50: #{tpu_custom_call.1} parent=47 // pred_check_branch
          %353 = sbr.rel (%p351) target = $region52
        $region51: #{tpu_custom_call.1} parent=47 // pred_region
          %s354 = sand.u32 %s23, 1
          %s355 = scalar_lea.sflag [#allocation11], %s354
          %s356 = sand.u32 %s96, 1
          %s357 = smul.addr %s356, 2048
          %s358 = scalar_lea.vmem [#allocation10], %s357
          %s359 = smul.u32 128, %s23
          %s361 = ssub.s32 32768, 32768
          %362 = vsyncadd %s355, %s361
          %s363 = smul.addr %s359, 4
          %s364 = smul.addr %s363, 64
          %s365 = scalar_lea.hbm %s3, %s364
          %s366 = sshll.u32 %s358, 4
          %s367 = int_to_ptr.vmem [resolvable:$true] %s366
          %372 = dma.hbm_to_vmem [thread:$0]  %s365, 32768, %s367, %s355, 256, 256, 16
        $region52: #{tpu_custom_call.1} parent=47 // pred_fallthru
          _
      $region48: #{tpu_custom_call.1} parent=5 // pred_fallthru
        _
      %p373 = scmp.le.s32.totalorder 1, %s23
      %p374 = scmp.lt.s32.totalorder %s23, 3
      %p375 = pnand %p373, %p374
      %p376 = pneg %p375
      // Predicated region
      $region53: #{tpu_custom_call.1} parent=5 // pred_check
        _
      $region54: #{tpu_custom_call.1} parent=5 // pred_check_branch
        %378 = sbr.rel (%p375) target = $region56
      $region55: #{tpu_custom_call.1} parent=5 // pred_region
        %s379 = ssub.s32 %s23, 1
        // Predicated region
        $region57: #{tpu_custom_call.1} parent=55 // pred_check
          %p380 = pneg %p44
        $region58: #{tpu_custom_call.1} parent=55 // pred_check_branch
          %382 = sbr.rel (%p380) target = $region60
        $region59: #{tpu_custom_call.1} parent=55 // pred_region
          %383 = dma.done [#allocation5], 128
        $region60: #{tpu_custom_call.1} parent=55 // pred_fallthru
          _
        // Predicated region
        $region61: #{tpu_custom_call.1} parent=55 // pred_check
          %p384 = pneg %p65
        $region62: #{tpu_custom_call.1} parent=55 // pred_check_branch
          %386 = sbr.rel (%p384) target = $region64
        $region63: #{tpu_custom_call.1} parent=55 // pred_region
          %387 = dma.done [#allocation8], 4096
        $region64: #{tpu_custom_call.1} parent=55 // pred_fallthru
          _
        // Predicated region
        $region65: #{tpu_custom_call.1} parent=55 // pred_check
          %p388 = pneg %p86
        $region66: #{tpu_custom_call.1} parent=55 // pred_check_branch
          %390 = sbr.rel (%p388) target = $region68
        $region67: #{tpu_custom_call.1} parent=55 // pred_region
          %391 = dma.done [#allocation8], 256
        $region68: #{tpu_custom_call.1} parent=55 // pred_fallthru
          _
        %s392 = sand.u32 %s28, 1
        %s393 = scalar_lea.sflag [#allocation11], %s392
        %s394 = sand.u32 %s99, 1
        %s395 = smul.addr %s394, 2048
        %s396 = scalar_lea.vmem [#allocation10], %s395
        // Predicated region
        $region69: #{tpu_custom_call.1} parent=55 // pred_check
          %p397 = pneg %p112
        $region70: #{tpu_custom_call.1} parent=55 // pred_check_branch
          %399 = sbr.rel (%p397) target = $region72
        $region71: #{tpu_custom_call.1} parent=55 // pred_region
          %400 = dma.done %s393, 32768
        $region72: #{tpu_custom_call.1} parent=55 // pred_fallthru
          _
        // Predicated region
        $region73: #{tpu_custom_call.1} parent=55 // pred_check
          %p401 = pneg %p133
        $region74: #{tpu_custom_call.1} parent=55 // pred_check_branch
          %403 = sbr.rel (%p401) target = $region76
        $region75: #{tpu_custom_call.1} parent=55 // pred_region
          %404 = dma.done [#allocation11], 64
        $region76: #{tpu_custom_call.1} parent=55 // pred_fallthru
          _
        // Predicated region
        $region77: #{tpu_custom_call.1} parent=55 // pred_check
          %p405 = pneg %p154
        $region78: #{tpu_custom_call.1} parent=55 // pred_check_branch
          %407 = sbr.rel (%p405) target = $region80
        $region79: #{tpu_custom_call.1} parent=55 // pred_region
          %408 = dma.done [#allocation14], 16384
        $region80: #{tpu_custom_call.1} parent=55 // pred_fallthru
          _
        // Predicated region
        $region81: #{tpu_custom_call.1} parent=55 // pred_check
          %p409 = pneg %p175
        $region82: #{tpu_custom_call.1} parent=55 // pred_check_branch
          %411 = sbr.rel (%p409) target = $region84
        $region83: #{tpu_custom_call.1} parent=55 // pred_region
          %412 = dma.done [#allocation14], 64
        $region84: #{tpu_custom_call.1} parent=55 // pred_fallthru
          _
        // Predicated region
        $region85: #{tpu_custom_call.1} parent=55 // pred_check
          %p413 = pneg %p196
        $region86: #{tpu_custom_call.1} parent=55 // pred_check_branch
          %415 = sbr.rel (%p413) target = $region88
        $region87: #{tpu_custom_call.1} parent=55 // pred_region
          %416 = dma.done [#allocation17], 4096
        $region88: #{tpu_custom_call.1} parent=55 // pred_fallthru
          _
        // Predicated region
        $region89: #{tpu_custom_call.1} parent=55 // pred_check
          %p417 = pneg %p217
        $region90: #{tpu_custom_call.1} parent=55 // pred_check_branch
          %419 = sbr.rel (%p417) target = $region92
        $region91: #{tpu_custom_call.1} parent=55 // pred_region
          %420 = dma.done [#allocation17], 16
        $region92: #{tpu_custom_call.1} parent=55 // pred_fallthru
          _
        %p421 = pneg %p44
        %p422 = pneg %p41
        %p423 = pneg %p65
        %p424 = pneg %p62
        %p425 = pneg %p86
        %p426 = pneg %p83
        %s427 = sand.u32 %s28, 1
        %s428 = scalar_lea.sflag [#allocation11], %s427
        %s429 = sand.u32 %s99, 1
        %s430 = smul.addr %s429, 2048
        %s431 = scalar_lea.vmem [#allocation10], %s430
        %p432 = pneg %p112
        %p433 = pneg %p109
        %p434 = pneg %p133
        %p435 = pneg %p130
        %p436 = pneg %p154
        %p437 = pneg %p151
        %p438 = pneg %p175
        %p439 = pneg %p172
        %p440 = pneg %p196
        %p441 = pneg %p193
        %p442 = pneg %p217
        %p443 = pneg %p214
        %p444 = pneg %p238
        %p445 = pneg %p235
        %s446 = smul.u32 128, %s28
        %p448 = scmp.eq.s32.totalorder %s28, 0
        // Predicated region
        $region93: #{tpu_custom_call.1} parent=55 // pred_check
          %p449 = pneg %p448
        $region94: #{tpu_custom_call.1} parent=55 // pred_check_branch
          %451 = sbr.rel (%p449) target = $region96
        $region95: #{tpu_custom_call.1} parent=55 // pred_region
          %v452 = vld [vmem:[#allocation4] sm:$0xff]
          %v453 = vpack.c.bf16 %v452, %v452
          %v454 = vld [vmem:[#allocation7] sm:$0xff]
          %v455 = vld [vmem:[#allocation7 + $0x8] sm:$0xff]
          %v456 = vld [vmem:[#allocation7 + $0x10] sm:$0xff]
          %v457 = vld [vmem:[#allocation7 + $0x18] sm:$0xff]
          %v458 = vld [vmem:[#allocation7 + $0x20] sm:$0xff]
          %v459 = vld [vmem:[#allocation7 + $0x28] sm:$0xff]
          %v460 = vld [vmem:[#allocation7 + $0x30] sm:$0xff]
          %v461 = vld [vmem:[#allocation7 + $0x38] sm:$0xff]
          %v462 = vld [vmem:[#allocation7 + $0x40] sm:$0xff]
          %v463 = vld [vmem:[#allocation7 + $0x48] sm:$0xff]
          %v464 = vld [vmem:[#allocation7 + $0x50] sm:$0xff]
          %v465 = vld [vmem:[#allocation7 + $0x58] sm:$0xff]
          %v466 = vld [vmem:[#allocation7 + $0x60] sm:$0xff]
          %v467 = vld [vmem:[#allocation7 + $0x68] sm:$0xff]
          %v468 = vld [vmem:[#allocation7 + $0x70] sm:$0xff]
          %v469 = vld [vmem:[#allocation7 + $0x78] sm:$0xff]
          %v470 = vld [vmem:[#allocation7 + $0x80] sm:$0xff]
          %v471 = vld [vmem:[#allocation7 + $0x88] sm:$0xff]
          %v472 = vld [vmem:[#allocation7 + $0x90] sm:$0xff]
          %v473 = vld [vmem:[#allocation7 + $0x98] sm:$0xff]
          %v474 = vld [vmem:[#allocation7 + $0xa0] sm:$0xff]
          %v475 = vld [vmem:[#allocation7 + $0xa8] sm:$0xff]
          %v476 = vld [vmem:[#allocation7 + $0xb0] sm:$0xff]
          %v477 = vld [vmem:[#allocation7 + $0xb8] sm:$0xff]
          %v478 = vld [vmem:[#allocation7 + $0xc0] sm:$0xff]
          %v479 = vld [vmem:[#allocation7 + $0xc8] sm:$0xff]
          %v480 = vld [vmem:[#allocation7 + $0xd0] sm:$0xff]
          %v481 = vld [vmem:[#allocation7 + $0xd8] sm:$0xff]
          %v482 = vld [vmem:[#allocation7 + $0xe0] sm:$0xff]
          %v483 = vld [vmem:[#allocation7 + $0xe8] sm:$0xff]
          %v484 = vld [vmem:[#allocation7 + $0xf0] sm:$0xff]
          %v485 = vld [vmem:[#allocation7 + $0xf8] sm:$0xff]
          %v486 = vld [vmem:[#allocation9] sm:$0xff]
          %v487 = vld [vmem:[#allocation9 + $0x8] sm:$0xff]
          %v490 = vlaneseq
          %v491 = vshrl.u32 %v490, 7
          %v492 = vsub.s32 0, %v491
          %v493 = vrot.slane %v486, %v492
          %v494 = vlaneseq
          %v495 = vshrl.u32 %v494, 7
          %v496 = vsub.s32 1, %v495
          %v497 = vrot.slane %v486, %v496
          %v498 = vlaneseq
          %v499 = vshrl.u32 %v498, 7
          %v500 = vsub.s32 2, %v499
          %v501 = vrot.slane %v486, %v500
          %v502 = vlaneseq
          %v503 = vshrl.u32 %v502, 7
          %v504 = vsub.s32 3, %v503
          %v505 = vrot.slane %v486, %v504
          %v506 = vlaneseq
          %v507 = vshrl.u32 %v506, 7
          %v508 = vsub.s32 4, %v507
          %v509 = vrot.slane %v486, %v508
          %v510 = vlaneseq
          %v511 = vshrl.u32 %v510, 7
          %v512 = vsub.s32 5, %v511
          %v513 = vrot.slane %v486, %v512
          %v514 = vlaneseq
          %v515 = vshrl.u32 %v514, 7
          %v516 = vsub.s32 6, %v515
          %v517 = vrot.slane %v486, %v516
          %v518 = vlaneseq
          %v519 = vshrl.u32 %v518, 7
          %v520 = vsub.s32 7, %v519
          %v521 = vrot.slane %v486, %v520
          %v522 = vlaneseq
          %v523 = vshrl.u32 %v522, 7
          %v524 = vsub.s32 0, %v523
          %v525 = vrot.slane %v487, %v524
          %v526 = vlaneseq
          %v527 = vshrl.u32 %v526, 7
          %v528 = vsub.s32 1, %v527
          %v529 = vrot.slane %v487, %v528
          %v530 = vlaneseq
          %v531 = vshrl.u32 %v530, 7
          %v532 = vsub.s32 2, %v531
          %v533 = vrot.slane %v487, %v532
          %v534 = vlaneseq
          %v535 = vshrl.u32 %v534, 7
          %v536 = vsub.s32 3, %v535
          %v537 = vrot.slane %v487, %v536
          %v538 = vlaneseq
          %v539 = vshrl.u32 %v538, 7
          %v540 = vsub.s32 4, %v539
          %v541 = vrot.slane %v487, %v540
          %v542 = vlaneseq
          %v543 = vshrl.u32 %v542, 7
          %v544 = vsub.s32 5, %v543
          %v545 = vrot.slane %v487, %v544
          %v546 = vlaneseq
          %v547 = vshrl.u32 %v546, 7
          %v548 = vsub.s32 6, %v547
          %v549 = vrot.slane %v487, %v548
          %v550 = vlaneseq
          %v551 = vshrl.u32 %v550, 7
          %v552 = vsub.s32 7, %v551
          %v553 = vrot.slane %v487, %v552
          %v602 = vunpack.c.l.b16 %v454
          %v603 = vunpack.c.h.b16 %v454
          %v604 = vunpack.c.l.b16 %v455
          %v605 = vunpack.c.h.b16 %v455
          %v606 = vunpack.c.l.b16 %v456
          %v607 = vunpack.c.h.b16 %v456
          %v608 = vunpack.c.l.b16 %v457
          %v609 = vunpack.c.h.b16 %v457
          %v610 = vunpack.c.l.b16 %v458
          %v611 = vunpack.c.h.b16 %v458
          %v612 = vunpack.c.l.b16 %v459
          %v613 = vunpack.c.h.b16 %v459
          %v614 = vunpack.c.l.b16 %v460
          %v615 = vunpack.c.h.b16 %v460
          %v616 = vunpack.c.l.b16 %v461
          %v617 = vunpack.c.h.b16 %v461
          %v618 = vunpack.c.l.b16 %v462
          %v619 = vunpack.c.h.b16 %v462
          %v620 = vunpack.c.l.b16 %v463
          %v621 = vunpack.c.h.b16 %v463
          %v622 = vunpack.c.l.b16 %v464
          %v623 = vunpack.c.h.b16 %v464
          %v624 = vunpack.c.l.b16 %v465
          %v625 = vunpack.c.h.b16 %v465
          %v626 = vunpack.c.l.b16 %v466
          %v627 = vunpack.c.h.b16 %v466
          %v628 = vunpack.c.l.b16 %v467
          %v629 = vunpack.c.h.b16 %v467
          %v630 = vunpack.c.l.b16 %v468
          %v631 = vunpack.c.h.b16 %v468
          %v632 = vunpack.c.l.b16 %v469
          %v633 = vunpack.c.h.b16 %v469
          %v634 = vunpack.c.l.b16 %v470
          %v635 = vunpack.c.h.b16 %v470
          %v636 = vunpack.c.l.b16 %v471
          %v637 = vunpack.c.h.b16 %v471
          %v638 = vunpack.c.l.b16 %v472
          %v639 = vunpack.c.h.b16 %v472
          %v640 = vunpack.c.l.b16 %v473
          %v641 = vunpack.c.h.b16 %v473
          %v642 = vunpack.c.l.b16 %v474
          %v643 = vunpack.c.h.b16 %v474
          %v644 = vunpack.c.l.b16 %v475
          %v645 = vunpack.c.h.b16 %v475
          %v646 = vunpack.c.l.b16 %v476
          %v647 = vunpack.c.h.b16 %v476
          %v648 = vunpack.c.l.b16 %v477
          %v649 = vunpack.c.h.b16 %v477
          %v650 = vunpack.c.l.b16 %v478
          %v651 = vunpack.c.h.b16 %v478
          %v652 = vunpack.c.l.b16 %v479
          %v653 = vunpack.c.h.b16 %v479
          %v654 = vunpack.c.l.b16 %v480
          %v655 = vunpack.c.h.b16 %v480
          %v656 = vunpack.c.l.b16 %v481
          %v657 = vunpack.c.h.b16 %v481
          %v658 = vunpack.c.l.b16 %v482
          %v659 = vunpack.c.h.b16 %v482
          %v660 = vunpack.c.l.b16 %v483
          %v661 = vunpack.c.h.b16 %v483
          %v662 = vunpack.c.l.b16 %v484
          %v663 = vunpack.c.h.b16 %v484
          %v664 = vunpack.c.l.b16 %v485
          %v665 = vunpack.c.h.b16 %v485
          %v666 = vpack.c.b16 %v618, %v602
          %v667 = vpack.c.b16 %v619, %v603
          %v668 = vpack.c.b16 %v620, %v604
          %v669 = vpack.c.b16 %v621, %v605
          %v670 = vpack.c.b16 %v622, %v606
          %v671 = vpack.c.b16 %v623, %v607
          %v672 = vpack.c.b16 %v624, %v608
          %v673 = vpack.c.b16 %v625, %v609
          %v674 = vpack.c.b16 %v626, %v610
          %v675 = vpack.c.b16 %v627, %v611
          %v676 = vpack.c.b16 %v628, %v612
          %v677 = vpack.c.b16 %v629, %v613
          %v678 = vpack.c.b16 %v630, %v614
          %v679 = vpack.c.b16 %v631, %v615
          %v680 = vpack.c.b16 %v632, %v616
          %v681 = vpack.c.b16 %v633, %v617
          %v682 = vpack.c.b16 %v650, %v634
          %v683 = vpack.c.b16 %v651, %v635
          %v684 = vpack.c.b16 %v652, %v636
          %v685 = vpack.c.b16 %v653, %v637
          %v686 = vpack.c.b16 %v654, %v638
          %v687 = vpack.c.b16 %v655, %v639
          %v688 = vpack.c.b16 %v656, %v640
          %v689 = vpack.c.b16 %v657, %v641
          %v690 = vpack.c.b16 %v658, %v642
          %v691 = vpack.c.b16 %v659, %v643
          %v692 = vpack.c.b16 %v660, %v644
          %v693 = vpack.c.b16 %v661, %v645
          %v694 = vpack.c.b16 %v662, %v646
          %v695 = vpack.c.b16 %v663, %v647
          %v696 = vpack.c.b16 %v664, %v648
          %v697 = vpack.c.b16 %v665, %v649
          %vm730 = vcmask 261120
          %v732 = vsel %vm730, %v453, 0
          %734 = vmatprep.subr.bf16.mxu0 %v667
          %735 = vmatpush1.bf16.msra.mxu0 %v666
          %736 = vmatprep.subr.bf16.mxu0 %v683
          %737 = vmatpush1.bf16.msra.mxu0 %v682
          %738 = vmatprep.subr.bf16.mxu0 0
          %739 = vmatpush1.bf16.msra.mxu0 0
          %740 = vmatprep.subr.bf16.mxu0 0
          %741 = vmatpush1.bf16.msra.mxu0 0
          %742 = vmatprep.subr.bf16.mxu0 0
          %743 = vmatpush1.bf16.msra.mxu0 0
          %744 = vmatprep.subr.bf16.mxu0 0
          %745 = vmatpush1.bf16.msra.mxu0 0
          %746 = vmatprep.subr.bf16.mxu0 0
          %747 = vmatpush1.bf16.msra.mxu0 0
          %748 = vmatprep.subr.bf16.mxu0 0
          %749 = vmatpush1.bf16.msra.mxu0 0
          %750 = vmatprep.subr.bf16.mxu0 0
          %751 = vmatpush1.bf16.msra.mxu0 0
          %752 = vmatprep.subr.bf16.mxu0 0
          %753 = vmatpush1.bf16.msra.mxu0 0
          %754 = vmatprep.subr.bf16.mxu0 0
          %755 = vmatpush1.bf16.msra.mxu0 0
          %756 = vmatprep.subr.bf16.mxu0 0
          %757 = vmatpush1.bf16.msra.mxu0 0
          %758 = vmatprep.subr.bf16.mxu0 0
          %759 = vmatpush1.bf16.msra.mxu0 0
          %760 = vmatprep.subr.bf16.mxu0 0
          %761 = vmatpush1.bf16.msra.mxu0 0
          %762 = vmatprep.subr.bf16.mxu0 0
          %763 = vmatpush1.bf16.msra.mxu0 0
          %764 = vmatprep.subr.bf16.mxu0 0
          %765 = vmatpush1.bf16.msra.mxu0 0
          %766 = vmatprep.mubr.bf16.mxu0 0
          %767 = vmatmul.mubr.bf16.gmra.mrb[0].mxu0 %v732
          %v768 = vpop.f32.mrb[0].mxu0
          %v769 = vadd.f32 %v493, %v768
          %v770 = vpop.f32.mrb[0].mxu0
          %v771 = vadd.f32 %v497, %v770
          %v772 = vpop.f32.mrb[0].mxu0
          %v773 = vpop.f32.mrb[0].mxu0
          %774 = vdwg.mxu0
          %775 = vmatprep.subr.bf16.mxu0 %v669
          %776 = vmatpush1.bf16.msra.mxu0 %v668
          %777 = vmatprep.subr.bf16.mxu0 %v685
          %778 = vmatpush1.bf16.msra.mxu0 %v684
          %779 = vmatprep.subr.bf16.mxu0 0
          %780 = vmatpush1.bf16.msra.mxu0 0
          %781 = vmatprep.subr.bf16.mxu0 0
          %782 = vmatpush1.bf16.msra.mxu0 0
          %783 = vmatprep.subr.bf16.mxu0 0
          %784 = vmatpush1.bf16.msra.mxu0 0
          %785 = vmatprep.subr.bf16.mxu0 0
          %786 = vmatpush1.bf16.msra.mxu0 0
          %787 = vmatprep.subr.bf16.mxu0 0
          %788 = vmatpush1.bf16.msra.mxu0 0
          %789 = vmatprep.subr.bf16.mxu0 0
          %790 = vmatpush1.bf16.msra.mxu0 0
          %791 = vmatprep.subr.bf16.mxu0 0
          %792 = vmatpush1.bf16.msra.mxu0 0
          %793 = vmatprep.subr.bf16.mxu0 0
          %794 = vmatpush1.bf16.msra.mxu0 0
          %795 = vmatprep.subr.bf16.mxu0 0
          %796 = vmatpush1.bf16.msra.mxu0 0
          %797 = vmatprep.subr.bf16.mxu0 0
          %798 = vmatpush1.bf16.msra.mxu0 0
          %799 = vmatprep.subr.bf16.mxu0 0
          %800 = vmatpush1.bf16.msra.mxu0 0
          %801 = vmatprep.subr.bf16.mxu0 0
          %802 = vmatpush1.bf16.msra.mxu0 0
          %803 = vmatprep.subr.bf16.mxu0 0
          %804 = vmatpush1.bf16.msra.mxu0 0
          %805 = vmatprep.subr.bf16.mxu0 0
          %806 = vmatpush1.bf16.msra.mxu0 0
          %807 = vmatprep.mubr.bf16.mxu0 0
          %808 = vmatmul.mubr.bf16.gmra.mrb[0].mxu0 %v732
          %v809 = vpop.f32.mrb[0].mxu0
          %v810 = vadd.f32 %v501, %v809
          %v811 = vpop.f32.mrb[0].mxu0
          %v812 = vadd.f32 %v505, %v811
          %v813 = vpop.f32.mrb[0].mxu0
          %v814 = vpop.f32.mrb[0].mxu0
          %815 = vdwg.mxu0
          %816 = vmatprep.subr.bf16.mxu0 %v671
          %817 = vmatpush1.bf16.msra.mxu0 %v670
          %818 = vmatprep.subr.bf16.mxu0 %v687
          %819 = vmatpush1.bf16.msra.mxu0 %v686
          %820 = vmatprep.subr.bf16.mxu0 0
          %821 = vmatpush1.bf16.msra.mxu0 0
          %822 = vmatprep.subr.bf16.mxu0 0
          %823 = vmatpush1.bf16.msra.mxu0 0
          %824 = vmatprep.subr.bf16.mxu0 0
          %825 = vmatpush1.bf16.msra.mxu0 0
          %826 = vmatprep.subr.bf16.mxu0 0
          %827 = vmatpush1.bf16.msra.mxu0 0
          %828 = vmatprep.subr.bf16.mxu0 0
          %829 = vmatpush1.bf16.msra.mxu0 0
          %830 = vmatprep.subr.bf16.mxu0 0
          %831 = vmatpush1.bf16.msra.mxu0 0
          %832 = vmatprep.subr.bf16.mxu0 0
          %833 = vmatpush1.bf16.msra.mxu0 0
          %834 = vmatprep.subr.bf16.mxu0 0
          %835 = vmatpush1.bf16.msra.mxu0 0
          %836 = vmatprep.subr.bf16.mxu0 0
          %837 = vmatpush1.bf16.msra.mxu0 0
          %838 = vmatprep.subr.bf16.mxu0 0
          %839 = vmatpush1.bf16.msra.mxu0 0
          %840 = vmatprep.subr.bf16.mxu0 0
          %841 = vmatpush1.bf16.msra.mxu0 0
          %842 = vmatprep.subr.bf16.mxu0 0
          %843 = vmatpush1.bf16.msra.mxu0 0
          %844 = vmatprep.subr.bf16.mxu0 0
          %845 = vmatpush1.bf16.msra.mxu0 0
          %846 = vmatprep.subr.bf16.mxu0 0
          %847 = vmatpush1.bf16.msra.mxu0 0
          %848 = vmatprep.mubr.bf16.mxu0 0
          %849 = vmatmul.mubr.bf16.gmra.mrb[0].mxu0 %v732
          %v850 = vpop.f32.mrb[0].mxu0
          %v851 = vadd.f32 %v509, %v850
          %v852 = vpop.f32.mrb[0].mxu0
          %v853 = vadd.f32 %v513, %v852
          %v854 = vpop.f32.mrb[0].mxu0
          %v855 = vpop.f32.mrb[0].mxu0
          %856 = vdwg.mxu0
          %857 = vmatprep.subr.bf16.mxu0 %v673
          %858 = vmatpush1.bf16.msra.mxu0 %v672
          %859 = vmatprep.subr.bf16.mxu0 %v689
          %860 = vmatpush1.bf16.msra.mxu0 %v688
          %861 = vmatprep.subr.bf16.mxu0 0
          %862 = vmatpush1.bf16.msra.mxu0 0
          %863 = vmatprep.subr.bf16.mxu0 0
          %864 = vmatpush1.bf16.msra.mxu0 0
          %865 = vmatprep.subr.bf16.mxu0 0
          %866 = vmatpush1.bf16.msra.mxu0 0
          %867 = vmatprep.subr.bf16.mxu0 0
          %868 = vmatpush1.bf16.msra.mxu0 0
          %869 = vmatprep.subr.bf16.mxu0 0
          %870 = vmatpush1.bf16.msra.mxu0 0
          %871 = vmatprep.subr.bf16.mxu0 0
          %872 = vmatpush1.bf16.msra.mxu0 0
          %873 = vmatprep.subr.bf16.mxu0 0
          %874 = vmatpush1.bf16.msra.mxu0 0
          %875 = vmatprep.subr.bf16.mxu0 0
          %876 = vmatpush1.bf16.msra.mxu0 0
          %877 = vmatprep.subr.bf16.mxu0 0
          %878 = vmatpush1.bf16.msra.mxu0 0
          %879 = vmatprep.subr.bf16.mxu0 0
          %880 = vmatpush1.bf16.msra.mxu0 0
          %881 = vmatprep.subr.bf16.mxu0 0
          %882 = vmatpush1.bf16.msra.mxu0 0
          %883 = vmatprep.subr.bf16.mxu0 0
          %884 = vmatpush1.bf16.msra.mxu0 0
          %885 = vmatprep.subr.bf16.mxu0 0
          %886 = vmatpush1.bf16.msra.mxu0 0
          %887 = vmatprep.subr.bf16.mxu0 0
          %888 = vmatpush1.bf16.msra.mxu0 0
          %889 = vmatprep.mubr.bf16.mxu0 0
          %890 = vmatmul.mubr.bf16.gmra.mrb[0].mxu0 %v732
          %v891 = vpop.f32.mrb[0].mxu0
          %v892 = vadd.f32 %v517, %v891
          %v893 = vpop.f32.mrb[0].mxu0
          %v894 = vadd.f32 %v521, %v893
          %v895 = vpop.f32.mrb[0].mxu0
          %v896 = vpop.f32.mrb[0].mxu0
          %897 = vdwg.mxu0
          %898 = vmatprep.subr.bf16.mxu0 %v675
          %899 = vmatpush1.bf16.msra.mxu0 %v674
          %900 = vmatprep.subr.bf16.mxu0 %v691
          %901 = vmatpush1.bf16.msra.mxu0 %v690
          %902 = vmatprep.subr.bf16.mxu0 0
          %903 = vmatpush1.bf16.msra.mxu0 0
          %904 = vmatprep.subr.bf16.mxu0 0
          %905 = vmatpush1.bf16.msra.mxu0 0
          %906 = vmatprep.subr.bf16.mxu0 0
          %907 = vmatpush1.bf16.msra.mxu0 0
          %908 = vmatprep.subr.bf16.mxu0 0
          %909 = vmatpush1.bf16.msra.mxu0 0
          %910 = vmatprep.subr.bf16.mxu0 0
          %911 = vmatpush1.bf16.msra.mxu0 0
          %912 = vmatprep.subr.bf16.mxu0 0
          %913 = vmatpush1.bf16.msra.mxu0 0
          %914 = vmatprep.subr.bf16.mxu0 0
          %915 = vmatpush1.bf16.msra.mxu0 0
          %916 = vmatprep.subr.bf16.mxu0 0
          %917 = vmatpush1.bf16.msra.mxu0 0
          %918 = vmatprep.subr.bf16.mxu0 0
          %919 = vmatpush1.bf16.msra.mxu0 0
          %920 = vmatprep.subr.bf16.mxu0 0
          %921 = vmatpush1.bf16.msra.mxu0 0
          %922 = vmatprep.subr.bf16.mxu0 0
          %923 = vmatpush1.bf16.msra.mxu0 0
          %924 = vmatprep.subr.bf16.mxu0 0
          %925 = vmatpush1.bf16.msra.mxu0 0
          %926 = vmatprep.subr.bf16.mxu0 0
          %927 = vmatpush1.bf16.msra.mxu0 0
          %928 = vmatprep.subr.bf16.mxu0 0
          %929 = vmatpush1.bf16.msra.mxu0 0
          %930 = vmatprep.mubr.bf16.mxu0 0
          %931 = vmatmul.mubr.bf16.gmra.mrb[0].mxu0 %v732
          %v932 = vpop.f32.mrb[0].mxu0
          %v933 = vadd.f32 %v525, %v932
          %v934 = vpop.f32.mrb[0].mxu0
          %v935 = vadd.f32 %v529, %v934
          %v936 = vpop.f32.mrb[0].mxu0
          %v937 = vpop.f32.mrb[0].mxu0
          %938 = vdwg.mxu0
          %939 = vmatprep.subr.bf16.mxu0 %v677
          %940 = vmatpush1.bf16.msra.mxu0 %v676
          %941 = vmatprep.subr.bf16.mxu0 %v693
          %942 = vmatpush1.bf16.msra.mxu0 %v692
          %943 = vmatprep.subr.bf16.mxu0 0
          %944 = vmatpush1.bf16.msra.mxu0 0
          %945 = vmatprep.subr.bf16.mxu0 0
          %946 = vmatpush1.bf16.msra.mxu0 0
          %947 = vmatprep.subr.bf16.mxu0 0
          %948 = vmatpush1.bf16.msra.mxu0 0
          %949 = vmatprep.subr.bf16.mxu0 0
          %950 = vmatpush1.bf16.msra.mxu0 0
          %951 = vmatprep.subr.bf16.mxu0 0
          %952 = vmatpush1.bf16.msra.mxu0 0
          %953 = vmatprep.subr.bf16.mxu0 0
          %954 = vmatpush1.bf16.msra.mxu0 0
          %955 = vmatprep.subr.bf16.mxu0 0
          %956 = vmatpush1.bf16.msra.mxu0 0
          %957 = vmatprep.subr.bf16.mxu0 0
          %958 = vmatpush1.bf16.msra.mxu0 0
          %959 = vmatprep.subr.bf16.mxu0 0
          %960 = vmatpush1.bf16.msra.mxu0 0
          %961 = vmatprep.subr.bf16.mxu0 0
          %962 = vmatpush1.bf16.msra.mxu0 0
          %963 = vmatprep.subr.bf16.mxu0 0
          %964 = vmatpush1.bf16.msra.mxu0 0
          %965 = vmatprep.subr.bf16.mxu0 0
          %966 = vmatpush1.bf16.msra.mxu0 0
          %967 = vmatprep.subr.bf16.mxu0 0
          %968 = vmatpush1.bf16.msra.mxu0 0
          %969 = vmatprep.subr.bf16.mxu0 0
          %970 = vmatpush1.bf16.msra.mxu0 0
          %971 = vmatprep.mubr.bf16.mxu0 0
          %972 = vmatmul.mubr.bf16.gmra.mrb[0].mxu0 %v732
          %v973 = vpop.f32.mrb[0].mxu0
          %v974 = vadd.f32 %v533, %v973
          %v975 = vpop.f32.mrb[0].mxu0
          %v976 = vadd.f32 %v537, %v975
          %v977 = vpop.f32.mrb[0].mxu0
          %v978 = vpop.f32.mrb[0].mxu0
          %979 = vdwg.mxu0
          %980 = vmatprep.subr.bf16.mxu0 %v679
          %981 = vmatpush1.bf16.msra.mxu0 %v678
          %982 = vmatprep.subr.bf16.mxu0 %v695
          %983 = vmatpush1.bf16.msra.mxu0 %v694
          %984 = vmatprep.subr.bf16.mxu0 0
          %985 = vmatpush1.bf16.msra.mxu0 0
          %986 = vmatprep.subr.bf16.mxu0 0
          %987 = vmatpush1.bf16.msra.mxu0 0
          %988 = vmatprep.subr.bf16.mxu0 0
          %989 = vmatpush1.bf16.msra.mxu0 0
          %990 = vmatprep.subr.bf16.mxu0 0
          %991 = vmatpush1.bf16.msra.mxu0 0
          %992 = vmatprep.subr.bf16.mxu0 0
          %993 = vmatpush1.bf16.msra.mxu0 0
          %994 = vmatprep.subr.bf16.mxu0 0
          %995 = vmatpush1.bf16.msra.mxu0 0
          %996 = vmatprep.subr.bf16.mxu0 0
          %997 = vmatpush1.bf16.msra.mxu0 0
          %998 = vmatprep.subr.bf16.mxu0 0
          %999 = vmatpush1.bf16.msra.mxu0 0
          %1000 = vmatprep.subr.bf16.mxu0 0
          %1001 = vmatpush1.bf16.msra.mxu0 0
          %1002 = vmatprep.subr.bf16.mxu0 0
          %1003 = vmatpush1.bf16.msra.mxu0 0
          %1004 = vmatprep.subr.bf16.mxu0 0
          %1005 = vmatpush1.bf16.msra.mxu0 0
          %1006 = vmatprep.subr.bf16.mxu0 0
          %1007 = vmatpush1.bf16.msra.mxu0 0
          %1008 = vmatprep.subr.bf16.mxu0 0
          %1009 = vmatpush1.bf16.msra.mxu0 0
          %1010 = vmatprep.subr.bf16.mxu0 0
          %1011 = vmatpush1.bf16.msra.mxu0 0
          %1012 = vmatprep.mubr.bf16.mxu0 0
          %1013 = vmatmul.mubr.bf16.gmra.mrb[0].mxu0 %v732
          %v1014 = vpop.f32.mrb[0].mxu0
          %v1015 = vadd.f32 %v541, %v1014
          %v1016 = vpop.f32.mrb[0].mxu0
          %v1017 = vadd.f32 %v545, %v1016
          %v1018 = vpop.f32.mrb[0].mxu0
          %v1019 = vpop.f32.mrb[0].mxu0
          %1020 = vdwg.mxu0
          %1021 = vmatprep.subr.bf16.mxu0 %v681
          %1022 = vmatpush1.bf16.msra.mxu0 %v680
          %1023 = vmatprep.subr.bf16.mxu0 %v697
          %1024 = vmatpush1.bf16.msra.mxu0 %v696
          %1025 = vmatprep.subr.bf16.mxu0 0
          %1026 = vmatpush1.bf16.msra.mxu0 0
          %1027 = vmatprep.subr.bf16.mxu0 0
          %1028 = vmatpush1.bf16.msra.mxu0 0
          %1029 = vmatprep.subr.bf16.mxu0 0
          %1030 = vmatpush1.bf16.msra.mxu0 0
          %1031 = vmatprep.subr.bf16.mxu0 0
          %1032 = vmatpush1.bf16.msra.mxu0 0
          %1033 = vmatprep.subr.bf16.mxu0 0
          %1034 = vmatpush1.bf16.msra.mxu0 0
          %1035 = vmatprep.subr.bf16.mxu0 0
          %1036 = vmatpush1.bf16.msra.mxu0 0
          %1037 = vmatprep.subr.bf16.mxu0 0
          %1038 = vmatpush1.bf16.msra.mxu0 0
          %1039 = vmatprep.subr.bf16.mxu0 0
          %1040 = vmatpush1.bf16.msra.mxu0 0
          %1041 = vmatprep.subr.bf16.mxu0 0
          %1042 = vmatpush1.bf16.msra.mxu0 0
          %1043 = vmatprep.subr.bf16.mxu0 0
          %1044 = vmatpush1.bf16.msra.mxu0 0
          %1045 = vmatprep.subr.bf16.mxu0 0
          %1046 = vmatpush1.bf16.msra.mxu0 0
          %1047 = vmatprep.subr.bf16.mxu0 0
          %1048 = vmatpush1.bf16.msra.mxu0 0
          %1049 = vmatprep.subr.bf16.mxu0 0
          %1050 = vmatpush1.bf16.msra.mxu0 0
          %1051 = vmatprep.subr.bf16.mxu0 0
          %1052 = vmatpush1.bf16.msra.mxu0 0
          %1053 = vmatprep.mubr.bf16.mxu0 0
          %1054 = vmatmul.mubr.bf16.gmra.mrb[0].mxu0 %v732
          %v1055 = vpop.f32.mrb[0].mxu0
          %v1056 = vadd.f32 %v549, %v1055
          %v1057 = vpop.f32.mrb[0].mxu0
          %v1058 = vadd.f32 %v553, %v1057
          %v1059 = vpop.f32.mrb[0].mxu0
          %v1060 = vpop.f32.mrb[0].mxu0
          %1061 = vdwg.mxu0
          %v1062 = vmax.f32 %v769, 0.0
          %v1063 = vmax.f32 %v771, 0.0
          %v1064 = vmax.f32 %v810, 0.0
          %v1065 = vmax.f32 %v812, 0.0
          %v1066 = vmax.f32 %v851, 0.0
          %v1067 = vmax.f32 %v853, 0.0
          %v1068 = vmax.f32 %v892, 0.0
          %v1069 = vmax.f32 %v894, 0.0
          %v1070 = vmax.f32 %v933, 0.0
          %v1071 = vmax.f32 %v935, 0.0
          %v1072 = vmax.f32 %v974, 0.0
          %v1073 = vmax.f32 %v976, 0.0
          %v1074 = vmax.f32 %v1015, 0.0
          %v1075 = vmax.f32 %v1017, 0.0
          %v1076 = vmax.f32 %v1056, 0.0
          %v1077 = vmax.f32 %v1058, 0.0
          %v1078 = vpack.c.bf16 %v1062, %v1062
          %v1079 = vpack.c.bf16 %v1063, %v1063
          %v1080 = vpack.c.bf16 %v1064, %v1064
          %v1081 = vpack.c.bf16 %v1065, %v1065
          %v1082 = vpack.c.bf16 %v1066, %v1066
          %v1083 = vpack.c.bf16 %v1067, %v1067
          %v1084 = vpack.c.bf16 %v1068, %v1068
          %v1085 = vpack.c.bf16 %v1069, %v1069
          %v1086 = vpack.c.bf16 %v1070, %v1070
          %v1087 = vpack.c.bf16 %v1071, %v1071
          %v1088 = vpack.c.bf16 %v1072, %v1072
          %v1089 = vpack.c.bf16 %v1073, %v1073
          %v1090 = vpack.c.bf16 %v1074, %v1074
          %v1091 = vpack.c.bf16 %v1075, %v1075
          %v1092 = vpack.c.bf16 %v1076, %v1076
          %v1093 = vpack.c.bf16 %v1077, %v1077
          %v1110 = vunpack.c.l.b16 %v1078
          %v1111 = vunpack.c.l.b16 %v1079
          %v1112 = vunpack.c.l.b16 %v1080
          %v1113 = vunpack.c.l.b16 %v1081
          %v1114 = vunpack.c.l.b16 %v1082
          %v1115 = vunpack.c.l.b16 %v1083
          %v1116 = vunpack.c.l.b16 %v1084
          %v1117 = vunpack.c.l.b16 %v1085
          %v1118 = vunpack.c.l.b16 %v1086
          %v1119 = vunpack.c.l.b16 %v1087
          %v1120 = vunpack.c.l.b16 %v1088
          %v1121 = vunpack.c.l.b16 %v1089
          %v1122 = vunpack.c.l.b16 %v1090
          %v1123 = vunpack.c.l.b16 %v1091
          %v1124 = vunpack.c.l.b16 %v1092
          %v1125 = vunpack.c.l.b16 %v1093
          %v1126 = vpack.c.b16 %v1111, %v1110
          %v1127 = vpack.c.b16 %v1113, %v1112
          %v1128 = vpack.c.b16 %v1115, %v1114
          %v1129 = vpack.c.b16 %v1117, %v1116
          %v1130 = vpack.c.b16 %v1119, %v1118
          %v1131 = vpack.c.b16 %v1121, %v1120
          %v1132 = vpack.c.b16 %v1123, %v1122
          %v1133 = vpack.c.b16 %v1125, %v1124
          %1142 = vst [vmem:[#allocation2] sm:$0xff] %v1126
          %1143 = vst [vmem:[#allocation2 + $0x8] sm:$0xff] %v1127
          %1144 = vst [vmem:[#allocation2 + $0x10] sm:$0xff] %v1128
          %1145 = vst [vmem:[#allocation2 + $0x18] sm:$0xff] %v1129
          %1146 = vst [vmem:[#allocation2 + $0x20] sm:$0xff] %v1130
          %1147 = vst [vmem:[#allocation2 + $0x28] sm:$0xff] %v1131
          %1148 = vst [vmem:[#allocation2 + $0x30] sm:$0xff] %v1132
          %1149 = vst [vmem:[#allocation2 + $0x38] sm:$0xff] %v1133
          %1150 = vst [vmem:[#allocation3] sm:$0xff] 0.0
          %1151 = vst [vmem:[#allocation3 + $0x8] sm:$0xff] 0.0
          %1152 = vst [vmem:[#allocation3 + $0x10] sm:$0xff] 0.0
          %1153 = vst [vmem:[#allocation3 + $0x18] sm:$0xff] 0.0
        $region96: #{tpu_custom_call.1} parent=55 // pred_fallthru
          _
        %s1154 = smul.u32 %s28, 1024
        %s1155 = sshra.s32 %s1154, 7
        %s1156 = sand.u32 %s1154, 127
        %s1157 = smul.addr %s1155, 4
        %s1158 = scalar_lea.vmem [#allocation2], %s1157
        %v1159 = vld [vmem:[%s1158] sm:$0xff]
        %v1160 = vld [vmem:[%s1158 + $0x8] sm:$0xff]
        %v1161 = vld [vmem:[%s1158 + $0x10] sm:$0xff]
        %v1162 = vld [vmem:[%s1158 + $0x18] sm:$0xff]
        %v1163 = vld [vmem:[#allocation3] sm:$0xff]
        %v1164 = vld [vmem:[#allocation3 + $0x8] sm:$0xff]
        %v1165 = vld [vmem:[#allocation3 + $0x10] sm:$0xff]
        %v1166 = vld [vmem:[#allocation3 + $0x18] sm:$0xff]
        %v1167 = vld [vmem:[%s396] sm:$0xff]
        %v1168 = vld [vmem:[%s396 + $0x8] sm:$0xff]
        %v1169 = vld [vmem:[%s396 + $0x10] sm:$0xff]
        %v1170 = vld [vmem:[%s396 + $0x18] sm:$0xff]
        %v1171 = vld [vmem:[%s396 + $0x20] sm:$0xff]
        %v1172 = vld [vmem:[%s396 + $0x28] sm:$0xff]
        %v1173 = vld [vmem:[%s396 + $0x30] sm:$0xff]
        %v1174 = vld [vmem:[%s396 + $0x38] sm:$0xff]
        %v1175 = vld [vmem:[%s396 + $0x40] sm:$0xff]
        %v1176 = vld [vmem:[%s396 + $0x48] sm:$0xff]
        %v1177 = vld [vmem:[%s396 + $0x50] sm:$0xff]
        %v1178 = vld [vmem:[%s396 + $0x58] sm:$0xff]
        %v1179 = vld [vmem:[%s396 + $0x60] sm:$0xff]
        %v1180 = vld [vmem:[%s396 + $0x68] sm:$0xff]
        %v1181 = vld [vmem:[%s396 + $0x70] sm:$0xff]
        %v1182 = vld [vmem:[%s396 + $0x78] sm:$0xff]
        %v1183 = vld [vmem:[%s396 + $0x80] sm:$0xff]
        %v1184 = vld [vmem:[%s396 + $0x88] sm:$0xff]
        %v1185 = vld [vmem:[%s396 + $0x90] sm:$0xff]
        %v1186 = vld [vmem:[%s396 + $0x98] sm:$0xff]
        %v1187 = vld [vmem:[%s396 + $0xa0] sm:$0xff]
        %v1188 = vld [vmem:[%s396 + $0xa8] sm:$0xff]
        %v1189 = vld [vmem:[%s396 + $0xb0] sm:$0xff]
        %v1190 = vld [vmem:[%s396 + $0xb8] sm:$0xff]
        %v1191 = vld [vmem:[%s396 + $0xc0] sm:$0xff]
        %v1192 = vld [vmem:[%s396 + $0xc8] sm:$0xff]
        %v1193 = vld [vmem:[%s396 + $0xd0] sm:$0xff]
        %v1194 = vld [vmem:[%s396 + $0xd8] sm:$0xff]
        %v1195 = vld [vmem:[%s396 + $0xe0] sm:$0xff]
        %v1196 = vld [vmem:[%s396 + $0xe8] sm:$0xff]
        %v1197 = vld [vmem:[%s396 + $0xf0] sm:$0xff]
        %v1198 = vld [vmem:[%s396 + $0xf8] sm:$0xff]
        %v1199 = vld [vmem:[%s396 + $0x100] sm:$0xff]
        %v1200 = vld [vmem:[%s396 + $0x108] sm:$0xff]
        %v1201 = vld [vmem:[%s396 + $0x110] sm:$0xff]
        %v1202 = vld [vmem:[%s396 + $0x118] sm:$0xff]
        %v1203 = vld [vmem:[%s396 + $0x120] sm:$0xff]
        %v1204 = vld [vmem:[%s396 + $0x128] sm:$0xff]
        %v1205 = vld [vmem:[%s396 + $0x130] sm:$0xff]
        %v1206 = vld [vmem:[%s396 + $0x138] sm:$0xff]
        %v1207 = vld [vmem:[%s396 + $0x140] sm:$0xff]
        %v1208 = vld [vmem:[%s396 + $0x148] sm:$0xff]
        %v1209 = vld [vmem:[%s396 + $0x150] sm:$0xff]
        %v1210 = vld [vmem:[%s396 + $0x158] sm:$0xff]
        %v1211 = vld [vmem:[%s396 + $0x160] sm:$0xff]
        %v1212 = vld [vmem:[%s396 + $0x168] sm:$0xff]
        %v1213 = vld [vmem:[%s396 + $0x170] sm:$0xff]
        %v1214 = vld [vmem:[%s396 + $0x178] sm:$0xff]
        %v1215 = vld [vmem:[%s396 + $0x180] sm:$0xff]
        %v1216 = vld [vmem:[%s396 + $0x188] sm:$0xff]
        %v1217 = vld [vmem:[%s396 + $0x190] sm:$0xff]
        %v1218 = vld [vmem:[%s396 + $0x198] sm:$0xff]
        %v1219 = vld [vmem:[%s396 + $0x1a0] sm:$0xff]
        %v1220 = vld [vmem:[%s396 + $0x1a8] sm:$0xff]
        %v1221 = vld [vmem:[%s396 + $0x1b0] sm:$0xff]
        %v1222 = vld [vmem:[%s396 + $0x1b8] sm:$0xff]
        %v1223 = vld [vmem:[%s396 + $0x1c0] sm:$0xff]
        %v1224 = vld [vmem:[%s396 + $0x1c8] sm:$0xff]
        %v1225 = vld [vmem:[%s396 + $0x1d0] sm:$0xff]
        %v1226 = vld [vmem:[%s396 + $0x1d8] sm:$0xff]
        %v1227 = vld [vmem:[%s396 + $0x1e0] sm:$0xff]
        %v1228 = vld [vmem:[%s396 + $0x1e8] sm:$0xff]
        %v1229 = vld [vmem:[%s396 + $0x1f0] sm:$0xff]
        %v1230 = vld [vmem:[%s396 + $0x1f8] sm:$0xff]
        %v1231 = vld [vmem:[%s396 + $0x200] sm:$0xff]
        %v1232 = vld [vmem:[%s396 + $0x208] sm:$0xff]
        %v1233 = vld [vmem:[%s396 + $0x210] sm:$0xff]
        %v1234 = vld [vmem:[%s396 + $0x218] sm:$0xff]
        %v1235 = vld [vmem:[%s396 + $0x220] sm:$0xff]
        %v1236 = vld [vmem:[%s396 + $0x228] sm:$0xff]
        %v1237 = vld [vmem:[%s396 + $0x230] sm:$0xff]
        %v1238 = vld [vmem:[%s396 + $0x238] sm:$0xff]
        %v1239 = vld [vmem:[%s396 + $0x240] sm:$0xff]
        %v1240 = vld [vmem:[%s396 + $0x248] sm:$0xff]
        %v1241 = vld [vmem:[%s396 + $0x250] sm:$0xff]
        %v1242 = vld [vmem:[%s396 + $0x258] sm:$0xff]
        %v1243 = vld [vmem:[%s396 + $0x260] sm:$0xff]
        %v1244 = vld [vmem:[%s396 + $0x268] sm:$0xff]
        %v1245 = vld [vmem:[%s396 + $0x270] sm:$0xff]
        %v1246 = vld [vmem:[%s396 + $0x278] sm:$0xff]
        %v1247 = vld [vmem:[%s396 + $0x280] sm:$0xff]
        %v1248 = vld [vmem:[%s396 + $0x288] sm:$0xff]
        %v1249 = vld [vmem:[%s396 + $0x290] sm:$0xff]
        %v1250 = vld [vmem:[%s396 + $0x298] sm:$0xff]
        %v1251 = vld [vmem:[%s396 + $0x2a0] sm:$0xff]
        %v1252 = vld [vmem:[%s396 + $0x2a8] sm:$0xff]
        %v1253 = vld [vmem:[%s396 + $0x2b0] sm:$0xff]
        %v1254 = vld [vmem:[%s396 + $0x2b8] sm:$0xff]
        %v1255 = vld [vmem:[%s396 + $0x2c0] sm:$0xff]
        %v1256 = vld [vmem:[%s396 + $0x2c8] sm:$0xff]
        %v1257 = vld [vmem:[%s396 + $0x2d0] sm:$0xff]
        %v1258 = vld [vmem:[%s396 + $0x2d8] sm:$0xff]
        %v1259 = vld [vmem:[%s396 + $0x2e0] sm:$0xff]
        %v1260 = vld [vmem:[%s396 + $0x2e8] sm:$0xff]
        %v1261 = vld [vmem:[%s396 + $0x2f0] sm:$0xff]
        %v1262 = vld [vmem:[%s396 + $0x2f8] sm:$0xff]
        %v1263 = vld [vmem:[%s396 + $0x300] sm:$0xff]
        %v1264 = vld [vmem:[%s396 + $0x308] sm:$0xff]
        %v1265 = vld [vmem:[%s396 + $0x310] sm:$0xff]
        %v1266 = vld [vmem:[%s396 + $0x318] sm:$0xff]
        %v1267 = vld [vmem:[%s396 + $0x320] sm:$0xff]
        %v1268 = vld [vmem:[%s396 + $0x328] sm:$0xff]
        %v1269 = vld [vmem:[%s396 + $0x330] sm:$0xff]
        %v1270 = vld [vmem:[%s396 + $0x338] sm:$0xff]
        %v1271 = vld [vmem:[%s396 + $0x340] sm:$0xff]
        %v1272 = vld [vmem:[%s396 + $0x348] sm:$0xff]
        %v1273 = vld [vmem:[%s396 + $0x350] sm:$0xff]
        %v1274 = vld [vmem:[%s396 + $0x358] sm:$0xff]
        %v1275 = vld [vmem:[%s396 + $0x360] sm:$0xff]
        %v1276 = vld [vmem:[%s396 + $0x368] sm:$0xff]
        %v1277 = vld [vmem:[%s396 + $0x370] sm:$0xff]
        %v1278 = vld [vmem:[%s396 + $0x378] sm:$0xff]
        %v1279 = vld [vmem:[%s396 + $0x380] sm:$0xff]
        %v1280 = vld [vmem:[%s396 + $0x388] sm:$0xff]
        %v1281 = vld [vmem:[%s396 + $0x390] sm:$0xff]
        %v1282 = vld [vmem:[%s396 + $0x398] sm:$0xff]
        %v1283 = vld [vmem:[%s396 + $0x3a0] sm:$0xff]
        %v1284 = vld [vmem:[%s396 + $0x3a8] sm:$0xff]
        %v1285 = vld [vmem:[%s396 + $0x3b0] sm:$0xff]
        %v1286 = vld [vmem:[%s396 + $0x3b8] sm:$0xff]
        %v1287 = vld [vmem:[%s396 + $0x3c0] sm:$0xff]
        %v1288 = vld [vmem:[%s396 + $0x3c8] sm:$0xff]
        %v1289 = vld [vmem:[%s396 + $0x3d0] sm:$0xff]
        %v1290 = vld [vmem:[%s396 + $0x3d8] sm:$0xff]
        %v1291 = vld [vmem:[%s396 + $0x3e0] sm:$0xff]
        %v1292 = vld [vmem:[%s396 + $0x3e8] sm:$0xff]
        %v1293 = vld [vmem:[%s396 + $0x3f0] sm:$0xff]
        %v1294 = vld [vmem:[%s396 + $0x3f8] sm:$0xff]
        %v1295 = vld [vmem:[%s396 + $0x400] sm:$0xff]
        %v1296 = vld [vmem:[%s396 + $0x408] sm:$0xff]
        %v1297 = vld [vmem:[%s396 + $0x410] sm:$0xff]
        %v1298 = vld [vmem:[%s396 + $0x418] sm:$0xff]
        %v1299 = vld [vmem:[%s396 + $0x420] sm:$0xff]
        %v1300 = vld [vmem:[%s396 + $0x428] sm:$0xff]
        %v1301 = vld [vmem:[%s396 + $0x430] sm:$0xff]
        %v1302 = vld [vmem:[%s396 + $0x438] sm:$0xff]
        %v1303 = vld [vmem:[%s396 + $0x440] sm:$0xff]
        %v1304 = vld [vmem:[%s396 + $0x448] sm:$0xff]
        %v1305 = vld [vmem:[%s396 + $0x450] sm:$0xff]
        %v1306 = vld [vmem:[%s396 + $0x458] sm:$0xff]
        %v1307 = vld [vmem:[%s396 + $0x460] sm:$0xff]
        %v1308 = vld [vmem:[%s396 + $0x468] sm:$0xff]
        %v1309 = vld [vmem:[%s396 + $0x470] sm:$0xff]
        %v1310 = vld [vmem:[%s396 + $0x478] sm:$0xff]
        %v1311 = vld [vmem:[%s396 + $0x480] sm:$0xff]
        %v1312 = vld [vmem:[%s396 + $0x488] sm:$0xff]
        %v1313 = vld [vmem:[%s396 + $0x490] sm:$0xff]
        %v1314 = vld [vmem:[%s396 + $0x498] sm:$0xff]
        %v1315 = vld [vmem:[%s396 + $0x4a0] sm:$0xff]
        %v1316 = vld [vmem:[%s396 + $0x4a8] sm:$0xff]
        %v1317 = vld [vmem:[%s396 + $0x4b0] sm:$0xff]
        %v1318 = vld [vmem:[%s396 + $0x4b8] sm:$0xff]
        %v1319 = vld [vmem:[%s396 + $0x4c0] sm:$0xff]
        %v1320 = vld [vmem:[%s396 + $0x4c8] sm:$0xff]
        %v1321 = vld [vmem:[%s396 + $0x4d0] sm:$0xff]
        %v1322 = vld [vmem:[%s396 + $0x4d8] sm:$0xff]
        %v1323 = vld [vmem:[%s396 + $0x4e0] sm:$0xff]
        %v1324 = vld [vmem:[%s396 + $0x4e8] sm:$0xff]
        %v1325 = vld [vmem:[%s396 + $0x4f0] sm:$0xff]
        %v1326 = vld [vmem:[%s396 + $0x4f8] sm:$0xff]
        %v1327 = vld [vmem:[%s396 + $0x500] sm:$0xff]
        %v1328 = vld [vmem:[%s396 + $0x508] sm:$0xff]
        %v1329 = vld [vmem:[%s396 + $0x510] sm:$0xff]
        %v1330 = vld [vmem:[%s396 + $0x518] sm:$0xff]
        %v1331 = vld [vmem:[%s396 + $0x520] sm:$0xff]
        %v1332 = vld [vmem:[%s396 + $0x528] sm:$0xff]
        %v1333 = vld [vmem:[%s396 + $0x530] sm:$0xff]
        %v1334 = vld [vmem:[%s396 + $0x538] sm:$0xff]
        %v1335 = vld [vmem:[%s396 + $0x540] sm:$0xff]
        %v1336 = vld [vmem:[%s396 + $0x548] sm:$0xff]
        %v1337 = vld [vmem:[%s396 + $0x550] sm:$0xff]
        %v1338 = vld [vmem:[%s396 + $0x558] sm:$0xff]
        %v1339 = vld [vmem:[%s396 + $0x560] sm:$0xff]
        %v1340 = vld [vmem:[%s396 + $0x568] sm:$0xff]
        %v1341 = vld [vmem:[%s396 + $0x570] sm:$0xff]
        %v1342 = vld [vmem:[%s396 + $0x578] sm:$0xff]
        %v1343 = vld [vmem:[%s396 + $0x580] sm:$0xff]
        %v1344 = vld [vmem:[%s396 + $0x588] sm:$0xff]
        %v1345 = vld [vmem:[%s396 + $0x590] sm:$0xff]
        %v1346 = vld [vmem:[%s396 + $0x598] sm:$0xff]
        %v1347 = vld [vmem:[%s396 + $0x5a0] sm:$0xff]
        %v1348 = vld [vmem:[%s396 + $0x5a8] sm:$0xff]
        %v1349 = vld [vmem:[%s396 + $0x5b0] sm:$0xff]
        %v1350 = vld [vmem:[%s396 + $0x5b8] sm:$0xff]
        %v1351 = vld [vmem:[%s396 + $0x5c0] sm:$0xff]
        %v1352 = vld [vmem:[%s396 + $0x5c8] sm:$0xff]
        %v1353 = vld [vmem:[%s396 + $0x5d0] sm:$0xff]
        %v1354 = vld [vmem:[%s396 + $0x5d8] sm:$0xff]
        %v1355 = vld [vmem:[%s396 + $0x5e0] sm:$0xff]
        %v1356 = vld [vmem:[%s396 + $0x5e8] sm:$0xff]
        %v1357 = vld [vmem:[%s396 + $0x5f0] sm:$0xff]
        %v1358 = vld [vmem:[%s396 + $0x5f8] sm:$0xff]
        %v1359 = vld [vmem:[%s396 + $0x600] sm:$0xff]
        %v1360 = vld [vmem:[%s396 + $0x608] sm:$0xff]
        %v1361 = vld [vmem:[%s396 + $0x610] sm:$0xff]
        %v1362 = vld [vmem:[%s396 + $0x618] sm:$0xff]
        %v1363 = vld [vmem:[%s396 + $0x620] sm:$0xff]
        %v1364 = vld [vmem:[%s396 + $0x628] sm:$0xff]
        %v1365 = vld [vmem:[%s396 + $0x630] sm:$0xff]
        %v1366 = vld [vmem:[%s396 + $0x638] sm:$0xff]
        %v1367 = vld [vmem:[%s396 + $0x640] sm:$0xff]
        %v1368 = vld [vmem:[%s396 + $0x648] sm:$0xff]
        %v1369 = vld [vmem:[%s396 + $0x650] sm:$0xff]
        %v1370 = vld [vmem:[%s396 + $0x658] sm:$0xff]
        %v1371 = vld [vmem:[%s396 + $0x660] sm:$0xff]
        %v1372 = vld [vmem:[%s396 + $0x668] sm:$0xff]
        %v1373 = vld [vmem:[%s396 + $0x670] sm:$0xff]
        %v1374 = vld [vmem:[%s396 + $0x678] sm:$0xff]
        %v1375 = vld [vmem:[%s396 + $0x680] sm:$0xff]
        %v1376 = vld [vmem:[%s396 + $0x688] sm:$0xff]
        %v1377 = vld [vmem:[%s396 + $0x690] sm:$0xff]
        %v1378 = vld [vmem:[%s396 + $0x698] sm:$0xff]
        %v1379 = vld [vmem:[%s396 + $0x6a0] sm:$0xff]
        %v1380 = vld [vmem:[%s396 + $0x6a8] sm:$0xff]
        %v1381 = vld [vmem:[%s396 + $0x6b0] sm:$0xff]
        %v1382 = vld [vmem:[%s396 + $0x6b8] sm:$0xff]
        %v1383 = vld [vmem:[%s396 + $0x6c0] sm:$0xff]
        %v1384 = vld [vmem:[%s396 + $0x6c8] sm:$0xff]
        %v1385 = vld [vmem:[%s396 + $0x6d0] sm:$0xff]
        %v1386 = vld [vmem:[%s396 + $0x6d8] sm:$0xff]
        %v1387 = vld [vmem:[%s396 + $0x6e0] sm:$0xff]
        %v1388 = vld [vmem:[%s396 + $0x6e8] sm:$0xff]
        %v1389 = vld [vmem:[%s396 + $0x6f0] sm:$0xff]
        %v1390 = vld [vmem:[%s396 + $0x6f8] sm:$0xff]
        %v1391 = vld [vmem:[%s396 + $0x700] sm:$0xff]
        %v1392 = vld [vmem:[%s396 + $0x708] sm:$0xff]
        %v1393 = vld [vmem:[%s396 + $0x710] sm:$0xff]
        %v1394 = vld [vmem:[%s396 + $0x718] sm:$0xff]
        %v1395 = vld [vmem:[%s396 + $0x720] sm:$0xff]
        %v1396 = vld [vmem:[%s396 + $0x728] sm:$0xff]
        %v1397 = vld [vmem:[%s396 + $0x730] sm:$0xff]
        %v1398 = vld [vmem:[%s396 + $0x738] sm:$0xff]
        %v1399 = vld [vmem:[%s396 + $0x740] sm:$0xff]
        %v1400 = vld [vmem:[%s396 + $0x748] sm:$0xff]
        %v1401 = vld [vmem:[%s396 + $0x750] sm:$0xff]
        %v1402 = vld [vmem:[%s396 + $0x758] sm:$0xff]
        %v1403 = vld [vmem:[%s396 + $0x760] sm:$0xff]
        %v1404 = vld [vmem:[%s396 + $0x768] sm:$0xff]
        %v1405 = vld [vmem:[%s396 + $0x770] sm:$0xff]
        %v1406 = vld [vmem:[%s396 + $0x778] sm:$0xff]
        %v1407 = vld [vmem:[%s396 + $0x780] sm:$0xff]
        %v1408 = vld [vmem:[%s396 + $0x788] sm:$0xff]
        %v1409 = vld [vmem:[%s396 + $0x790] sm:$0xff]
        %v1410 = vld [vmem:[%s396 + $0x798] sm:$0xff]
        %v1411 = vld [vmem:[%s396 + $0x7a0] sm:$0xff]
        %v1412 = vld [vmem:[%s396 + $0x7a8] sm:$0xff]
        %v1413 = vld [vmem:[%s396 + $0x7b0] sm:$0xff]
        %v1414 = vld [vmem:[%s396 + $0x7b8] sm:$0xff]
        %v1415 = vld [vmem:[%s396 + $0x7c0] sm:$0xff]
        %v1416 = vld [vmem:[%s396 + $0x7c8] sm:$0xff]
        %v1417 = vld [vmem:[%s396 + $0x7d0] sm:$0xff]
        %v1418 = vld [vmem:[%s396 + $0x7d8] sm:$0xff]
        %v1419 = vld [vmem:[%s396 + $0x7e0] sm:$0xff]
        %v1420 = vld [vmem:[%s396 + $0x7e8] sm:$0xff]
        %v1421 = vld [vmem:[%s396 + $0x7f0] sm:$0xff]
        %v1422 = vld [vmem:[%s396 + $0x7f8] sm:$0xff]
        %v1427 = vunpack.c.l.b16 %v1159
        %v1428 = vunpack.c.h.b16 %v1159
        %v1429 = vunpack.c.l.b16 %v1160
        %v1430 = vunpack.c.h.b16 %v1160
        %v1431 = vunpack.c.l.b16 %v1161
        %v1432 = vunpack.c.h.b16 %v1161
        %v1433 = vunpack.c.l.b16 %v1162
        %v1434 = vunpack.c.h.b16 %v1162
        %v1435 = vpack.c.b16 %v1427, %v1427
        %v1436 = vpack.c.b16 %v1428, %v1428
        %v1437 = vpack.c.b16 %v1429, %v1429
        %v1438 = vpack.c.b16 %v1430, %v1430
        %v1439 = vpack.c.b16 %v1431, %v1431
        %v1440 = vpack.c.b16 %v1432, %v1432
        %v1441 = vpack.c.b16 %v1433, %v1433
        %v1442 = vpack.c.b16 %v1434, %v1434
        %v1707 = vunpack.c.l.b16 %v1167
        %v1708 = vunpack.c.h.b16 %v1167
        %v1709 = vunpack.c.l.b16 %v1168
        %v1710 = vunpack.c.h.b16 %v1168
        %v1711 = vunpack.c.l.b16 %v1169
        %v1712 = vunpack.c.h.b16 %v1169
        %v1713 = vunpack.c.l.b16 %v1170
        %v1714 = vunpack.c.h.b16 %v1170
        %v1715 = vunpack.c.l.b16 %v1171
        %v1716 = vunpack.c.h.b16 %v1171
        %v1717 = vunpack.c.l.b16 %v1172
        %v1718 = vunpack.c.h.b16 %v1172
        %v1719 = vunpack.c.l.b16 %v1173
        %v1720 = vunpack.c.h.b16 %v1173
        %v1721 = vunpack.c.l.b16 %v1174
        %v1722 = vunpack.c.h.b16 %v1174
        %v1723 = vunpack.c.l.b16 %v1175
        %v1724 = vunpack.c.h.b16 %v1175
        %v1725 = vunpack.c.l.b16 %v1176
        %v1726 = vunpack.c.h.b16 %v1176
        %v1727 = vunpack.c.l.b16 %v1177
        %v1728 = vunpack.c.h.b16 %v1177
        %v1729 = vunpack.c.l.b16 %v1178
        %v1730 = vunpack.c.h.b16 %v1178
        %v1731 = vunpack.c.l.b16 %v1179
        %v1732 = vunpack.c.h.b16 %v1179
        %v1733 = vunpack.c.l.b16 %v1180
        %v1734 = vunpack.c.h.b16 %v1180
        %v1735 = vunpack.c.l.b16 %v1181
        %v1736 = vunpack.c.h.b16 %v1181
        %v1737 = vunpack.c.l.b16 %v1182
        %v1738 = vunpack.c.h.b16 %v1182
        %v1739 = vunpack.c.l.b16 %v1183
        %v1740 = vunpack.c.h.b16 %v1183
        %v1741 = vunpack.c.l.b16 %v1184
        %v1742 = vunpack.c.h.b16 %v1184
        %v1743 = vunpack.c.l.b16 %v1185
        %v1744 = vunpack.c.h.b16 %v1185
        %v1745 = vunpack.c.l.b16 %v1186
        %v1746 = vunpack.c.h.b16 %v1186
        %v1747 = vunpack.c.l.b16 %v1187
        %v1748 = vunpack.c.h.b16 %v1187
        %v1749 = vunpack.c.l.b16 %v1188
        %v1750 = vunpack.c.h.b16 %v1188
        %v1751 = vunpack.c.l.b16 %v1189
        %v1752 = vunpack.c.h.b16 %v1189
        %v1753 = vunpack.c.l.b16 %v1190
        %v1754 = vunpack.c.h.b16 %v1190
        %v1755 = vunpack.c.l.b16 %v1191
        %v1756 = vunpack.c.h.b16 %v1191
        %v1757 = vunpack.c.l.b16 %v1192
        %v1758 = vunpack.c.h.b16 %v1192
        %v1759 = vunpack.c.l.b16 %v1193
        %v1760 = vunpack.c.h.b16 %v1193
        %v1761 = vunpack.c.l.b16 %v1194
        %v1762 = vunpack.c.h.b16 %v1194
        %v1763 = vunpack.c.l.b16 %v1195
        %v1764 = vunpack.c.h.b16 %v1195
        %v1765 = vunpack.c.l.b16 %v1196
        %v1766 = vunpack.c.h.b16 %v1196
        %v1767 = vunpack.c.l.b16 %v1197
        %v1768 = vunpack.c.h.b16 %v1197
        %v1769 = vunpack.c.l.b16 %v1198
        %v1770 = vunpack.c.h.b16 %v1198
        %v1771 = vunpack.c.l.b16 %v1199
        %v1772 = vunpack.c.h.b16 %v1199
        %v1773 = vunpack.c.l.b16 %v1200
        %v1774 = vunpack.c.h.b16 %v1200
        %v1775 = vunpack.c.l.b16 %v1201
        %v1776 = vunpack.c.h.b16 %v1201
        %v1777 = vunpack.c.l.b16 %v1202
        %v1778 = vunpack.c.h.b16 %v1202
        %v1779 = vunpack.c.l.b16 %v1203
        %v1780 = vunpack.c.h.b16 %v1203
        %v1781 = vunpack.c.l.b16 %v1204
        %v1782 = vunpack.c.h.b16 %v1204
        %v1783 = vunpack.c.l.b16 %v1205
        %v1784 = vunpack.c.h.b16 %v1205
        %v1785 = vunpack.c.l.b16 %v1206
        %v1786 = vunpack.c.h.b16 %v1206
        %v1787 = vunpack.c.l.b16 %v1207
        %v1788 = vunpack.c.h.b16 %v1207
        %v1789 = vunpack.c.l.b16 %v1208
        %v1790 = vunpack.c.h.b16 %v1208
        %v1791 = vunpack.c.l.b16 %v1209
        %v1792 = vunpack.c.h.b16 %v1209
        %v1793 = vunpack.c.l.b16 %v1210
        %v1794 = vunpack.c.h.b16 %v1210
        %v1795 = vunpack.c.l.b16 %v1211
        %v1796 = vunpack.c.h.b16 %v1211
        %v1797 = vunpack.c.l.b16 %v1212
        %v1798 = vunpack.c.h.b16 %v1212
        %v1799 = vunpack.c.l.b16 %v1213
        %v1800 = vunpack.c.h.b16 %v1213
        %v1801 = vunpack.c.l.b16 %v1214
        %v1802 = vunpack.c.h.b16 %v1214
        %v1803 = vunpack.c.l.b16 %v1215
        %v1804 = vunpack.c.h.b16 %v1215
        %v1805 = vunpack.c.l.b16 %v1216
        %v1806 = vunpack.c.h.b16 %v1216
        %v1807 = vunpack.c.l.b16 %v1217
        %v1808 = vunpack.c.h.b16 %v1217
        %v1809 = vunpack.c.l.b16 %v1218
        %v1810 = vunpack.c.h.b16 %v1218
        %v1811 = vunpack.c.l.b16 %v1219
        %v1812 = vunpack.c.h.b16 %v1219
        %v1813 = vunpack.c.l.b16 %v1220
        %v1814 = vunpack.c.h.b16 %v1220
        %v1815 = vunpack.c.l.b16 %v1221
        %v1816 = vunpack.c.h.b16 %v1221
        %v1817 = vunpack.c.l.b16 %v1222
        %v1818 = vunpack.c.h.b16 %v1222
        %v1819 = vunpack.c.l.b16 %v1223
        %v1820 = vunpack.c.h.b16 %v1223
        %v1821 = vunpack.c.l.b16 %v1224
        %v1822 = vunpack.c.h.b16 %v1224
        %v1823 = vunpack.c.l.b16 %v1225
        %v1824 = vunpack.c.h.b16 %v1225
        %v1825 = vunpack.c.l.b16 %v1226
        %v1826 = vunpack.c.h.b16 %v1226
        %v1827 = vunpack.c.l.b16 %v1227
        %v1828 = vunpack.c.h.b16 %v1227
        %v1829 = vunpack.c.l.b16 %v1228
        %v1830 = vunpack.c.h.b16 %v1228
        %v1831 = vunpack.c.l.b16 %v1229
        %v1832 = vunpack.c.h.b16 %v1229
        %v1833 = vunpack.c.l.b16 %v1230
        %v1834 = vunpack.c.h.b16 %v1230
        %v1835 = vunpack.c.l.b16 %v1231
        %v1836 = vunpack.c.h.b16 %v1231
        %v1837 = vunpack.c.l.b16 %v1232
        %v1838 = vunpack.c.h.b16 %v1232
        %v1839 = vunpack.c.l.b16 %v1233
        %v1840 = vunpack.c.h.b16 %v1233
        %v1841 = vunpack.c.l.b16 %v1234
        %v1842 = vunpack.c.h.b16 %v1234
        %v1843 = vunpack.c.l.b16 %v1235
        %v1844 = vunpack.c.h.b16 %v1235
        %v1845 = vunpack.c.l.b16 %v1236
        %v1846 = vunpack.c.h.b16 %v1236
        %v1847 = vunpack.c.l.b16 %v1237
        %v1848 = vunpack.c.h.b16 %v1237
        %v1849 = vunpack.c.l.b16 %v1238
        %v1850 = vunpack.c.h.b16 %v1238
        %v1851 = vunpack.c.l.b16 %v1239
        %v1852 = vunpack.c.h.b16 %v1239
        %v1853 = vunpack.c.l.b16 %v1240
        %v1854 = vunpack.c.h.b16 %v1240
        %v1855 = vunpack.c.l.b16 %v1241
        %v1856 = vunpack.c.h.b16 %v1241
        %v1857 = vunpack.c.l.b16 %v1242
        %v1858 = vunpack.c.h.b16 %v1242
        %v1859 = vunpack.c.l.b16 %v1243
        %v1860 = vunpack.c.h.b16 %v1243
        %v1861 = vunpack.c.l.b16 %v1244
        %v1862 = vunpack.c.h.b16 %v1244
        %v1863 = vunpack.c.l.b16 %v1245
        %v1864 = vunpack.c.h.b16 %v1245
        %v1865 = vunpack.c.l.b16 %v1246
        %v1866 = vunpack.c.h.b16 %v1246
        %v1867 = vunpack.c.l.b16 %v1247
        %v1868 = vunpack.c.h.b16 %v1247
        %v1869 = vunpack.c.l.b16 %v1248
        %v1870 = vunpack.c.h.b16 %v1248
        %v1871 = vunpack.c.l.b16 %v1249
        %v1872 = vunpack.c.h.b16 %v1249
        %v1873 = vunpack.c.l.b16 %v1250
        %v1874 = vunpack.c.h.b16 %v1250
        %v1875 = vunpack.c.l.b16 %v1251
        %v1876 = vunpack.c.h.b16 %v1251
        %v1877 = vunpack.c.l.b16 %v1252
        %v1878 = vunpack.c.h.b16 %v1252
        %v1879 = vunpack.c.l.b16 %v1253
        %v1880 = vunpack.c.h.b16 %v1253
        %v1881 = vunpack.c.l.b16 %v1254
        %v1882 = vunpack.c.h.b16 %v1254
        %v1883 = vunpack.c.l.b16 %v1255
        %v1884 = vunpack.c.h.b16 %v1255
        %v1885 = vunpack.c.l.b16 %v1256
        %v1886 = vunpack.c.h.b16 %v1256
        %v1887 = vunpack.c.l.b16 %v1257
        %v1888 = vunpack.c.h.b16 %v1257
        %v1889 = vunpack.c.l.b16 %v1258
        %v1890 = vunpack.c.h.b16 %v1258
        %v1891 = vunpack.c.l.b16 %v1259
        %v1892 = vunpack.c.h.b16 %v1259
        %v1893 = vunpack.c.l.b16 %v1260
        %v1894 = vunpack.c.h.b16 %v1260
        %v1895 = vunpack.c.l.b16 %v1261
        %v1896 = vunpack.c.h.b16 %v1261
        %v1897 = vunpack.c.l.b16 %v1262
        %v1898 = vunpack.c.h.b16 %v1262
        %v1899 = vunpack.c.l.b16 %v1263
        %v1900 = vunpack.c.h.b16 %v1263
        %v1901 = vunpack.c.l.b16 %v1264
        %v1902 = vunpack.c.h.b16 %v1264
        %v1903 = vunpack.c.l.b16 %v1265
        %v1904 = vunpack.c.h.b16 %v1265
        %v1905 = vunpack.c.l.b16 %v1266
        %v1906 = vunpack.c.h.b16 %v1266
        %v1907 = vunpack.c.l.b16 %v1267
        %v1908 = vunpack.c.h.b16 %v1267
        %v1909 = vunpack.c.l.b16 %v1268
        %v1910 = vunpack.c.h.b16 %v1268
        %v1911 = vunpack.c.l.b16 %v1269
        %v1912 = vunpack.c.h.b16 %v1269
        %v1913 = vunpack.c.l.b16 %v1270
        %v1914 = vunpack.c.h.b16 %v1270
        %v1915 = vunpack.c.l.b16 %v1271
        %v1916 = vunpack.c.h.b16 %v1271
        %v1917 = vunpack.c.l.b16 %v1272
        %v1918 = vunpack.c.h.b16 %v1272
        %v1919 = vunpack.c.l.b16 %v1273
        %v1920 = vunpack.c.h.b16 %v1273
        %v1921 = vunpack.c.l.b16 %v1274
        %v1922 = vunpack.c.h.b16 %v1274
        %v1923 = vunpack.c.l.b16 %v1275
        %v1924 = vunpack.c.h.b16 %v1275
        %v1925 = vunpack.c.l.b16 %v1276
        %v1926 = vunpack.c.h.b16 %v1276
        %v1927 = vunpack.c.l.b16 %v1277
        %v1928 = vunpack.c.h.b16 %v1277
        %v1929 = vunpack.c.l.b16 %v1278
        %v1930 = vunpack.c.h.b16 %v1278
        %v1931 = vunpack.c.l.b16 %v1279
        %v1932 = vunpack.c.h.b16 %v1279
        %v1933 = vunpack.c.l.b16 %v1280
        %v1934 = vunpack.c.h.b16 %v1280
        %v1935 = vunpack.c.l.b16 %v1281
        %v1936 = vunpack.c.h.b16 %v1281
        %v1937 = vunpack.c.l.b16 %v1282
        %v1938 = vunpack.c.h.b16 %v1282
        %v1939 = vunpack.c.l.b16 %v1283
        %v1940 = vunpack.c.h.b16 %v1283
        %v1941 = vunpack.c.l.b16 %v1284
        %v1942 = vunpack.c.h.b16 %v1284
        %v1943 = vunpack.c.l.b16 %v1285
        %v1944 = vunpack.c.h.b16 %v1285
        %v1945 = vunpack.c.l.b16 %v1286
        %v1946 = vunpack.c.h.b16 %v1286
        %v1947 = vunpack.c.l.b16 %v1287
        %v1948 = vunpack.c.h.b16 %v1287
        %v1949 = vunpack.c.l.b16 %v1288
        %v1950 = vunpack.c.h.b16 %v1288
        %v1951 = vunpack.c.l.b16 %v1289
        %v1952 = vunpack.c.h.b16 %v1289
        %v1953 = vunpack.c.l.b16 %v1290
        %v1954 = vunpack.c.h.b16 %v1290
        %v1955 = vunpack.c.l.b16 %v1291
        %v1956 = vunpack.c.h.b16 %v1291
        %v1957 = vunpack.c.l.b16 %v1292
        %v1958 = vunpack.c.h.b16 %v1292
        %v1959 = vunpack.c.l.b16 %v1293
        %v1960 = vunpack.c.h.b16 %v1293
        %v1961 = vunpack.c.l.b16 %v1294
        %v1962 = vunpack.c.h.b16 %v1294
        %v1963 = vunpack.c.l.b16 %v1295
        %v1964 = vunpack.c.h.b16 %v1295
        %v1965 = vunpack.c.l.b16 %v1296
        %v1966 = vunpack.c.h.b16 %v1296
        %v1967 = vunpack.c.l.b16 %v1297
        %v1968 = vunpack.c.h.b16 %v1297
        %v1969 = vunpack.c.l.b16 %v1298
        %v1970 = vunpack.c.h.b16 %v1298
        %v1971 = vunpack.c.l.b16 %v1299
        %v1972 = vunpack.c.h.b16 %v1299
        %v1973 = vunpack.c.l.b16 %v1300
        %v1974 = vunpack.c.h.b16 %v1300
        %v1975 = vunpack.c.l.b16 %v1301
        %v1976 = vunpack.c.h.b16 %v1301
        %v1977 = vunpack.c.l.b16 %v1302
        %v1978 = vunpack.c.h.b16 %v1302
        %v1979 = vunpack.c.l.b16 %v1303
        %v1980 = vunpack.c.h.b16 %v1303
        %v1981 = vunpack.c.l.b16 %v1304
        %v1982 = vunpack.c.h.b16 %v1304
        %v1983 = vunpack.c.l.b16 %v1305
        %v1984 = vunpack.c.h.b16 %v1305
        %v1985 = vunpack.c.l.b16 %v1306
        %v1986 = vunpack.c.h.b16 %v1306
        %v1987 = vunpack.c.l.b16 %v1307
        %v1988 = vunpack.c.h.b16 %v1307
        %v1989 = vunpack.c.l.b16 %v1308
        %v1990 = vunpack.c.h.b16 %v1308
        %v1991 = vunpack.c.l.b16 %v1309
        %v1992 = vunpack.c.h.b16 %v1309
        %v1993 = vunpack.c.l.b16 %v1310
        %v1994 = vunpack.c.h.b16 %v1310
        %v1995 = vunpack.c.l.b16 %v1311
        %v1996 = vunpack.c.h.b16 %v1311
        %v1997 = vunpack.c.l.b16 %v1312
        %v1998 = vunpack.c.h.b16 %v1312
        %v1999 = vunpack.c.l.b16 %v1313
        %v2000 = vunpack.c.h.b16 %v1313
        %v2001 = vunpack.c.l.b16 %v1314
        %v2002 = vunpack.c.h.b16 %v1314
        %v2003 = vunpack.c.l.b16 %v1315
        %v2004 = vunpack.c.h.b16 %v1315
        %v2005 = vunpack.c.l.b16 %v1316
        %v2006 = vunpack.c.h.b16 %v1316
        %v2007 = vunpack.c.l.b16 %v1317
        %v2008 = vunpack.c.h.b16 %v1317
        %v2009 = vunpack.c.l.b16 %v1318
        %v2010 = vunpack.c.h.b16 %v1318
        %v2011 = vunpack.c.l.b16 %v1319
        %v2012 = vunpack.c.h.b16 %v1319
        %v2013 = vunpack.c.l.b16 %v1320
        %v2014 = vunpack.c.h.b16 %v1320
        %v2015 = vunpack.c.l.b16 %v1321
        %v2016 = vunpack.c.h.b16 %v1321
        %v2017 = vunpack.c.l.b16 %v1322
        %v2018 = vunpack.c.h.b16 %v1322
        %v2019 = vunpack.c.l.b16 %v1323
        %v2020 = vunpack.c.h.b16 %v1323
        %v2021 = vunpack.c.l.b16 %v1324
        %v2022 = vunpack.c.h.b16 %v1324
        %v2023 = vunpack.c.l.b16 %v1325
        %v2024 = vunpack.c.h.b16 %v1325
        %v2025 = vunpack.c.l.b16 %v1326
        %v2026 = vunpack.c.h.b16 %v1326
        %v2027 = vunpack.c.l.b16 %v1327
        %v2028 = vunpack.c.h.b16 %v1327
        %v2029 = vunpack.c.l.b16 %v1328
        %v2030 = vunpack.c.h.b16 %v1328
        %v2031 = vunpack.c.l.b16 %v1329
        %v2032 = vunpack.c.h.b16 %v1329
        %v2033 = vunpack.c.l.b16 %v1330
        %v2034 = vunpack.c.h.b16 %v1330
        %v2035 = vunpack.c.l.b16 %v1331
        %v2036 = vunpack.c.h.b16 %v1331
        %v2037 = vunpack.c.l.b16 %v1332
        %v2038 = vunpack.c.h.b16 %v1332
        %v2039 = vunpack.c.l.b16 %v1333
        %v2040 = vunpack.c.h.b16 %v1333
        %v2041 = vunpack.c.l.b16 %v1334
        %v2042 = vunpack.c.h.b16 %v1334
        %v2043 = vunpack.c.l.b16 %v1335
        %v2044 = vunpack.c.h.b16 %v1335
        %v2045 = vunpack.c.l.b16 %v1336
        %v2046 = vunpack.c.h.b16 %v1336
        %v2047 = vunpack.c.l.b16 %v1337
        %v2048 = vunpack.c.h.b16 %v1337
        %v2049 = vunpack.c.l.b16 %v1338
        %v2050 = vunpack.c.h.b16 %v1338
        %v2051 = vunpack.c.l.b16 %v1339
        %v2052 = vunpack.c.h.b16 %v1339
        %v2053 = vunpack.c.l.b16 %v1340
        %v2054 = vunpack.c.h.b16 %v1340
        %v2055 = vunpack.c.l.b16 %v1341
        %v2056 = vunpack.c.h.b16 %v1341
        %v2057 = vunpack.c.l.b16 %v1342
        %v2058 = vunpack.c.h.b16 %v1342
        %v2059 = vunpack.c.l.b16 %v1343
        %v2060 = vunpack.c.h.b16 %v1343
        %v2061 = vunpack.c.l.b16 %v1344
        %v2062 = vunpack.c.h.b16 %v1344
        %v2063 = vunpack.c.l.b16 %v1345
        %v2064 = vunpack.c.h.b16 %v1345
        %v2065 = vunpack.c.l.b16 %v1346
        %v2066 = vunpack.c.h.b16 %v1346
        %v2067 = vunpack.c.l.b16 %v1347
        %v2068 = vunpack.c.h.b16 %v1347
        %v2069 = vunpack.c.l.b16 %v1348
        %v2070 = vunpack.c.h.b16 %v1348
        %v2071 = vunpack.c.l.b16 %v1349
        %v2072 = vunpack.c.h.b16 %v1349
        %v2073 = vunpack.c.l.b16 %v1350
        %v2074 = vunpack.c.h.b16 %v1350
        %v2075 = vunpack.c.l.b16 %v1351
        %v2076 = vunpack.c.h.b16 %v1351
        %v2077 = vunpack.c.l.b16 %v1352
        %v2078 = vunpack.c.h.b16 %v1352
        %v2079 = vunpack.c.l.b16 %v1353
        %v2080 = vunpack.c.h.b16 %v1353
        %v2081 = vunpack.c.l.b16 %v1354
        %v2082 = vunpack.c.h.b16 %v1354
        %v2083 = vunpack.c.l.b16 %v1355
        %v2084 = vunpack.c.h.b16 %v1355
        %v2085 = vunpack.c.l.b16 %v1356
        %v2086 = vunpack.c.h.b16 %v1356
        %v2087 = vunpack.c.l.b16 %v1357
        %v2088 = vunpack.c.h.b16 %v1357
        %v2089 = vunpack.c.l.b16 %v1358
        %v2090 = vunpack.c.h.b16 %v1358
        %v2091 = vunpack.c.l.b16 %v1359
        %v2092 = vunpack.c.h.b16 %v1359
        %v2093 = vunpack.c.l.b16 %v1360
        %v2094 = vunpack.c.h.b16 %v1360
        %v2095 = vunpack.c.l.b16 %v1361
        %v2096 = vunpack.c.h.b16 %v1361
        %v2097 = vunpack.c.l.b16 %v1362
        %v2098 = vunpack.c.h.b16 %v1362
        %v2099 = vunpack.c.l.b16 %v1363
        %v2100 = vunpack.c.h.b16 %v1363
        %v2101 = vunpack.c.l.b16 %v1364
        %v2102 = vunpack.c.h.b16 %v1364
        %v2103 = vunpack.c.l.b16 %v1365
        %v2104 = vunpack.c.h.b16 %v1365
        %v2105 = vunpack.c.l.b16 %v1366
        %v2106 = vunpack.c.h.b16 %v1366
        %v2107 = vunpack.c.l.b16 %v1367
        %v2108 = vunpack.c.h.b16 %v1367
        %v2109 = vunpack.c.l.b16 %v1368
        %v2110 = vunpack.c.h.b16 %v1368
        %v2111 = vunpack.c.l.b16 %v1369
        %v2112 = vunpack.c.h.b16 %v1369
        %v2113 = vunpack.c.l.b16 %v1370
        %v2114 = vunpack.c.h.b16 %v1370
        %v2115 = vunpack.c.l.b16 %v1371
        %v2116 = vunpack.c.h.b16 %v1371
        %v2117 = vunpack.c.l.b16 %v1372
        %v2118 = vunpack.c.h.b16 %v1372
        %v2119 = vunpack.c.l.b16 %v1373
        %v2120 = vunpack.c.h.b16 %v1373
        %v2121 = vunpack.c.l.b16 %v1374
        %v2122 = vunpack.c.h.b16 %v1374
        %v2123 = vunpack.c.l.b16 %v1375
        %v2124 = vunpack.c.h.b16 %v1375
        %v2125 = vunpack.c.l.b16 %v1376
        %v2126 = vunpack.c.h.b16 %v1376
        %v2127 = vunpack.c.l.b16 %v1377
        %v2128 = vunpack.c.h.b16 %v1377
        %v2129 = vunpack.c.l.b16 %v1378
        %v2130 = vunpack.c.h.b16 %v1378
        %v2131 = vunpack.c.l.b16 %v1379
        %v2132 = vunpack.c.h.b16 %v1379
        %v2133 = vunpack.c.l.b16 %v1380
        %v2134 = vunpack.c.h.b16 %v1380
        %v2135 = vunpack.c.l.b16 %v1381
        %v2136 = vunpack.c.h.b16 %v1381
        %v2137 = vunpack.c.l.b16 %v1382
        %v2138 = vunpack.c.h.b16 %v1382
        %v2139 = vunpack.c.l.b16 %v1383
        %v2140 = vunpack.c.h.b16 %v1383
        %v2141 = vunpack.c.l.b16 %v1384
        %v2142 = vunpack.c.h.b16 %v1384
        %v2143 = vunpack.c.l.b16 %v1385
        %v2144 = vunpack.c.h.b16 %v1385
        %v2145 = vunpack.c.l.b16 %v1386
        %v2146 = vunpack.c.h.b16 %v1386
        %v2147 = vunpack.c.l.b16 %v1387
        %v2148 = vunpack.c.h.b16 %v1387
        %v2149 = vunpack.c.l.b16 %v1388
        %v2150 = vunpack.c.h.b16 %v1388
        %v2151 = vunpack.c.l.b16 %v1389
        %v2152 = vunpack.c.h.b16 %v1389
        %v2153 = vunpack.c.l.b16 %v1390
        %v2154 = vunpack.c.h.b16 %v1390
        %v2155 = vunpack.c.l.b16 %v1391
        %v2156 = vunpack.c.h.b16 %v1391
        %v2157 = vunpack.c.l.b16 %v1392
        %v2158 = vunpack.c.h.b16 %v1392
        %v2159 = vunpack.c.l.b16 %v1393
        %v2160 = vunpack.c.h.b16 %v1393
        %v2161 = vunpack.c.l.b16 %v1394
        %v2162 = vunpack.c.h.b16 %v1394
        %v2163 = vunpack.c.l.b16 %v1395
        %v2164 = vunpack.c.h.b16 %v1395
        %v2165 = vunpack.c.l.b16 %v1396
        %v2166 = vunpack.c.h.b16 %v1396
        %v2167 = vunpack.c.l.b16 %v1397
        %v2168 = vunpack.c.h.b16 %v1397
        %v2169 = vunpack.c.l.b16 %v1398
        %v2170 = vunpack.c.h.b16 %v1398
        %v2171 = vunpack.c.l.b16 %v1399
        %v2172 = vunpack.c.h.b16 %v1399
        %v2173 = vunpack.c.l.b16 %v1400
        %v2174 = vunpack.c.h.b16 %v1400
        %v2175 = vunpack.c.l.b16 %v1401
        %v2176 = vunpack.c.h.b16 %v1401
        %v2177 = vunpack.c.l.b16 %v1402
        %v2178 = vunpack.c.h.b16 %v1402
        %v2179 = vunpack.c.l.b16 %v1403
        %v2180 = vunpack.c.h.b16 %v1403
        %v2181 = vunpack.c.l.b16 %v1404
        %v2182 = vunpack.c.h.b16 %v1404
        %v2183 = vunpack.c.l.b16 %v1405
        %v2184 = vunpack.c.h.b16 %v1405
        %v2185 = vunpack.c.l.b16 %v1406
        %v2186 = vunpack.c.h.b16 %v1406
        %v2187 = vunpack.c.l.b16 %v1407
        %v2188 = vunpack.c.h.b16 %v1407
        %v2189 = vunpack.c.l.b16 %v1408
        %v2190 = vunpack.c.h.b16 %v1408
        %v2191 = vunpack.c.l.b16 %v1409
        %v2192 = vunpack.c.h.b16 %v1409
        %v2193 = vunpack.c.l.b16 %v1410
        %v2194 = vunpack.c.h.b16 %v1410
        %v2195 = vunpack.c.l.b16 %v1411
        %v2196 = vunpack.c.h.b16 %v1411
        %v2197 = vunpack.c.l.b16 %v1412
        %v2198 = vunpack.c.h.b16 %v1412
        %v2199 = vunpack.c.l.b16 %v1413
        %v2200 = vunpack.c.h.b16 %v1413
        %v2201 = vunpack.c.l.b16 %v1414
        %v2202 = vunpack.c.h.b16 %v1414
        %v2203 = vunpack.c.l.b16 %v1415
        %v2204 = vunpack.c.h.b16 %v1415
        %v2205 = vunpack.c.l.b16 %v1416
        %v2206 = vunpack.c.h.b16 %v1416
        %v2207 = vunpack.c.l.b16 %v1417
        %v2208 = vunpack.c.h.b16 %v1417
        %v2209 = vunpack.c.l.b16 %v1418
        %v2210 = vunpack.c.h.b16 %v1418
        %v2211 = vunpack.c.l.b16 %v1419
        %v2212 = vunpack.c.h.b16 %v1419
        %v2213 = vunpack.c.l.b16 %v1420
        %v2214 = vunpack.c.h.b16 %v1420
        %v2215 = vunpack.c.l.b16 %v1421
        %v2216 = vunpack.c.h.b16 %v1421
        %v2217 = vunpack.c.l.b16 %v1422
        %v2218 = vunpack.c.h.b16 %v1422
        %v2219 = vpack.c.b16 %v1711, %v1707
        %v2220 = vpack.c.b16 %v1712, %v1708
        %v2221 = vpack.c.b16 %v1713, %v1709
        %v2222 = vpack.c.b16 %v1714, %v1710
        %v2223 = vpack.c.b16 %v1719, %v1715
        %v2224 = vpack.c.b16 %v1720, %v1716
        %v2225 = vpack.c.b16 %v1721, %v1717
        %v2226 = vpack.c.b16 %v1722, %v1718
        %v2227 = vpack.c.b16 %v1727, %v1723
        %v2228 = vpack.c.b16 %v1728, %v1724
        %v2229 = vpack.c.b16 %v1729, %v1725
        %v2230 = vpack.c.b16 %v1730, %v1726
        %v2231 = vpack.c.b16 %v1735, %v1731
        %v2232 = vpack.c.b16 %v1736, %v1732
        %v2233 = vpack.c.b16 %v1737, %v1733
        %v2234 = vpack.c.b16 %v1738, %v1734
        %v2235 = vpack.c.b16 %v1743, %v1739
        %v2236 = vpack.c.b16 %v1744, %v1740
        %v2237 = vpack.c.b16 %v1745, %v1741
        %v2238 = vpack.c.b16 %v1746, %v1742
        %v2239 = vpack.c.b16 %v1751, %v1747
        %v2240 = vpack.c.b16 %v1752, %v1748
        %v2241 = vpack.c.b16 %v1753, %v1749
        %v2242 = vpack.c.b16 %v1754, %v1750
        %v2243 = vpack.c.b16 %v1759, %v1755
        %v2244 = vpack.c.b16 %v1760, %v1756
        %v2245 = vpack.c.b16 %v1761, %v1757
        %v2246 = vpack.c.b16 %v1762, %v1758
        %v2247 = vpack.c.b16 %v1767, %v1763
        %v2248 = vpack.c.b16 %v1768, %v1764
        %v2249 = vpack.c.b16 %v1769, %v1765
        %v2250 = vpack.c.b16 %v1770, %v1766
        %v2251 = vpack.c.b16 %v1775, %v1771
        %v2252 = vpack.c.b16 %v1776, %v1772
        %v2253 = vpack.c.b16 %v1777, %v1773
        %v2254 = vpack.c.b16 %v1778, %v1774
        %v2255 = vpack.c.b16 %v1783, %v1779
        %v2256 = vpack.c.b16 %v1784, %v1780
        %v2257 = vpack.c.b16 %v1785, %v1781
        %v2258 = vpack.c.b16 %v1786, %v1782
        %v2259 = vpack.c.b16 %v1791, %v1787
        %v2260 = vpack.c.b16 %v1792, %v1788
        %v2261 = vpack.c.b16 %v1793, %v1789
        %v2262 = vpack.c.b16 %v1794, %v1790
        %v2263 = vpack.c.b16 %v1799, %v1795
        %v2264 = vpack.c.b16 %v1800, %v1796
        %v2265 = vpack.c.b16 %v1801, %v1797
        %v2266 = vpack.c.b16 %v1802, %v1798
        %v2267 = vpack.c.b16 %v1807, %v1803
        %v2268 = vpack.c.b16 %v1808, %v1804
        %v2269 = vpack.c.b16 %v1809, %v1805
        %v2270 = vpack.c.b16 %v1810, %v1806
        %v2271 = vpack.c.b16 %v1815, %v1811
        %v2272 = vpack.c.b16 %v1816, %v1812
        %v2273 = vpack.c.b16 %v1817, %v1813
        %v2274 = vpack.c.b16 %v1818, %v1814
        %v2275 = vpack.c.b16 %v1823, %v1819
        %v2276 = vpack.c.b16 %v1824, %v1820
        %v2277 = vpack.c.b16 %v1825, %v1821
        %v2278 = vpack.c.b16 %v1826, %v1822
        %v2279 = vpack.c.b16 %v1831, %v1827
        %v2280 = vpack.c.b16 %v1832, %v1828
        %v2281 = vpack.c.b16 %v1833, %v1829
        %v2282 = vpack.c.b16 %v1834, %v1830
        %v2283 = vpack.c.b16 %v1839, %v1835
        %v2284 = vpack.c.b16 %v1840, %v1836
        %v2285 = vpack.c.b16 %v1841, %v1837
        %v2286 = vpack.c.b16 %v1842, %v1838
        %v2287 = vpack.c.b16 %v1847, %v1843
        %v2288 = vpack.c.b16 %v1848, %v1844
        %v2289 = vpack.c.b16 %v1849, %v1845
        %v2290 = vpack.c.b16 %v1850, %v1846
        %v2291 = vpack.c.b16 %v1855, %v1851
        %v2292 = vpack.c.b16 %v1856, %v1852
        %v2293 = vpack.c.b16 %v1857, %v1853
        %v2294 = vpack.c.b16 %v1858, %v1854
        %v2295 = vpack.c.b16 %v1863, %v1859
        %v2296 = vpack.c.b16 %v1864, %v1860
        %v2297 = vpack.c.b16 %v1865, %v1861
        %v2298 = vpack.c.b16 %v1866, %v1862
        %v2299 = vpack.c.b16 %v1871, %v1867
        %v2300 = vpack.c.b16 %v1872, %v1868
        %v2301 = vpack.c.b16 %v1873, %v1869
        %v2302 = vpack.c.b16 %v1874, %v1870
        %v2303 = vpack.c.b16 %v1879, %v1875
        %v2304 = vpack.c.b16 %v1880, %v1876
        %v2305 = vpack.c.b16 %v1881, %v1877
        %v2306 = vpack.c.b16 %v1882, %v1878
        %v2307 = vpack.c.b16 %v1887, %v1883
        %v2308 = vpack.c.b16 %v1888, %v1884
        %v2309 = vpack.c.b16 %v1889, %v1885
        %v2310 = vpack.c.b16 %v1890, %v1886
        %v2311 = vpack.c.b16 %v1895, %v1891
        %v2312 = vpack.c.b16 %v1896, %v1892
        %v2313 = vpack.c.b16 %v1897, %v1893
        %v2314 = vpack.c.b16 %v1898, %v1894
        %v2315 = vpack.c.b16 %v1903, %v1899
        %v2316 = vpack.c.b16 %v1904, %v1900
        %v2317 = vpack.c.b16 %v1905, %v1901
        %v2318 = vpack.c.b16 %v1906, %v1902
        %v2319 = vpack.c.b16 %v1911, %v1907
        %v2320 = vpack.c.b16 %v1912, %v1908
        %v2321 = vpack.c.b16 %v1913, %v1909
        %v2322 = vpack.c.b16 %v1914, %v1910
        %v2323 = vpack.c.b16 %v1919, %v1915
        %v2324 = vpack.c.b16 %v1920, %v1916
        %v2325 = vpack.c.b16 %v1921, %v1917
        %v2326 = vpack.c.b16 %v1922, %v1918
        %v2327 = vpack.c.b16 %v1927, %v1923
        %v2328 = vpack.c.b16 %v1928, %v1924
        %v2329 = vpack.c.b16 %v1929, %v1925
        %v2330 = vpack.c.b16 %v1930, %v1926
        %v2331 = vpack.c.b16 %v1935, %v1931
        %v2332 = vpack.c.b16 %v1936, %v1932
        %v2333 = vpack.c.b16 %v1937, %v1933
        %v2334 = vpack.c.b16 %v1938, %v1934
        %v2335 = vpack.c.b16 %v1943, %v1939
        %v2336 = vpack.c.b16 %v1944, %v1940
        %v2337 = vpack.c.b16 %v1945, %v1941
        %v2338 = vpack.c.b16 %v1946, %v1942
        %v2339 = vpack.c.b16 %v1951, %v1947
        %v2340 = vpack.c.b16 %v1952, %v1948
        %v2341 = vpack.c.b16 %v1953, %v1949
        %v2342 = vpack.c.b16 %v1954, %v1950
        %v2343 = vpack.c.b16 %v1959, %v1955
        %v2344 = vpack.c.b16 %v1960, %v1956
        %v2345 = vpack.c.b16 %v1961, %v1957
        %v2346 = vpack.c.b16 %v1962, %v1958
        %v2347 = vpack.c.b16 %v1967, %v1963
        %v2348 = vpack.c.b16 %v1968, %v1964
        %v2349 = vpack.c.b16 %v1969, %v1965
        %v2350 = vpack.c.b16 %v1970, %v1966
        %v2351 = vpack.c.b16 %v1975, %v1971
        %v2352 = vpack.c.b16 %v1976, %v1972
        %v2353 = vpack.c.b16 %v1977, %v1973
        %v2354 = vpack.c.b16 %v1978, %v1974
        %v2355 = vpack.c.b16 %v1983, %v1979
        %v2356 = vpack.c.b16 %v1984, %v1980
        %v2357 = vpack.c.b16 %v1985, %v1981
        %v2358 = vpack.c.b16 %v1986, %v1982
        %v2359 = vpack.c.b16 %v1991, %v1987
        %v2360 = vpack.c.b16 %v1992, %v1988
        %v2361 = vpack.c.b16 %v1993, %v1989
        %v2362 = vpack.c.b16 %v1994, %v1990
        %v2363 = vpack.c.b16 %v1999, %v1995
        %v2364 = vpack.c.b16 %v2000, %v1996
        %v2365 = vpack.c.b16 %v2001, %v1997
        %v2366 = vpack.c.b16 %v2002, %v1998
        %v2367 = vpack.c.b16 %v2007, %v2003
        %v2368 = vpack.c.b16 %v2008, %v2004
        %v2369 = vpack.c.b16 %v2009, %v2005
        %v2370 = vpack.c.b16 %v2010, %v2006
        %v2371 = vpack.c.b16 %v2015, %v2011
        %v2372 = vpack.c.b16 %v2016, %v2012
        %v2373 = vpack.c.b16 %v2017, %v2013
        %v2374 = vpack.c.b16 %v2018, %v2014
        %v2375 = vpack.c.b16 %v2023, %v2019
        %v2376 = vpack.c.b16 %v2024, %v2020
        %v2377 = vpack.c.b16 %v2025, %v2021
        %v2378 = vpack.c.b16 %v2026, %v2022
        %v2379 = vpack.c.b16 %v2031, %v2027
        %v2380 = vpack.c.b16 %v2032, %v2028
        %v2381 = vpack.c.b16 %v2033, %v2029
        %v2382 = vpack.c.b16 %v2034, %v2030
        %v2383 = vpack.c.b16 %v2039, %v2035
        %v2384 = vpack.c.b16 %v2040, %v2036
        %v2385 = vpack.c.b16 %v2041, %v2037
        %v2386 = vpack.c.b16 %v2042, %v2038
        %v2387 = vpack.c.b16 %v2047, %v2043
        %v2388 = vpack.c.b16 %v2048, %v2044
        %v2389 = vpack.c.b16 %v2049, %v2045
        %v2390 = vpack.c.b16 %v2050, %v2046
        %v2391 = vpack.c.b16 %v2055, %v2051
        %v2392 = vpack.c.b16 %v2056, %v2052
        %v2393 = vpack.c.b16 %v2057, %v2053
        %v2394 = vpack.c.b16 %v2058, %v2054
        %v2395 = vpack.c.b16 %v2063, %v2059
        %v2396 = vpack.c.b16 %v2064, %v2060
        %v2397 = vpack.c.b16 %v2065, %v2061
        %v2398 = vpack.c.b16 %v2066, %v2062
        %v2399 = vpack.c.b16 %v2071, %v2067
        %v2400 = vpack.c.b16 %v2072, %v2068
        %v2401 = vpack.c.b16 %v2073, %v2069
        %v2402 = vpack.c.b16 %v2074, %v2070
        %v2403 = vpack.c.b16 %v2079, %v2075
        %v2404 = vpack.c.b16 %v2080, %v2076
        %v2405 = vpack.c.b16 %v2081, %v2077
        %v2406 = vpack.c.b16 %v2082, %v2078
        %v2407 = vpack.c.b16 %v2087, %v2083
        %v2408 = vpack.c.b16 %v2088, %v2084
        %v2409 = vpack.c.b16 %v2089, %v2085
        %v2410 = vpack.c.b16 %v2090, %v2086
        %v2411 = vpack.c.b16 %v2095, %v2091
        %v2412 = vpack.c.b16 %v2096, %v2092
        %v2413 = vpack.c.b16 %v2097, %v2093
        %v2414 = vpack.c.b16 %v2098, %v2094
        %v2415 = vpack.c.b16 %v2103, %v2099
        %v2416 = vpack.c.b16 %v2104, %v2100
        %v2417 = vpack.c.b16 %v2105, %v2101
        %v2418 = vpack.c.b16 %v2106, %v2102
        %v2419 = vpack.c.b16 %v2111, %v2107
        %v2420 = vpack.c.b16 %v2112, %v2108
        %v2421 = vpack.c.b16 %v2113, %v2109
        %v2422 = vpack.c.b16 %v2114, %v2110
        %v2423 = vpack.c.b16 %v2119, %v2115
        %v2424 = vpack.c.b16 %v2120, %v2116
        %v2425 = vpack.c.b16 %v2121, %v2117
        %v2426 = vpack.c.b16 %v2122, %v2118
        %v2427 = vpack.c.b16 %v2127, %v2123
        %v2428 = vpack.c.b16 %v2128, %v2124
        %v2429 = vpack.c.b16 %v2129, %v2125
        %v2430 = vpack.c.b16 %v2130, %v2126
        %v2431 = vpack.c.b16 %v2135, %v2131
        %v2432 = vpack.c.b16 %v2136, %v2132
        %v2433 = vpack.c.b16 %v2137, %v2133
        %v2434 = vpack.c.b16 %v2138, %v2134
        %v2435 = vpack.c.b16 %v2143, %v2139
        %v2436 = vpack.c.b16 %v2144, %v2140
        %v2437 = vpack.c.b16 %v2145, %v2141
        %v2438 = vpack.c.b16 %v2146, %v2142
        %v2439 = vpack.c.b16 %v2151, %v2147
        %v2440 = vpack.c.b16 %v2152, %v2148
        %v2441 = vpack.c.b16 %v2153, %v2149
        %v2442 = vpack.c.b16 %v2154, %v2150
        %v2443 = vpack.c.b16 %v2159, %v2155
        %v2444 = vpack.c.b16 %v2160, %v2156
        %v2445 = vpack.c.b16 %v2161, %v2157
        %v2446 = vpack.c.b16 %v2162, %v2158
        %v2447 = vpack.c.b16 %v2167, %v2163
        %v2448 = vpack.c.b16 %v2168, %v2164
        %v2449 = vpack.c.b16 %v2169, %v2165
        %v2450 = vpack.c.b16 %v2170, %v2166
        %v2451 = vpack.c.b16 %v2175, %v2171
        %v2452 = vpack.c.b16 %v2176, %v2172
        %v2453 = vpack.c.b16 %v2177, %v2173
        %v2454 = vpack.c.b16 %v2178, %v2174
        %v2455 = vpack.c.b16 %v2183, %v2179
        %v2456 = vpack.c.b16 %v2184, %v2180
        %v2457 = vpack.c.b16 %v2185, %v2181
        %v2458 = vpack.c.b16 %v2186, %v2182
        %v2459 = vpack.c.b16 %v2191, %v2187
        %v2460 = vpack.c.b16 %v2192, %v2188
        %v2461 = vpack.c.b16 %v2193, %v2189
        %v2462 = vpack.c.b16 %v2194, %v2190
        %v2463 = vpack.c.b16 %v2199, %v2195
        %v2464 = vpack.c.b16 %v2200, %v2196
        %v2465 = vpack.c.b16 %v2201, %v2197
        %v2466 = vpack.c.b16 %v2202, %v2198
        %v2467 = vpack.c.b16 %v2207, %v2203
        %v2468 = vpack.c.b16 %v2208, %v2204
        %v2469 = vpack.c.b16 %v2209, %v2205
        %v2470 = vpack.c.b16 %v2210, %v2206
        %v2471 = vpack.c.b16 %v2215, %v2211
        %v2472 = vpack.c.b16 %v2216, %v2212
        %v2473 = vpack.c.b16 %v2217, %v2213
        %v2474 = vpack.c.b16 %v2218, %v2214
        %2731 = vmatprep.subr.bf16.mxu0 %v2220
        %2732 = vmatpush1.bf16.msra.mxu0 %v2219
        %2733 = vmatprep.subr.bf16.mxu0 %v2224
        %2734 = vmatpush1.bf16.msra.mxu0 %v2223
        %2735 = vmatprep.subr.bf16.mxu0 %v2228
        %2736 = vmatpush1.bf16.msra.mxu0 %v2227
        %2737 = vmatprep.subr.bf16.mxu0 %v2232
        %2738 = vmatpush1.bf16.msra.mxu0 %v2231
        %2739 = vmatprep.subr.bf16.mxu0 %v2236
        %2740 = vmatpush1.bf16.msra.mxu0 %v2235
        %2741 = vmatprep.subr.bf16.mxu0 %v2240
        %2742 = vmatpush1.bf16.msra.mxu0 %v2239
        %2743 = vmatprep.subr.bf16.mxu0 %v2244
        %2744 = vmatpush1.bf16.msra.mxu0 %v2243
        %2745 = vmatprep.subr.bf16.mxu0 %v2248
        %2746 = vmatpush1.bf16.msra.mxu0 %v2247
        %2747 = vmatprep.subr.bf16.mxu0 %v2252
        %2748 = vmatpush1.bf16.msra.mxu0 %v2251
        %2749 = vmatprep.subr.bf16.mxu0 %v2256
        %2750 = vmatpush1.bf16.msra.mxu0 %v2255
        %2751 = vmatprep.subr.bf16.mxu0 %v2260
        %2752 = vmatpush1.bf16.msra.mxu0 %v2259
        %2753 = vmatprep.subr.bf16.mxu0 %v2264
        %2754 = vmatpush1.bf16.msra.mxu0 %v2263
        %2755 = vmatprep.subr.bf16.mxu0 %v2268
        %2756 = vmatpush1.bf16.msra.mxu0 %v2267
        %2757 = vmatprep.subr.bf16.mxu0 %v2272
        %2758 = vmatpush1.bf16.msra.mxu0 %v2271
        %2759 = vmatprep.subr.bf16.mxu0 %v2276
        %2760 = vmatpush1.bf16.msra.mxu0 %v2275
        %2761 = vmatprep.subr.bf16.mxu0 %v2280
        %2762 = vmatpush1.bf16.msra.mxu0 %v2279
        %2763 = vmatprep.mubr.bf16.mxu0 %v1436
        %2764 = vmatmul.mubr.bf16.gmra.mrb[0].mxu0 %v1435
        %v2765 = vpop.f32.mrb[0].mxu0
        %v2766 = vadd.f32 0.0, %v2765
        %v2767 = vpop.f32.mrb[0].mxu0
        %v2768 = vadd.f32 0.0, %v2767
        %v2769 = vpop.f32.mrb[0].mxu0
        %v2770 = vpop.f32.mrb[0].mxu0
        %2771 = vdwg.mxu0
        %2772 = vmatprep.subr.bf16.mxu0 %v2284
        %2773 = vmatpush1.bf16.msra.mxu0 %v2283
        %2774 = vmatprep.subr.bf16.mxu0 %v2288
        %2775 = vmatpush1.bf16.msra.mxu0 %v2287
        %2776 = vmatprep.subr.bf16.mxu0 %v2292
        %2777 = vmatpush1.bf16.msra.mxu0 %v2291
        %2778 = vmatprep.subr.bf16.mxu0 %v2296
        %2779 = vmatpush1.bf16.msra.mxu0 %v2295
        %2780 = vmatprep.subr.bf16.mxu0 %v2300
        %2781 = vmatpush1.bf16.msra.mxu0 %v2299
        %2782 = vmatprep.subr.bf16.mxu0 %v2304
        %2783 = vmatpush1.bf16.msra.mxu0 %v2303
        %2784 = vmatprep.subr.bf16.mxu0 %v2308
        %2785 = vmatpush1.bf16.msra.mxu0 %v2307
        %2786 = vmatprep.subr.bf16.mxu0 %v2312
        %2787 = vmatpush1.bf16.msra.mxu0 %v2311
        %2788 = vmatprep.subr.bf16.mxu0 %v2316
        %2789 = vmatpush1.bf16.msra.mxu0 %v2315
        %2790 = vmatprep.subr.bf16.mxu0 %v2320
        %2791 = vmatpush1.bf16.msra.mxu0 %v2319
        %2792 = vmatprep.subr.bf16.mxu0 %v2324
        %2793 = vmatpush1.bf16.msra.mxu0 %v2323
        %2794 = vmatprep.subr.bf16.mxu0 %v2328
        %2795 = vmatpush1.bf16.msra.mxu0 %v2327
        %2796 = vmatprep.subr.bf16.mxu0 %v2332
        %2797 = vmatpush1.bf16.msra.mxu0 %v2331
        %2798 = vmatprep.subr.bf16.mxu0 %v2336
        %2799 = vmatpush1.bf16.msra.mxu0 %v2335
        %2800 = vmatprep.subr.bf16.mxu0 %v2340
        %2801 = vmatpush1.bf16.msra.mxu0 %v2339
        %2802 = vmatprep.subr.bf16.mxu0 %v2344
        %2803 = vmatpush1.bf16.msra.mxu0 %v2343
        %2804 = vmatprep.mubr.bf16.mxu0 %v1438
        %2805 = vmatmul.mubr.bf16.gmra.mrb[0].mxu0 %v1437
        %v2806 = vpop.f32.mrb[0].mxu0
        %v2807 = vadd.f32 %v2766, %v2806
        %v2808 = vpop.f32.mrb[0].mxu0
        %v2809 = vadd.f32 %v2768, %v2808
        %v2810 = vpop.f32.mrb[0].mxu0
        %v2811 = vpop.f32.mrb[0].mxu0
        %2812 = vdwg.mxu0
        %2813 = vmatprep.subr.bf16.mxu0 %v2348
        %2814 = vmatpush1.bf16.msra.mxu0 %v2347
        %2815 = vmatprep.subr.bf16.mxu0 %v2352
        %2816 = vmatpush1.bf16.msra.mxu0 %v2351
        %2817 = vmatprep.subr.bf16.mxu0 %v2356
        %2818 = vmatpush1.bf16.msra.mxu0 %v2355
        %2819 = vmatprep.subr.bf16.mxu0 %v2360
        %2820 = vmatpush1.bf16.msra.mxu0 %v2359
        %2821 = vmatprep.subr.bf16.mxu0 %v2364
        %2822 = vmatpush1.bf16.msra.mxu0 %v2363
        %2823 = vmatprep.subr.bf16.mxu0 %v2368
        %2824 = vmatpush1.bf16.msra.mxu0 %v2367
        %2825 = vmatprep.subr.bf16.mxu0 %v2372
        %2826 = vmatpush1.bf16.msra.mxu0 %v2371
        %2827 = vmatprep.subr.bf16.mxu0 %v2376
        %2828 = vmatpush1.bf16.msra.mxu0 %v2375
        %2829 = vmatprep.subr.bf16.mxu0 %v2380
        %2830 = vmatpush1.bf16.msra.mxu0 %v2379
        %2831 = vmatprep.subr.bf16.mxu0 %v2384
        %2832 = vmatpush1.bf16.msra.mxu0 %v2383
        %2833 = vmatprep.subr.bf16.mxu0 %v2388
        %2834 = vmatpush1.bf16.msra.mxu0 %v2387
        %2835 = vmatprep.subr.bf16.mxu0 %v2392
        %2836 = vmatpush1.bf16.msra.mxu0 %v2391
        %2837 = vmatprep.subr.bf16.mxu0 %v2396
        %2838 = vmatpush1.bf16.msra.mxu0 %v2395
        %2839 = vmatprep.subr.bf16.mxu0 %v2400
        %2840 = vmatpush1.bf16.msra.mxu0 %v2399
        %2841 = vmatprep.subr.bf16.mxu0 %v2404
        %2842 = vmatpush1.bf16.msra.mxu0 %v2403
        %2843 = vmatprep.subr.bf16.mxu0 %v2408
        %2844 = vmatpush1.bf16.msra.mxu0 %v2407
        %2845 = vmatprep.mubr.bf16.mxu0 %v1440
        %2846 = vmatmul.mubr.bf16.gmra.mrb[0].mxu0 %v1439
        %v2847 = vpop.f32.mrb[0].mxu0
        %v2848 = vadd.f32 %v2807, %v2847
        %v2849 = vpop.f32.mrb[0].mxu0
        %v2850 = vadd.f32 %v2809, %v2849
        %v2851 = vpop.f32.mrb[0].mxu0
        %v2852 = vpop.f32.mrb[0].mxu0
        %2853 = vdwg.mxu0
        %2854 = vmatprep.subr.bf16.mxu0 %v2412
        %2855 = vmatpush1.bf16.msra.mxu0 %v2411
        %2856 = vmatprep.subr.bf16.mxu0 %v2416
        %2857 = vmatpush1.bf16.msra.mxu0 %v2415
        %2858 = vmatprep.subr.bf16.mxu0 %v2420
        %2859 = vmatpush1.bf16.msra.mxu0 %v2419
        %2860 = vmatprep.subr.bf16.mxu0 %v2424
        %2861 = vmatpush1.bf16.msra.mxu0 %v2423
        %2862 = vmatprep.subr.bf16.mxu0 %v2428
        %2863 = vmatpush1.bf16.msra.mxu0 %v2427
        %2864 = vmatprep.subr.bf16.mxu0 %v2432
        %2865 = vmatpush1.bf16.msra.mxu0 %v2431
        %2866 = vmatprep.subr.bf16.mxu0 %v2436
        %2867 = vmatpush1.bf16.msra.mxu0 %v2435
        %2868 = vmatprep.subr.bf16.mxu0 %v2440
        %2869 = vmatpush1.bf16.msra.mxu0 %v2439
        %2870 = vmatprep.subr.bf16.mxu0 %v2444
        %2871 = vmatpush1.bf16.msra.mxu0 %v2443
        %2872 = vmatprep.subr.bf16.mxu0 %v2448
        %2873 = vmatpush1.bf16.msra.mxu0 %v2447
        %2874 = vmatprep.subr.bf16.mxu0 %v2452
        %2875 = vmatpush1.bf16.msra.mxu0 %v2451
        %2876 = vmatprep.subr.bf16.mxu0 %v2456
        %2877 = vmatpush1.bf16.msra.mxu0 %v2455
        %2878 = vmatprep.subr.bf16.mxu0 %v2460
        %2879 = vmatpush1.bf16.msra.mxu0 %v2459
        %2880 = vmatprep.subr.bf16.mxu0 %v2464
        %2881 = vmatpush1.bf16.msra.mxu0 %v2463
        %2882 = vmatprep.subr.bf16.mxu0 %v2468
        %2883 = vmatpush1.bf16.msra.mxu0 %v2467
        %2884 = vmatprep.subr.bf16.mxu0 %v2472
        %2885 = vmatpush1.bf16.msra.mxu0 %v2471
        %2886 = vmatprep.mubr.bf16.mxu0 %v1442
        %2887 = vmatmul.mubr.bf16.gmra.mrb[0].mxu0 %v1441
        %v2888 = vpop.f32.mrb[0].mxu0
        %v2889 = vadd.f32 %v2848, %v2888
        %v2890 = vpop.f32.mrb[0].mxu0
        %v2891 = vadd.f32 %v2850, %v2890
        %v2892 = vpop.f32.mrb[0].mxu0
        %v2893 = vpop.f32.mrb[0].mxu0
        %2894 = vdwg.mxu0
        %2895 = vmatprep.subr.bf16.mxu0 %v2222
        %2896 = vmatpush1.bf16.msra.mxu0 %v2221
        %2897 = vmatprep.subr.bf16.mxu0 %v2226
        %2898 = vmatpush1.bf16.msra.mxu0 %v2225
        %2899 = vmatprep.subr.bf16.mxu0 %v2230
        %2900 = vmatpush1.bf16.msra.mxu0 %v2229
        %2901 = vmatprep.subr.bf16.mxu0 %v2234
        %2902 = vmatpush1.bf16.msra.mxu0 %v2233
        %2903 = vmatprep.subr.bf16.mxu0 %v2238
        %2904 = vmatpush1.bf16.msra.mxu0 %v2237
        %2905 = vmatprep.subr.bf16.mxu0 %v2242
        %2906 = vmatpush1.bf16.msra.mxu0 %v2241
        %2907 = vmatprep.subr.bf16.mxu0 %v2246
        %2908 = vmatpush1.bf16.msra.mxu0 %v2245
        %2909 = vmatprep.subr.bf16.mxu0 %v2250
        %2910 = vmatpush1.bf16.msra.mxu0 %v2249
        %2911 = vmatprep.subr.bf16.mxu0 %v2254
        %2912 = vmatpush1.bf16.msra.mxu0 %v2253
        %2913 = vmatprep.subr.bf16.mxu0 %v2258
        %2914 = vmatpush1.bf16.msra.mxu0 %v2257
        %2915 = vmatprep.subr.bf16.mxu0 %v2262
        %2916 = vmatpush1.bf16.msra.mxu0 %v2261
        %2917 = vmatprep.subr.bf16.mxu0 %v2266
        %2918 = vmatpush1.bf16.msra.mxu0 %v2265
        %2919 = vmatprep.subr.bf16.mxu0 %v2270
        %2920 = vmatpush1.bf16.msra.mxu0 %v2269
        %2921 = vmatprep.subr.bf16.mxu0 %v2274
        %2922 = vmatpush1.bf16.msra.mxu0 %v2273
        %2923 = vmatprep.subr.bf16.mxu0 %v2278
        %2924 = vmatpush1.bf16.msra.mxu0 %v2277
        %2925 = vmatprep.subr.bf16.mxu0 %v2282
        %2926 = vmatpush1.bf16.msra.mxu0 %v2281
        %2927 = vmatprep.mubr.bf16.mxu0 %v1436
        %2928 = vmatmul.mubr.bf16.gmra.mrb[0].mxu0 %v1435
        %v2929 = vpop.f32.mrb[0].mxu0
        %v2930 = vadd.f32 0.0, %v2929
        %v2931 = vpop.f32.mrb[0].mxu0
        %v2932 = vadd.f32 0.0, %v2931
        %v2933 = vpop.f32.mrb[0].mxu0
        %v2934 = vpop.f32.mrb[0].mxu0
        %2935 = vdwg.mxu0
        %2936 = vmatprep.subr.bf16.mxu0 %v2286
        %2937 = vmatpush1.bf16.msra.mxu0 %v2285
        %2938 = vmatprep.subr.bf16.mxu0 %v2290
        %2939 = vmatpush1.bf16.msra.mxu0 %v2289
        %2940 = vmatprep.subr.bf16.mxu0 %v2294
        %2941 = vmatpush1.bf16.msra.mxu0 %v2293
        %2942 = vmatprep.subr.bf16.mxu0 %v2298
        %2943 = vmatpush1.bf16.msra.mxu0 %v2297
        %2944 = vmatprep.subr.bf16.mxu0 %v2302
        %2945 = vmatpush1.bf16.msra.mxu0 %v2301
        %2946 = vmatprep.subr.bf16.mxu0 %v2306
        %2947 = vmatpush1.bf16.msra.mxu0 %v2305
        %2948 = vmatprep.subr.bf16.mxu0 %v2310
        %2949 = vmatpush1.bf16.msra.mxu0 %v2309
        %2950 = vmatprep.subr.bf16.mxu0 %v2314
        %2951 = vmatpush1.bf16.msra.mxu0 %v2313
        %2952 = vmatprep.subr.bf16.mxu0 %v2318
        %2953 = vmatpush1.bf16.msra.mxu0 %v2317
        %2954 = vmatprep.subr.bf16.mxu0 %v2322
        %2955 = vmatpush1.bf16.msra.mxu0 %v2321
        %2956 = vmatprep.subr.bf16.mxu0 %v2326
        %2957 = vmatpush1.bf16.msra.mxu0 %v2325
        %2958 = vmatprep.subr.bf16.mxu0 %v2330
        %2959 = vmatpush1.bf16.msra.mxu0 %v2329
        %2960 = vmatprep.subr.bf16.mxu0 %v2334
        %2961 = vmatpush1.bf16.msra.mxu0 %v2333
        %2962 = vmatprep.subr.bf16.mxu0 %v2338
        %2963 = vmatpush1.bf16.msra.mxu0 %v2337
        %2964 = vmatprep.subr.bf16.mxu0 %v2342
        %2965 = vmatpush1.bf16.msra.mxu0 %v2341
        %2966 = vmatprep.subr.bf16.mxu0 %v2346
        %2967 = vmatpush1.bf16.msra.mxu0 %v2345
        %2968 = vmatprep.mubr.bf16.mxu0 %v1438
        %2969 = vmatmul.mubr.bf16.gmra.mrb[0].mxu0 %v1437
        %v2970 = vpop.f32.mrb[0].mxu0
        %v2971 = vadd.f32 %v2930, %v2970
        %v2972 = vpop.f32.mrb[0].mxu0
        %v2973 = vadd.f32 %v2932, %v2972
        %v2974 = vpop.f32.mrb[0].mxu0
        %v2975 = vpop.f32.mrb[0].mxu0
        %2976 = vdwg.mxu0
        %2977 = vmatprep.subr.bf16.mxu0 %v2350
        %2978 = vmatpush1.bf16.msra.mxu0 %v2349
        %2979 = vmatprep.subr.bf16.mxu0 %v2354
        %2980 = vmatpush1.bf16.msra.mxu0 %v2353
        %2981 = vmatprep.subr.bf16.mxu0 %v2358
        %2982 = vmatpush1.bf16.msra.mxu0 %v2357
        %2983 = vmatprep.subr.bf16.mxu0 %v2362
        %2984 = vmatpush1.bf16.msra.mxu0 %v2361
        %2985 = vmatprep.subr.bf16.mxu0 %v2366
        %2986 = vmatpush1.bf16.msra.mxu0 %v2365
        %2987 = vmatprep.subr.bf16.mxu0 %v2370
        %2988 = vmatpush1.bf16.msra.mxu0 %v2369
        %2989 = vmatprep.subr.bf16.mxu0 %v2374
        %2990 = vmatpush1.bf16.msra.mxu0 %v2373
        %2991 = vmatprep.subr.bf16.mxu0 %v2378
        %2992 = vmatpush1.bf16.msra.mxu0 %v2377
        %2993 = vmatprep.subr.bf16.mxu0 %v2382
        %2994 = vmatpush1.bf16.msra.mxu0 %v2381
        %2995 = vmatprep.subr.bf16.mxu0 %v2386
        %2996 = vmatpush1.bf16.msra.mxu0 %v2385
        %2997 = vmatprep.subr.bf16.mxu0 %v2390
        %2998 = vmatpush1.bf16.msra.mxu0 %v2389
        %2999 = vmatprep.subr.bf16.mxu0 %v2394
        %3000 = vmatpush1.bf16.msra.mxu0 %v2393
        %3001 = vmatprep.subr.bf16.mxu0 %v2398
        %3002 = vmatpush1.bf16.msra.mxu0 %v2397
        %3003 = vmatprep.subr.bf16.mxu0 %v2402
        %3004 = vmatpush1.bf16.msra.mxu0 %v2401
        %3005 = vmatprep.subr.bf16.mxu0 %v2406
        %3006 = vmatpush1.bf16.msra.mxu0 %v2405
        %3007 = vmatprep.subr.bf16.mxu0 %v2410
        %3008 = vmatpush1.bf16.msra.mxu0 %v2409
        %3009 = vmatprep.mubr.bf16.mxu0 %v1440
        %3010 = vmatmul.mubr.bf16.gmra.mrb[0].mxu0 %v1439
        %v3011 = vpop.f32.mrb[0].mxu0
        %v3012 = vadd.f32 %v2971, %v3011
        %v3013 = vpop.f32.mrb[0].mxu0
        %v3014 = vadd.f32 %v2973, %v3013
        %v3015 = vpop.f32.mrb[0].mxu0
        %v3016 = vpop.f32.mrb[0].mxu0
        %3017 = vdwg.mxu0
        %3018 = vmatprep.subr.bf16.mxu0 %v2414
        %3019 = vmatpush1.bf16.msra.mxu0 %v2413
        %3020 = vmatprep.subr.bf16.mxu0 %v2418
        %3021 = vmatpush1.bf16.msra.mxu0 %v2417
        %3022 = vmatprep.subr.bf16.mxu0 %v2422
        %3023 = vmatpush1.bf16.msra.mxu0 %v2421
        %3024 = vmatprep.subr.bf16.mxu0 %v2426
        %3025 = vmatpush1.bf16.msra.mxu0 %v2425
        %3026 = vmatprep.subr.bf16.mxu0 %v2430
        %3027 = vmatpush1.bf16.msra.mxu0 %v2429
        %3028 = vmatprep.subr.bf16.mxu0 %v2434
        %3029 = vmatpush1.bf16.msra.mxu0 %v2433
        %3030 = vmatprep.subr.bf16.mxu0 %v2438
        %3031 = vmatpush1.bf16.msra.mxu0 %v2437
        %3032 = vmatprep.subr.bf16.mxu0 %v2442
        %3033 = vmatpush1.bf16.msra.mxu0 %v2441
        %3034 = vmatprep.subr.bf16.mxu0 %v2446
        %3035 = vmatpush1.bf16.msra.mxu0 %v2445
        %3036 = vmatprep.subr.bf16.mxu0 %v2450
        %3037 = vmatpush1.bf16.msra.mxu0 %v2449
        %3038 = vmatprep.subr.bf16.mxu0 %v2454
        %3039 = vmatpush1.bf16.msra.mxu0 %v2453
        %3040 = vmatprep.subr.bf16.mxu0 %v2458
        %3041 = vmatpush1.bf16.msra.mxu0 %v2457
        %3042 = vmatprep.subr.bf16.mxu0 %v2462
        %3043 = vmatpush1.bf16.msra.mxu0 %v2461
        %3044 = vmatprep.subr.bf16.mxu0 %v2466
        %3045 = vmatpush1.bf16.msra.mxu0 %v2465
        %3046 = vmatprep.subr.bf16.mxu0 %v2470
        %3047 = vmatpush1.bf16.msra.mxu0 %v2469
        %3048 = vmatprep.subr.bf16.mxu0 %v2474
        %3049 = vmatpush1.bf16.msra.mxu0 %v2473
        %3050 = vmatprep.mubr.bf16.mxu0 %v1442
        %3051 = vmatmul.mubr.bf16.gmra.mrb[0].mxu0 %v1441
        %v3052 = vpop.f32.mrb[0].mxu0
        %v3053 = vadd.f32 %v3012, %v3052
        %v3054 = vpop.f32.mrb[0].mxu0
        %v3055 = vadd.f32 %v3014, %v3054
        %v3056 = vpop.f32.mrb[0].mxu0
        %v3057 = vpop.f32.mrb[0].mxu0
        %3058 = vdwg.mxu0
        %v3059 = vadd.f32 %v1163, %v2889
        %v3060 = vadd.f32 %v1164, %v2891
        %v3061 = vadd.f32 %v1165, %v3053
        %v3062 = vadd.f32 %v1166, %v3055
        %3063 = vst [vmem:[#allocation3] sm:$0xff] %v3059
        %3064 = vst [vmem:[#allocation3 + $0x8] sm:$0xff] %v3060
        %3065 = vst [vmem:[#allocation3 + $0x10] sm:$0xff] %v3061
        %3066 = vst [vmem:[#allocation3 + $0x18] sm:$0xff] %v3062
        %p3067 = scmp.eq.s32.totalorder %s28, 1
        // Predicated region
        $region97: #{tpu_custom_call.1} parent=55 // pred_check
          %p3068 = pneg %p3067
        $region98: #{tpu_custom_call.1} parent=55 // pred_check_branch
          %3070 = sbr.rel (%p3068) target = $region100
        $region99: #{tpu_custom_call.1} parent=55 // pred_region
          %v3071 = vld [vmem:[#allocation3] sm:$0xff]
          %v3072 = vld [vmem:[#allocation3 + $0x8] sm:$0xff]
          %v3073 = vld [vmem:[#allocation3 + $0x10] sm:$0xff]
          %v3074 = vld [vmem:[#allocation3 + $0x18] sm:$0xff]
          %v3075 = vld [vmem:[#allocation12] sm:$0xf]
          %v3077 = vlaneseq
          %v3078 = vshrl.u32 %v3077, 7
          %v3079 = vsub.s32 0, %v3078
          %v3080 = vrot.slane %v3075, %v3079
          %v3081 = vlaneseq
          %v3082 = vshrl.u32 %v3081, 7
          %v3083 = vsub.s32 1, %v3082
          %v3084 = vrot.slane %v3075, %v3083
          %v3085 = vlaneseq
          %v3086 = vshrl.u32 %v3085, 7
          %v3087 = vsub.s32 2, %v3086
          %v3088 = vrot.slane %v3075, %v3087
          %v3089 = vlaneseq
          %v3090 = vshrl.u32 %v3089, 7
          %v3091 = vsub.s32 3, %v3090
          %v3092 = vrot.slane %v3075, %v3091
          %v3097 = vadd.f32 %v3071, %v3080
          %v3098 = vadd.f32 %v3072, %v3084
          %v3099 = vadd.f32 %v3073, %v3088
          %v3100 = vadd.f32 %v3074, %v3092
          %v3101 = vmax.f32 %v3097, 0.0
          %v3102 = vmax.f32 %v3098, 0.0
          %v3103 = vmax.f32 %v3099, 0.0
          %v3104 = vmax.f32 %v3100, 0.0
          %v3105 = vpack.c.bf16 %v3101, %v3101
          %v3106 = vpack.c.bf16 %v3102, %v3102
          %v3107 = vpack.c.bf16 %v3103, %v3103
          %v3108 = vpack.c.bf16 %v3104, %v3104
          %v3109 = vld [vmem:[#allocation13] sm:$0xff]
          %v3110 = vld [vmem:[#allocation13 + $0x8] sm:$0xff]
          %v3111 = vld [vmem:[#allocation13 + $0x10] sm:$0xff]
          %v3112 = vld [vmem:[#allocation13 + $0x18] sm:$0xff]
          %v3113 = vld [vmem:[#allocation13 + $0x20] sm:$0xff]
          %v3114 = vld [vmem:[#allocation13 + $0x28] sm:$0xff]
          %v3115 = vld [vmem:[#allocation13 + $0x30] sm:$0xff]
          %v3116 = vld [vmem:[#allocation13 + $0x38] sm:$0xff]
          %v3117 = vld [vmem:[#allocation13 + $0x40] sm:$0xff]
          %v3118 = vld [vmem:[#allocation13 + $0x48] sm:$0xff]
          %v3119 = vld [vmem:[#allocation13 + $0x50] sm:$0xff]
          %v3120 = vld [vmem:[#allocation13 + $0x58] sm:$0xff]
          %v3121 = vld [vmem:[#allocation13 + $0x60] sm:$0xff]
          %v3122 = vld [vmem:[#allocation13 + $0x68] sm:$0xff]
          %v3123 = vld [vmem:[#allocation13 + $0x70] sm:$0xff]
          %v3124 = vld [vmem:[#allocation13 + $0x78] sm:$0xff]
          %v3125 = vld [vmem:[#allocation13 + $0x80] sm:$0xff]
          %v3126 = vld [vmem:[#allocation13 + $0x88] sm:$0xff]
          %v3127 = vld [vmem:[#allocation13 + $0x90] sm:$0xff]
          %v3128 = vld [vmem:[#allocation13 + $0x98] sm:$0xff]
          %v3129 = vld [vmem:[#allocation13 + $0xa0] sm:$0xff]
          %v3130 = vld [vmem:[#allocation13 + $0xa8] sm:$0xff]
          %v3131 = vld [vmem:[#allocation13 + $0xb0] sm:$0xff]
          %v3132 = vld [vmem:[#allocation13 + $0xb8] sm:$0xff]
          %v3133 = vld [vmem:[#allocation13 + $0xc0] sm:$0xff]
          %v3134 = vld [vmem:[#allocation13 + $0xc8] sm:$0xff]
          %v3135 = vld [vmem:[#allocation13 + $0xd0] sm:$0xff]
          %v3136 = vld [vmem:[#allocation13 + $0xd8] sm:$0xff]
          %v3137 = vld [vmem:[#allocation13 + $0xe0] sm:$0xff]
          %v3138 = vld [vmem:[#allocation13 + $0xe8] sm:$0xff]
          %v3139 = vld [vmem:[#allocation13 + $0xf0] sm:$0xff]
          %v3140 = vld [vmem:[#allocation13 + $0xf8] sm:$0xff]
          %v3141 = vld [vmem:[#allocation13 + $0x100] sm:$0xff]
          %v3142 = vld [vmem:[#allocation13 + $0x108] sm:$0xff]
          %v3143 = vld [vmem:[#allocation13 + $0x110] sm:$0xff]
          %v3144 = vld [vmem:[#allocation13 + $0x118] sm:$0xff]
          %v3145 = vld [vmem:[#allocation13 + $0x120] sm:$0xff]
          %v3146 = vld [vmem:[#allocation13 + $0x128] sm:$0xff]
          %v3147 = vld [vmem:[#allocation13 + $0x130] sm:$0xff]
          %v3148 = vld [vmem:[#allocation13 + $0x138] sm:$0xff]
          %v3149 = vld [vmem:[#allocation13 + $0x140] sm:$0xff]
          %v3150 = vld [vmem:[#allocation13 + $0x148] sm:$0xff]
          %v3151 = vld [vmem:[#allocation13 + $0x150] sm:$0xff]
          %v3152 = vld [vmem:[#allocation13 + $0x158] sm:$0xff]
          %v3153 = vld [vmem:[#allocation13 + $0x160] sm:$0xff]
          %v3154 = vld [vmem:[#allocation13 + $0x168] sm:$0xff]
          %v3155 = vld [vmem:[#allocation13 + $0x170] sm:$0xff]
          %v3156 = vld [vmem:[#allocation13 + $0x178] sm:$0xff]
          %v3157 = vld [vmem:[#allocation13 + $0x180] sm:$0xff]
          %v3158 = vld [vmem:[#allocation13 + $0x188] sm:$0xff]
          %v3159 = vld [vmem:[#allocation13 + $0x190] sm:$0xff]
          %v3160 = vld [vmem:[#allocation13 + $0x198] sm:$0xff]
          %v3161 = vld [vmem:[#allocation13 + $0x1a0] sm:$0xff]
          %v3162 = vld [vmem:[#allocation13 + $0x1a8] sm:$0xff]
          %v3163 = vld [vmem:[#allocation13 + $0x1b0] sm:$0xff]
          %v3164 = vld [vmem:[#allocation13 + $0x1b8] sm:$0xff]
          %v3165 = vld [vmem:[#allocation13 + $0x1c0] sm:$0xff]
          %v3166 = vld [vmem:[#allocation13 + $0x1c8] sm:$0xff]
          %v3167 = vld [vmem:[#allocation13 + $0x1d0] sm:$0xff]
          %v3168 = vld [vmem:[#allocation13 + $0x1d8] sm:$0xff]
          %v3169 = vld [vmem:[#allocation13 + $0x1e0] sm:$0xff]
          %v3170 = vld [vmem:[#allocation13 + $0x1e8] sm:$0xff]
          %v3171 = vld [vmem:[#allocation13 + $0x1f0] sm:$0xff]
          %v3172 = vld [vmem:[#allocation13 + $0x1f8] sm:$0xff]
          %v3173 = vld [vmem:[#allocation13 + $0x200] sm:$0xff]
          %v3174 = vld [vmem:[#allocation13 + $0x208] sm:$0xff]
          %v3175 = vld [vmem:[#allocation13 + $0x210] sm:$0xff]
          %v3176 = vld [vmem:[#allocation13 + $0x218] sm:$0xff]
          %v3177 = vld [vmem:[#allocation13 + $0x220] sm:$0xff]
          %v3178 = vld [vmem:[#allocation13 + $0x228] sm:$0xff]
          %v3179 = vld [vmem:[#allocation13 + $0x230] sm:$0xff]
          %v3180 = vld [vmem:[#allocation13 + $0x238] sm:$0xff]
          %v3181 = vld [vmem:[#allocation13 + $0x240] sm:$0xff]
          %v3182 = vld [vmem:[#allocation13 + $0x248] sm:$0xff]
          %v3183 = vld [vmem:[#allocation13 + $0x250] sm:$0xff]
          %v3184 = vld [vmem:[#allocation13 + $0x258] sm:$0xff]
          %v3185 = vld [vmem:[#allocation13 + $0x260] sm:$0xff]
          %v3186 = vld [vmem:[#allocation13 + $0x268] sm:$0xff]
          %v3187 = vld [vmem:[#allocation13 + $0x270] sm:$0xff]
          %v3188 = vld [vmem:[#allocation13 + $0x278] sm:$0xff]
          %v3189 = vld [vmem:[#allocation13 + $0x280] sm:$0xff]
          %v3190 = vld [vmem:[#allocation13 + $0x288] sm:$0xff]
          %v3191 = vld [vmem:[#allocation13 + $0x290] sm:$0xff]
          %v3192 = vld [vmem:[#allocation13 + $0x298] sm:$0xff]
          %v3193 = vld [vmem:[#allocation13 + $0x2a0] sm:$0xff]
          %v3194 = vld [vmem:[#allocation13 + $0x2a8] sm:$0xff]
          %v3195 = vld [vmem:[#allocation13 + $0x2b0] sm:$0xff]
          %v3196 = vld [vmem:[#allocation13 + $0x2b8] sm:$0xff]
          %v3197 = vld [vmem:[#allocation13 + $0x2c0] sm:$0xff]
          %v3198 = vld [vmem:[#allocation13 + $0x2c8] sm:$0xff]
          %v3199 = vld [vmem:[#allocation13 + $0x2d0] sm:$0xff]
          %v3200 = vld [vmem:[#allocation13 + $0x2d8] sm:$0xff]
          %v3201 = vld [vmem:[#allocation13 + $0x2e0] sm:$0xff]
          %v3202 = vld [vmem:[#allocation13 + $0x2e8] sm:$0xff]
          %v3203 = vld [vmem:[#allocation13 + $0x2f0] sm:$0xff]
          %v3204 = vld [vmem:[#allocation13 + $0x2f8] sm:$0xff]
          %v3205 = vld [vmem:[#allocation13 + $0x300] sm:$0xff]
          %v3206 = vld [vmem:[#allocation13 + $0x308] sm:$0xff]
          %v3207 = vld [vmem:[#allocation13 + $0x310] sm:$0xff]
          %v3208 = vld [vmem:[#allocation13 + $0x318] sm:$0xff]
          %v3209 = vld [vmem:[#allocation13 + $0x320] sm:$0xff]
          %v3210 = vld [vmem:[#allocation13 + $0x328] sm:$0xff]
          %v3211 = vld [vmem:[#allocation13 + $0x330] sm:$0xff]
          %v3212 = vld [vmem:[#allocation13 + $0x338] sm:$0xff]
          %v3213 = vld [vmem:[#allocation13 + $0x340] sm:$0xff]
          %v3214 = vld [vmem:[#allocation13 + $0x348] sm:$0xff]
          %v3215 = vld [vmem:[#allocation13 + $0x350] sm:$0xff]
          %v3216 = vld [vmem:[#allocation13 + $0x358] sm:$0xff]
          %v3217 = vld [vmem:[#allocation13 + $0x360] sm:$0xff]
          %v3218 = vld [vmem:[#allocation13 + $0x368] sm:$0xff]
          %v3219 = vld [vmem:[#allocation13 + $0x370] sm:$0xff]
          %v3220 = vld [vmem:[#allocation13 + $0x378] sm:$0xff]
          %v3221 = vld [vmem:[#allocation13 + $0x380] sm:$0xff]
          %v3222 = vld [vmem:[#allocation13 + $0x388] sm:$0xff]
          %v3223 = vld [vmem:[#allocation13 + $0x390] sm:$0xff]
          %v3224 = vld [vmem:[#allocation13 + $0x398] sm:$0xff]
          %v3225 = vld [vmem:[#allocation13 + $0x3a0] sm:$0xff]
          %v3226 = vld [vmem:[#allocation13 + $0x3a8] sm:$0xff]
          %v3227 = vld [vmem:[#allocation13 + $0x3b0] sm:$0xff]
          %v3228 = vld [vmem:[#allocation13 + $0x3b8] sm:$0xff]
          %v3229 = vld [vmem:[#allocation13 + $0x3c0] sm:$0xff]
          %v3230 = vld [vmem:[#allocation13 + $0x3c8] sm:$0xff]
          %v3231 = vld [vmem:[#allocation13 + $0x3d0] sm:$0xff]
          %v3232 = vld [vmem:[#allocation13 + $0x3d8] sm:$0xff]
          %v3233 = vld [vmem:[#allocation13 + $0x3e0] sm:$0xff]
          %v3234 = vld [vmem:[#allocation13 + $0x3e8] sm:$0xff]
          %v3235 = vld [vmem:[#allocation13 + $0x3f0] sm:$0xff]
          %v3236 = vld [vmem:[#allocation13 + $0x3f8] sm:$0xff]
          %v3237 = vld [vmem:[#allocation15] sm:$0xf]
          %v3239 = vlaneseq
          %v3240 = vshrl.u32 %v3239, 7
          %v3241 = vsub.s32 0, %v3240
          %v3242 = vrot.slane %v3237, %v3241
          %v3243 = vlaneseq
          %v3244 = vshrl.u32 %v3243, 7
          %v3245 = vsub.s32 1, %v3244
          %v3246 = vrot.slane %v3237, %v3245
          %v3247 = vlaneseq
          %v3248 = vshrl.u32 %v3247, 7
          %v3249 = vsub.s32 2, %v3248
          %v3250 = vrot.slane %v3237, %v3249
          %v3251 = vlaneseq
          %v3252 = vshrl.u32 %v3251, 7
          %v3253 = vsub.s32 3, %v3252
          %v3254 = vrot.slane %v3237, %v3253
          %v3387 = vunpack.c.l.b16 %v3109
          %v3388 = vunpack.c.h.b16 %v3109
          %v3389 = vunpack.c.l.b16 %v3110
          %v3390 = vunpack.c.h.b16 %v3110
          %v3391 = vunpack.c.l.b16 %v3111
          %v3392 = vunpack.c.h.b16 %v3111
          %v3393 = vunpack.c.l.b16 %v3112
          %v3394 = vunpack.c.h.b16 %v3112
          %v3395 = vunpack.c.l.b16 %v3113
          %v3396 = vunpack.c.h.b16 %v3113
          %v3397 = vunpack.c.l.b16 %v3114
          %v3398 = vunpack.c.h.b16 %v3114
          %v3399 = vunpack.c.l.b16 %v3115
          %v3400 = vunpack.c.h.b16 %v3115
          %v3401 = vunpack.c.l.b16 %v3116
          %v3402 = vunpack.c.h.b16 %v3116
          %v3403 = vunpack.c.l.b16 %v3117
          %v3404 = vunpack.c.h.b16 %v3117
          %v3405 = vunpack.c.l.b16 %v3118
          %v3406 = vunpack.c.h.b16 %v3118
          %v3407 = vunpack.c.l.b16 %v3119
          %v3408 = vunpack.c.h.b16 %v3119
          %v3409 = vunpack.c.l.b16 %v3120
          %v3410 = vunpack.c.h.b16 %v3120
          %v3411 = vunpack.c.l.b16 %v3121
          %v3412 = vunpack.c.h.b16 %v3121
          %v3413 = vunpack.c.l.b16 %v3122
          %v3414 = vunpack.c.h.b16 %v3122
          %v3415 = vunpack.c.l.b16 %v3123
          %v3416 = vunpack.c.h.b16 %v3123
          %v3417 = vunpack.c.l.b16 %v3124
          %v3418 = vunpack.c.h.b16 %v3124
          %v3419 = vunpack.c.l.b16 %v3125
          %v3420 = vunpack.c.h.b16 %v3125
          %v3421 = vunpack.c.l.b16 %v3126
          %v3422 = vunpack.c.h.b16 %v3126
          %v3423 = vunpack.c.l.b16 %v3127
          %v3424 = vunpack.c.h.b16 %v3127
          %v3425 = vunpack.c.l.b16 %v3128
          %v3426 = vunpack.c.h.b16 %v3128
          %v3427 = vunpack.c.l.b16 %v3129
          %v3428 = vunpack.c.h.b16 %v3129
          %v3429 = vunpack.c.l.b16 %v3130
          %v3430 = vunpack.c.h.b16 %v3130
          %v3431 = vunpack.c.l.b16 %v3131
          %v3432 = vunpack.c.h.b16 %v3131
          %v3433 = vunpack.c.l.b16 %v3132
          %v3434 = vunpack.c.h.b16 %v3132
          %v3435 = vunpack.c.l.b16 %v3133
          %v3436 = vunpack.c.h.b16 %v3133
          %v3437 = vunpack.c.l.b16 %v3134
          %v3438 = vunpack.c.h.b16 %v3134
          %v3439 = vunpack.c.l.b16 %v3135
          %v3440 = vunpack.c.h.b16 %v3135
          %v3441 = vunpack.c.l.b16 %v3136
          %v3442 = vunpack.c.h.b16 %v3136
          %v3443 = vunpack.c.l.b16 %v3137
          %v3444 = vunpack.c.h.b16 %v3137
          %v3445 = vunpack.c.l.b16 %v3138
          %v3446 = vunpack.c.h.b16 %v3138
          %v3447 = vunpack.c.l.b16 %v3139
          %v3448 = vunpack.c.h.b16 %v3139
          %v3449 = vunpack.c.l.b16 %v3140
          %v3450 = vunpack.c.h.b16 %v3140
          %v3451 = vunpack.c.l.b16 %v3141
          %v3452 = vunpack.c.h.b16 %v3141
          %v3453 = vunpack.c.l.b16 %v3142
          %v3454 = vunpack.c.h.b16 %v3142
          %v3455 = vunpack.c.l.b16 %v3143
          %v3456 = vunpack.c.h.b16 %v3143
          %v3457 = vunpack.c.l.b16 %v3144
          %v3458 = vunpack.c.h.b16 %v3144
          %v3459 = vunpack.c.l.b16 %v3145
          %v3460 = vunpack.c.h.b16 %v3145
          %v3461 = vunpack.c.l.b16 %v3146
          %v3462 = vunpack.c.h.b16 %v3146
          %v3463 = vunpack.c.l.b16 %v3147
          %v3464 = vunpack.c.h.b16 %v3147
          %v3465 = vunpack.c.l.b16 %v3148
          %v3466 = vunpack.c.h.b16 %v3148
          %v3467 = vunpack.c.l.b16 %v3149
          %v3468 = vunpack.c.h.b16 %v3149
          %v3469 = vunpack.c.l.b16 %v3150
          %v3470 = vunpack.c.h.b16 %v3150
          %v3471 = vunpack.c.l.b16 %v3151
          %v3472 = vunpack.c.h.b16 %v3151
          %v3473 = vunpack.c.l.b16 %v3152
          %v3474 = vunpack.c.h.b16 %v3152
          %v3475 = vunpack.c.l.b16 %v3153
          %v3476 = vunpack.c.h.b16 %v3153
          %v3477 = vunpack.c.l.b16 %v3154
          %v3478 = vunpack.c.h.b16 %v3154
          %v3479 = vunpack.c.l.b16 %v3155
          %v3480 = vunpack.c.h.b16 %v3155
          %v3481 = vunpack.c.l.b16 %v3156
          %v3482 = vunpack.c.h.b16 %v3156
          %v3483 = vunpack.c.l.b16 %v3157
          %v3484 = vunpack.c.h.b16 %v3157
          %v3485 = vunpack.c.l.b16 %v3158
          %v3486 = vunpack.c.h.b16 %v3158
          %v3487 = vunpack.c.l.b16 %v3159
          %v3488 = vunpack.c.h.b16 %v3159
          %v3489 = vunpack.c.l.b16 %v3160
          %v3490 = vunpack.c.h.b16 %v3160
          %v3491 = vunpack.c.l.b16 %v3161
          %v3492 = vunpack.c.h.b16 %v3161
          %v3493 = vunpack.c.l.b16 %v3162
          %v3494 = vunpack.c.h.b16 %v3162
          %v3495 = vunpack.c.l.b16 %v3163
          %v3496 = vunpack.c.h.b16 %v3163
          %v3497 = vunpack.c.l.b16 %v3164
          %v3498 = vunpack.c.h.b16 %v3164
          %v3499 = vunpack.c.l.b16 %v3165
          %v3500 = vunpack.c.h.b16 %v3165
          %v3501 = vunpack.c.l.b16 %v3166
          %v3502 = vunpack.c.h.b16 %v3166
          %v3503 = vunpack.c.l.b16 %v3167
          %v3504 = vunpack.c.h.b16 %v3167
          %v3505 = vunpack.c.l.b16 %v3168
          %v3506 = vunpack.c.h.b16 %v3168
          %v3507 = vunpack.c.l.b16 %v3169
          %v3508 = vunpack.c.h.b16 %v3169
          %v3509 = vunpack.c.l.b16 %v3170
          %v3510 = vunpack.c.h.b16 %v3170
          %v3511 = vunpack.c.l.b16 %v3171
          %v3512 = vunpack.c.h.b16 %v3171
          %v3513 = vunpack.c.l.b16 %v3172
          %v3514 = vunpack.c.h.b16 %v3172
          %v3515 = vunpack.c.l.b16 %v3173
          %v3516 = vunpack.c.h.b16 %v3173
          %v3517 = vunpack.c.l.b16 %v3174
          %v3518 = vunpack.c.h.b16 %v3174
          %v3519 = vunpack.c.l.b16 %v3175
          %v3520 = vunpack.c.h.b16 %v3175
          %v3521 = vunpack.c.l.b16 %v3176
          %v3522 = vunpack.c.h.b16 %v3176
          %v3523 = vunpack.c.l.b16 %v3177
          %v3524 = vunpack.c.h.b16 %v3177
          %v3525 = vunpack.c.l.b16 %v3178
          %v3526 = vunpack.c.h.b16 %v3178
          %v3527 = vunpack.c.l.b16 %v3179
          %v3528 = vunpack.c.h.b16 %v3179
          %v3529 = vunpack.c.l.b16 %v3180
          %v3530 = vunpack.c.h.b16 %v3180
          %v3531 = vunpack.c.l.b16 %v3181
          %v3532 = vunpack.c.h.b16 %v3181
          %v3533 = vunpack.c.l.b16 %v3182
          %v3534 = vunpack.c.h.b16 %v3182
          %v3535 = vunpack.c.l.b16 %v3183
          %v3536 = vunpack.c.h.b16 %v3183
          %v3537 = vunpack.c.l.b16 %v3184
          %v3538 = vunpack.c.h.b16 %v3184
          %v3539 = vunpack.c.l.b16 %v3185
          %v3540 = vunpack.c.h.b16 %v3185
          %v3541 = vunpack.c.l.b16 %v3186
          %v3542 = vunpack.c.h.b16 %v3186
          %v3543 = vunpack.c.l.b16 %v3187
          %v3544 = vunpack.c.h.b16 %v3187
          %v3545 = vunpack.c.l.b16 %v3188
          %v3546 = vunpack.c.h.b16 %v3188
          %v3547 = vunpack.c.l.b16 %v3189
          %v3548 = vunpack.c.h.b16 %v3189
          %v3549 = vunpack.c.l.b16 %v3190
          %v3550 = vunpack.c.h.b16 %v3190
          %v3551 = vunpack.c.l.b16 %v3191
          %v3552 = vunpack.c.h.b16 %v3191
          %v3553 = vunpack.c.l.b16 %v3192
          %v3554 = vunpack.c.h.b16 %v3192
          %v3555 = vunpack.c.l.b16 %v3193
          %v3556 = vunpack.c.h.b16 %v3193
          %v3557 = vunpack.c.l.b16 %v3194
          %v3558 = vunpack.c.h.b16 %v3194
          %v3559 = vunpack.c.l.b16 %v3195
          %v3560 = vunpack.c.h.b16 %v3195
          %v3561 = vunpack.c.l.b16 %v3196
          %v3562 = vunpack.c.h.b16 %v3196
          %v3563 = vunpack.c.l.b16 %v3197
          %v3564 = vunpack.c.h.b16 %v3197
          %v3565 = vunpack.c.l.b16 %v3198
          %v3566 = vunpack.c.h.b16 %v3198
          %v3567 = vunpack.c.l.b16 %v3199
          %v3568 = vunpack.c.h.b16 %v3199
          %v3569 = vunpack.c.l.b16 %v3200
          %v3570 = vunpack.c.h.b16 %v3200
          %v3571 = vunpack.c.l.b16 %v3201
          %v3572 = vunpack.c.h.b16 %v3201
          %v3573 = vunpack.c.l.b16 %v3202
          %v3574 = vunpack.c.h.b16 %v3202
          %v3575 = vunpack.c.l.b16 %v3203
          %v3576 = vunpack.c.h.b16 %v3203
          %v3577 = vunpack.c.l.b16 %v3204
          %v3578 = vunpack.c.h.b16 %v3204
          %v3579 = vunpack.c.l.b16 %v3205
          %v3580 = vunpack.c.h.b16 %v3205
          %v3581 = vunpack.c.l.b16 %v3206
          %v3582 = vunpack.c.h.b16 %v3206
          %v3583 = vunpack.c.l.b16 %v3207
          %v3584 = vunpack.c.h.b16 %v3207
          %v3585 = vunpack.c.l.b16 %v3208
          %v3586 = vunpack.c.h.b16 %v3208
          %v3587 = vunpack.c.l.b16 %v3209
          %v3588 = vunpack.c.h.b16 %v3209
          %v3589 = vunpack.c.l.b16 %v3210
          %v3590 = vunpack.c.h.b16 %v3210
          %v3591 = vunpack.c.l.b16 %v3211
          %v3592 = vunpack.c.h.b16 %v3211
          %v3593 = vunpack.c.l.b16 %v3212
          %v3594 = vunpack.c.h.b16 %v3212
          %v3595 = vunpack.c.l.b16 %v3213
          %v3596 = vunpack.c.h.b16 %v3213
          %v3597 = vunpack.c.l.b16 %v3214
          %v3598 = vunpack.c.h.b16 %v3214
          %v3599 = vunpack.c.l.b16 %v3215
          %v3600 = vunpack.c.h.b16 %v3215
          %v3601 = vunpack.c.l.b16 %v3216
          %v3602 = vunpack.c.h.b16 %v3216
          %v3603 = vunpack.c.l.b16 %v3217
          %v3604 = vunpack.c.h.b16 %v3217
          %v3605 = vunpack.c.l.b16 %v3218
          %v3606 = vunpack.c.h.b16 %v3218
          %v3607 = vunpack.c.l.b16 %v3219
          %v3608 = vunpack.c.h.b16 %v3219
          %v3609 = vunpack.c.l.b16 %v3220
          %v3610 = vunpack.c.h.b16 %v3220
          %v3611 = vunpack.c.l.b16 %v3221
          %v3612 = vunpack.c.h.b16 %v3221
          %v3613 = vunpack.c.l.b16 %v3222
          %v3614 = vunpack.c.h.b16 %v3222
          %v3615 = vunpack.c.l.b16 %v3223
          %v3616 = vunpack.c.h.b16 %v3223
          %v3617 = vunpack.c.l.b16 %v3224
          %v3618 = vunpack.c.h.b16 %v3224
          %v3619 = vunpack.c.l.b16 %v3225
          %v3620 = vunpack.c.h.b16 %v3225
          %v3621 = vunpack.c.l.b16 %v3226
          %v3622 = vunpack.c.h.b16 %v3226
          %v3623 = vunpack.c.l.b16 %v3227
          %v3624 = vunpack.c.h.b16 %v3227
          %v3625 = vunpack.c.l.b16 %v3228
          %v3626 = vunpack.c.h.b16 %v3228
          %v3627 = vunpack.c.l.b16 %v3229
          %v3628 = vunpack.c.h.b16 %v3229
          %v3629 = vunpack.c.l.b16 %v3230
          %v3630 = vunpack.c.h.b16 %v3230
          %v3631 = vunpack.c.l.b16 %v3231
          %v3632 = vunpack.c.h.b16 %v3231
          %v3633 = vunpack.c.l.b16 %v3232
          %v3634 = vunpack.c.h.b16 %v3232
          %v3635 = vunpack.c.l.b16 %v3233
          %v3636 = vunpack.c.h.b16 %v3233
          %v3637 = vunpack.c.l.b16 %v3234
          %v3638 = vunpack.c.h.b16 %v3234
          %v3639 = vunpack.c.l.b16 %v3235
          %v3640 = vunpack.c.h.b16 %v3235
          %v3641 = vunpack.c.l.b16 %v3236
          %v3642 = vunpack.c.h.b16 %v3236
          %v3643 = vpack.c.b16 %v3391, %v3387
          %v3644 = vpack.c.b16 %v3392, %v3388
          %v3645 = vpack.c.b16 %v3393, %v3389
          %v3646 = vpack.c.b16 %v3394, %v3390
          %v3647 = vpack.c.b16 %v3399, %v3395
          %v3648 = vpack.c.b16 %v3400, %v3396
          %v3649 = vpack.c.b16 %v3401, %v3397
          %v3650 = vpack.c.b16 %v3402, %v3398
          %v3651 = vpack.c.b16 %v3407, %v3403
          %v3652 = vpack.c.b16 %v3408, %v3404
          %v3653 = vpack.c.b16 %v3409, %v3405
          %v3654 = vpack.c.b16 %v3410, %v3406
          %v3655 = vpack.c.b16 %v3415, %v3411
          %v3656 = vpack.c.b16 %v3416, %v3412
          %v3657 = vpack.c.b16 %v3417, %v3413
          %v3658 = vpack.c.b16 %v3418, %v3414
          %v3659 = vpack.c.b16 %v3423, %v3419
          %v3660 = vpack.c.b16 %v3424, %v3420
          %v3661 = vpack.c.b16 %v3425, %v3421
          %v3662 = vpack.c.b16 %v3426, %v3422
          %v3663 = vpack.c.b16 %v3431, %v3427
          %v3664 = vpack.c.b16 %v3432, %v3428
          %v3665 = vpack.c.b16 %v3433, %v3429
          %v3666 = vpack.c.b16 %v3434, %v3430
          %v3667 = vpack.c.b16 %v3439, %v3435
          %v3668 = vpack.c.b16 %v3440, %v3436
          %v3669 = vpack.c.b16 %v3441, %v3437
          %v3670 = vpack.c.b16 %v3442, %v3438
          %v3671 = vpack.c.b16 %v3447, %v3443
          %v3672 = vpack.c.b16 %v3448, %v3444
          %v3673 = vpack.c.b16 %v3449, %v3445
          %v3674 = vpack.c.b16 %v3450, %v3446
          %v3675 = vpack.c.b16 %v3455, %v3451
          %v3676 = vpack.c.b16 %v3456, %v3452
          %v3677 = vpack.c.b16 %v3457, %v3453
          %v3678 = vpack.c.b16 %v3458, %v3454
          %v3679 = vpack.c.b16 %v3463, %v3459
          %v3680 = vpack.c.b16 %v3464, %v3460
          %v3681 = vpack.c.b16 %v3465, %v3461
          %v3682 = vpack.c.b16 %v3466, %v3462
          %v3683 = vpack.c.b16 %v3471, %v3467
          %v3684 = vpack.c.b16 %v3472, %v3468
          %v3685 = vpack.c.b16 %v3473, %v3469
          %v3686 = vpack.c.b16 %v3474, %v3470
          %v3687 = vpack.c.b16 %v3479, %v3475
          %v3688 = vpack.c.b16 %v3480, %v3476
          %v3689 = vpack.c.b16 %v3481, %v3477
          %v3690 = vpack.c.b16 %v3482, %v3478
          %v3691 = vpack.c.b16 %v3487, %v3483
          %v3692 = vpack.c.b16 %v3488, %v3484
          %v3693 = vpack.c.b16 %v3489, %v3485
          %v3694 = vpack.c.b16 %v3490, %v3486
          %v3695 = vpack.c.b16 %v3495, %v3491
          %v3696 = vpack.c.b16 %v3496, %v3492
          %v3697 = vpack.c.b16 %v3497, %v3493
          %v3698 = vpack.c.b16 %v3498, %v3494
          %v3699 = vpack.c.b16 %v3503, %v3499
          %v3700 = vpack.c.b16 %v3504, %v3500
          %v3701 = vpack.c.b16 %v3505, %v3501
          %v3702 = vpack.c.b16 %v3506, %v3502
          %v3703 = vpack.c.b16 %v3511, %v3507
          %v3704 = vpack.c.b16 %v3512, %v3508
          %v3705 = vpack.c.b16 %v3513, %v3509
          %v3706 = vpack.c.b16 %v3514, %v3510
          %v3707 = vpack.c.b16 %v3519, %v3515
          %v3708 = vpack.c.b16 %v3520, %v3516
          %v3709 = vpack.c.b16 %v3521, %v3517
          %v3710 = vpack.c.b16 %v3522, %v3518
          %v3711 = vpack.c.b16 %v3527, %v3523
          %v3712 = vpack.c.b16 %v3528, %v3524
          %v3713 = vpack.c.b16 %v3529, %v3525
          %v3714 = vpack.c.b16 %v3530, %v3526
          %v3715 = vpack.c.b16 %v3535, %v3531
          %v3716 = vpack.c.b16 %v3536, %v3532
          %v3717 = vpack.c.b16 %v3537, %v3533
          %v3718 = vpack.c.b16 %v3538, %v3534
          %v3719 = vpack.c.b16 %v3543, %v3539
          %v3720 = vpack.c.b16 %v3544, %v3540
          %v3721 = vpack.c.b16 %v3545, %v3541
          %v3722 = vpack.c.b16 %v3546, %v3542
          %v3723 = vpack.c.b16 %v3551, %v3547
          %v3724 = vpack.c.b16 %v3552, %v3548
          %v3725 = vpack.c.b16 %v3553, %v3549
          %v3726 = vpack.c.b16 %v3554, %v3550
          %v3727 = vpack.c.b16 %v3559, %v3555
          %v3728 = vpack.c.b16 %v3560, %v3556
          %v3729 = vpack.c.b16 %v3561, %v3557
          %v3730 = vpack.c.b16 %v3562, %v3558
          %v3731 = vpack.c.b16 %v3567, %v3563
          %v3732 = vpack.c.b16 %v3568, %v3564
          %v3733 = vpack.c.b16 %v3569, %v3565
          %v3734 = vpack.c.b16 %v3570, %v3566
          %v3735 = vpack.c.b16 %v3575, %v3571
          %v3736 = vpack.c.b16 %v3576, %v3572
          %v3737 = vpack.c.b16 %v3577, %v3573
          %v3738 = vpack.c.b16 %v3578, %v3574
          %v3739 = vpack.c.b16 %v3583, %v3579
          %v3740 = vpack.c.b16 %v3584, %v3580
          %v3741 = vpack.c.b16 %v3585, %v3581
          %v3742 = vpack.c.b16 %v3586, %v3582
          %v3743 = vpack.c.b16 %v3591, %v3587
          %v3744 = vpack.c.b16 %v3592, %v3588
          %v3745 = vpack.c.b16 %v3593, %v3589
          %v3746 = vpack.c.b16 %v3594, %v3590
          %v3747 = vpack.c.b16 %v3599, %v3595
          %v3748 = vpack.c.b16 %v3600, %v3596
          %v3749 = vpack.c.b16 %v3601, %v3597
          %v3750 = vpack.c.b16 %v3602, %v3598
          %v3751 = vpack.c.b16 %v3607, %v3603
          %v3752 = vpack.c.b16 %v3608, %v3604
          %v3753 = vpack.c.b16 %v3609, %v3605
          %v3754 = vpack.c.b16 %v3610, %v3606
          %v3755 = vpack.c.b16 %v3615, %v3611
          %v3756 = vpack.c.b16 %v3616, %v3612
          %v3757 = vpack.c.b16 %v3617, %v3613
          %v3758 = vpack.c.b16 %v3618, %v3614
          %v3759 = vpack.c.b16 %v3623, %v3619
          %v3760 = vpack.c.b16 %v3624, %v3620
          %v3761 = vpack.c.b16 %v3625, %v3621
          %v3762 = vpack.c.b16 %v3626, %v3622
          %v3763 = vpack.c.b16 %v3631, %v3627
          %v3764 = vpack.c.b16 %v3632, %v3628
          %v3765 = vpack.c.b16 %v3633, %v3629
          %v3766 = vpack.c.b16 %v3634, %v3630
          %v3767 = vpack.c.b16 %v3639, %v3635
          %v3768 = vpack.c.b16 %v3640, %v3636
          %v3769 = vpack.c.b16 %v3641, %v3637
          %v3770 = vpack.c.b16 %v3642, %v3638
          %3899 = vmatprep.subr.bf16.mxu0 %v3644
          %3900 = vmatpush1.bf16.msra.mxu0 %v3643
          %3901 = vmatprep.subr.bf16.mxu0 %v3648
          %3902 = vmatpush1.bf16.msra.mxu0 %v3647
          %3903 = vmatprep.subr.bf16.mxu0 %v3652
          %3904 = vmatpush1.bf16.msra.mxu0 %v3651
          %3905 = vmatprep.subr.bf16.mxu0 %v3656
          %3906 = vmatpush1.bf16.msra.mxu0 %v3655
          %3907 = vmatprep.subr.bf16.mxu0 %v3660
          %3908 = vmatpush1.bf16.msra.mxu0 %v3659
          %3909 = vmatprep.subr.bf16.mxu0 %v3664
          %3910 = vmatpush1.bf16.msra.mxu0 %v3663
          %3911 = vmatprep.subr.bf16.mxu0 %v3668
          %3912 = vmatpush1.bf16.msra.mxu0 %v3667
          %3913 = vmatprep.subr.bf16.mxu0 %v3672
          %3914 = vmatpush1.bf16.msra.mxu0 %v3671
          %3915 = vmatprep.subr.bf16.mxu0 %v3676
          %3916 = vmatpush1.bf16.msra.mxu0 %v3675
          %3917 = vmatprep.subr.bf16.mxu0 %v3680
          %3918 = vmatpush1.bf16.msra.mxu0 %v3679
          %3919 = vmatprep.subr.bf16.mxu0 %v3684
          %3920 = vmatpush1.bf16.msra.mxu0 %v3683
          %3921 = vmatprep.subr.bf16.mxu0 %v3688
          %3922 = vmatpush1.bf16.msra.mxu0 %v3687
          %3923 = vmatprep.subr.bf16.mxu0 %v3692
          %3924 = vmatpush1.bf16.msra.mxu0 %v3691
          %3925 = vmatprep.subr.bf16.mxu0 %v3696
          %3926 = vmatpush1.bf16.msra.mxu0 %v3695
          %3927 = vmatprep.subr.bf16.mxu0 %v3700
          %3928 = vmatpush1.bf16.msra.mxu0 %v3699
          %3929 = vmatprep.subr.bf16.mxu0 %v3704
          %3930 = vmatpush1.bf16.msra.mxu0 %v3703
          %3931 = vmatprep.mubr.bf16.mxu0 %v3106
          %3932 = vmatmul.mubr.bf16.gmra.mrb[0].mxu0 %v3105
          %v3933 = vpop.f32.mrb[0].mxu0
          %v3934 = vadd.f32 %v3242, %v3933
          %v3935 = vpop.f32.mrb[0].mxu0
          %v3936 = vadd.f32 %v3246, %v3935
          %v3937 = vpop.f32.mrb[0].mxu0
          %v3938 = vpop.f32.mrb[0].mxu0
          %3939 = vdwg.mxu0
          %3940 = vmatprep.subr.bf16.mxu0 %v3708
          %3941 = vmatpush1.bf16.msra.mxu0 %v3707
          %3942 = vmatprep.subr.bf16.mxu0 %v3712
          %3943 = vmatpush1.bf16.msra.mxu0 %v3711
          %3944 = vmatprep.subr.bf16.mxu0 %v3716
          %3945 = vmatpush1.bf16.msra.mxu0 %v3715
          %3946 = vmatprep.subr.bf16.mxu0 %v3720
          %3947 = vmatpush1.bf16.msra.mxu0 %v3719
          %3948 = vmatprep.subr.bf16.mxu0 %v3724
          %3949 = vmatpush1.bf16.msra.mxu0 %v3723
          %3950 = vmatprep.subr.bf16.mxu0 %v3728
          %3951 = vmatpush1.bf16.msra.mxu0 %v3727
          %3952 = vmatprep.subr.bf16.mxu0 %v3732
          %3953 = vmatpush1.bf16.msra.mxu0 %v3731
          %3954 = vmatprep.subr.bf16.mxu0 %v3736
          %3955 = vmatpush1.bf16.msra.mxu0 %v3735
          %3956 = vmatprep.subr.bf16.mxu0 %v3740
          %3957 = vmatpush1.bf16.msra.mxu0 %v3739
          %3958 = vmatprep.subr.bf16.mxu0 %v3744
          %3959 = vmatpush1.bf16.msra.mxu0 %v3743
          %3960 = vmatprep.subr.bf16.mxu0 %v3748
          %3961 = vmatpush1.bf16.msra.mxu0 %v3747
          %3962 = vmatprep.subr.bf16.mxu0 %v3752
          %3963 = vmatpush1.bf16.msra.mxu0 %v3751
          %3964 = vmatprep.subr.bf16.mxu0 %v3756
          %3965 = vmatpush1.bf16.msra.mxu0 %v3755
          %3966 = vmatprep.subr.bf16.mxu0 %v3760
          %3967 = vmatpush1.bf16.msra.mxu0 %v3759
          %3968 = vmatprep.subr.bf16.mxu0 %v3764
          %3969 = vmatpush1.bf16.msra.mxu0 %v3763
          %3970 = vmatprep.subr.bf16.mxu0 %v3768
          %3971 = vmatpush1.bf16.msra.mxu0 %v3767
          %3972 = vmatprep.mubr.bf16.mxu0 %v3108
          %3973 = vmatmul.mubr.bf16.gmra.mrb[0].mxu0 %v3107
          %v3974 = vpop.f32.mrb[0].mxu0
          %v3975 = vadd.f32 %v3934, %v3974
          %v3976 = vpop.f32.mrb[0].mxu0
          %v3977 = vadd.f32 %v3936, %v3976
          %v3978 = vpop.f32.mrb[0].mxu0
          %v3979 = vpop.f32.mrb[0].mxu0
          %3980 = vdwg.mxu0
          %3981 = vmatprep.subr.bf16.mxu0 %v3646
          %3982 = vmatpush1.bf16.msra.mxu0 %v3645
          %3983 = vmatprep.subr.bf16.mxu0 %v3650
          %3984 = vmatpush1.bf16.msra.mxu0 %v3649
          %3985 = vmatprep.subr.bf16.mxu0 %v3654
          %3986 = vmatpush1.bf16.msra.mxu0 %v3653
          %3987 = vmatprep.subr.bf16.mxu0 %v3658
          %3988 = vmatpush1.bf16.msra.mxu0 %v3657
          %3989 = vmatprep.subr.bf16.mxu0 %v3662
          %3990 = vmatpush1.bf16.msra.mxu0 %v3661
          %3991 = vmatprep.subr.bf16.mxu0 %v3666
          %3992 = vmatpush1.bf16.msra.mxu0 %v3665
          %3993 = vmatprep.subr.bf16.mxu0 %v3670
          %3994 = vmatpush1.bf16.msra.mxu0 %v3669
          %3995 = vmatprep.subr.bf16.mxu0 %v3674
          %3996 = vmatpush1.bf16.msra.mxu0 %v3673
          %3997 = vmatprep.subr.bf16.mxu0 %v3678
          %3998 = vmatpush1.bf16.msra.mxu0 %v3677
          %3999 = vmatprep.subr.bf16.mxu0 %v3682
          %4000 = vmatpush1.bf16.msra.mxu0 %v3681
          %4001 = vmatprep.subr.bf16.mxu0 %v3686
          %4002 = vmatpush1.bf16.msra.mxu0 %v3685
          %4003 = vmatprep.subr.bf16.mxu0 %v3690
          %4004 = vmatpush1.bf16.msra.mxu0 %v3689
          %4005 = vmatprep.subr.bf16.mxu0 %v3694
          %4006 = vmatpush1.bf16.msra.mxu0 %v3693
          %4007 = vmatprep.subr.bf16.mxu0 %v3698
          %4008 = vmatpush1.bf16.msra.mxu0 %v3697
          %4009 = vmatprep.subr.bf16.mxu0 %v3702
          %4010 = vmatpush1.bf16.msra.mxu0 %v3701
          %4011 = vmatprep.subr.bf16.mxu0 %v3706
          %4012 = vmatpush1.bf16.msra.mxu0 %v3705
          %4013 = vmatprep.mubr.bf16.mxu0 %v3106
          %4014 = vmatmul.mubr.bf16.gmra.mrb[0].mxu0 %v3105
          %v4015 = vpop.f32.mrb[0].mxu0
          %v4016 = vadd.f32 %v3250, %v4015
          %v4017 = vpop.f32.mrb[0].mxu0
          %v4018 = vadd.f32 %v3254, %v4017
          %v4019 = vpop.f32.mrb[0].mxu0
          %v4020 = vpop.f32.mrb[0].mxu0
          %4021 = vdwg.mxu0
          %4022 = vmatprep.subr.bf16.mxu0 %v3710
          %4023 = vmatpush1.bf16.msra.mxu0 %v3709
          %4024 = vmatprep.subr.bf16.mxu0 %v3714
          %4025 = vmatpush1.bf16.msra.mxu0 %v3713
          %4026 = vmatprep.subr.bf16.mxu0 %v3718
          %4027 = vmatpush1.bf16.msra.mxu0 %v3717
          %4028 = vmatprep.subr.bf16.mxu0 %v3722
          %4029 = vmatpush1.bf16.msra.mxu0 %v3721
          %4030 = vmatprep.subr.bf16.mxu0 %v3726
          %4031 = vmatpush1.bf16.msra.mxu0 %v3725
          %4032 = vmatprep.subr.bf16.mxu0 %v3730
          %4033 = vmatpush1.bf16.msra.mxu0 %v3729
          %4034 = vmatprep.subr.bf16.mxu0 %v3734
          %4035 = vmatpush1.bf16.msra.mxu0 %v3733
          %4036 = vmatprep.subr.bf16.mxu0 %v3738
          %4037 = vmatpush1.bf16.msra.mxu0 %v3737
          %4038 = vmatprep.subr.bf16.mxu0 %v3742
          %4039 = vmatpush1.bf16.msra.mxu0 %v3741
          %4040 = vmatprep.subr.bf16.mxu0 %v3746
          %4041 = vmatpush1.bf16.msra.mxu0 %v3745
          %4042 = vmatprep.subr.bf16.mxu0 %v3750
          %4043 = vmatpush1.bf16.msra.mxu0 %v3749
          %4044 = vmatprep.subr.bf16.mxu0 %v3754
          %4045 = vmatpush1.bf16.msra.mxu0 %v3753
          %4046 = vmatprep.subr.bf16.mxu0 %v3758
          %4047 = vmatpush1.bf16.msra.mxu0 %v3757
          %4048 = vmatprep.subr.bf16.mxu0 %v3762
          %4049 = vmatpush1.bf16.msra.mxu0 %v3761
          %4050 = vmatprep.subr.bf16.mxu0 %v3766
          %4051 = vmatpush1.bf16.msra.mxu0 %v3765
          %4052 = vmatprep.subr.bf16.mxu0 %v3770
          %4053 = vmatpush1.bf16.msra.mxu0 %v3769
          %4054 = vmatprep.mubr.bf16.mxu0 %v3108
          %4055 = vmatmul.mubr.bf16.gmra.mrb[0].mxu0 %v3107
          %v4056 = vpop.f32.mrb[0].mxu0
          %v4057 = vadd.f32 %v4016, %v4056
          %v4058 = vpop.f32.mrb[0].mxu0
          %v4059 = vadd.f32 %v4018, %v4058
          %v4060 = vpop.f32.mrb[0].mxu0
          %v4061 = vpop.f32.mrb[0].mxu0
          %4062 = vdwg.mxu0
          %v4063 = vmax.f32 %v3975, 0.0
          %v4064 = vmax.f32 %v3977, 0.0
          %v4065 = vmax.f32 %v4057, 0.0
          %v4066 = vmax.f32 %v4059, 0.0
          %v4067 = vpack.c.bf16 %v4063, %v4063
          %v4068 = vpack.c.bf16 %v4064, %v4064
          %v4069 = vpack.c.bf16 %v4065, %v4065
          %v4070 = vpack.c.bf16 %v4066, %v4066
          %v4071 = vld [vmem:[#allocation16] sm:$0xf]
          %v4072 = vld [vmem:[#allocation16 + $0x4] sm:$0xf]
          %v4073 = vld [vmem:[#allocation16 + $0x8] sm:$0xf]
          %v4074 = vld [vmem:[#allocation16 + $0xc] sm:$0xf]
          %v4075 = vld [vmem:[#allocation16 + $0x10] sm:$0xf]
          %v4076 = vld [vmem:[#allocation16 + $0x14] sm:$0xf]
          %v4077 = vld [vmem:[#allocation16 + $0x18] sm:$0xf]
          %v4078 = vld [vmem:[#allocation16 + $0x1c] sm:$0xf]
          %v4079 = vld [vmem:[#allocation16 + $0x20] sm:$0xf]
          %v4080 = vld [vmem:[#allocation16 + $0x24] sm:$0xf]
          %v4081 = vld [vmem:[#allocation16 + $0x28] sm:$0xf]
          %v4082 = vld [vmem:[#allocation16 + $0x2c] sm:$0xf]
          %v4083 = vld [vmem:[#allocation16 + $0x30] sm:$0xf]
          %v4084 = vld [vmem:[#allocation16 + $0x34] sm:$0xf]
          %v4085 = vld [vmem:[#allocation16 + $0x38] sm:$0xf]
          %v4086 = vld [vmem:[#allocation16 + $0x3c] sm:$0xf]
          %v4087 = vld [vmem:[#allocation16 + $0x40] sm:$0xf]
          %v4088 = vld [vmem:[#allocation16 + $0x44] sm:$0xf]
          %v4089 = vld [vmem:[#allocation16 + $0x48] sm:$0xf]
          %v4090 = vld [vmem:[#allocation16 + $0x4c] sm:$0xf]
          %v4091 = vld [vmem:[#allocation16 + $0x50] sm:$0xf]
          %v4092 = vld [vmem:[#allocation16 + $0x54] sm:$0xf]
          %v4093 = vld [vmem:[#allocation16 + $0x58] sm:$0xf]
          %v4094 = vld [vmem:[#allocation16 + $0x5c] sm:$0xf]
          %v4095 = vld [vmem:[#allocation16 + $0x60] sm:$0xf]
          %v4096 = vld [vmem:[#allocation16 + $0x64] sm:$0xf]
          %v4097 = vld [vmem:[#allocation16 + $0x68] sm:$0xf]
          %v4098 = vld [vmem:[#allocation16 + $0x6c] sm:$0xf]
          %v4099 = vld [vmem:[#allocation16 + $0x70] sm:$0xf]
          %v4100 = vld [vmem:[#allocation16 + $0x74] sm:$0xf]
          %v4101 = vld [vmem:[#allocation16 + $0x78] sm:$0xf]
          %v4102 = vld [vmem:[#allocation16 + $0x7c] sm:$0xf]
          %v4103 = vld [vmem:[#allocation16 + $0x80] sm:$0xf]
          %v4104 = vld [vmem:[#allocation16 + $0x84] sm:$0xf]
          %v4105 = vld [vmem:[#allocation16 + $0x88] sm:$0xf]
          %v4106 = vld [vmem:[#allocation16 + $0x8c] sm:$0xf]
          %v4107 = vld [vmem:[#allocation16 + $0x90] sm:$0xf]
          %v4108 = vld [vmem:[#allocation16 + $0x94] sm:$0xf]
          %v4109 = vld [vmem:[#allocation16 + $0x98] sm:$0xf]
          %v4110 = vld [vmem:[#allocation16 + $0x9c] sm:$0xf]
          %v4111 = vld [vmem:[#allocation16 + $0xa0] sm:$0xf]
          %v4112 = vld [vmem:[#allocation16 + $0xa4] sm:$0xf]
          %v4113 = vld [vmem:[#allocation16 + $0xa8] sm:$0xf]
          %v4114 = vld [vmem:[#allocation16 + $0xac] sm:$0xf]
          %v4115 = vld [vmem:[#allocation16 + $0xb0] sm:$0xf]
          %v4116 = vld [vmem:[#allocation16 + $0xb4] sm:$0xf]
          %v4117 = vld [vmem:[#allocation16 + $0xb8] sm:$0xf]
          %v4118 = vld [vmem:[#allocation16 + $0xbc] sm:$0xf]
          %v4119 = vld [vmem:[#allocation16 + $0xc0] sm:$0xf]
          %v4120 = vld [vmem:[#allocation16 + $0xc4] sm:$0xf]
          %v4121 = vld [vmem:[#allocation16 + $0xc8] sm:$0xf]
          %v4122 = vld [vmem:[#allocation16 + $0xcc] sm:$0xf]
          %v4123 = vld [vmem:[#allocation16 + $0xd0] sm:$0xf]
          %v4124 = vld [vmem:[#allocation16 + $0xd4] sm:$0xf]
          %v4125 = vld [vmem:[#allocation16 + $0xd8] sm:$0xf]
          %v4126 = vld [vmem:[#allocation16 + $0xdc] sm:$0xf]
          %v4127 = vld [vmem:[#allocation16 + $0xe0] sm:$0xf]
          %v4128 = vld [vmem:[#allocation16 + $0xe4] sm:$0xf]
          %v4129 = vld [vmem:[#allocation16 + $0xe8] sm:$0xf]
          %v4130 = vld [vmem:[#allocation16 + $0xec] sm:$0xf]
          %v4131 = vld [vmem:[#allocation16 + $0xf0] sm:$0xf]
          %v4132 = vld [vmem:[#allocation16 + $0xf4] sm:$0xf]
          %v4133 = vld [vmem:[#allocation16 + $0xf8] sm:$0xf]
          %v4134 = vld [vmem:[#allocation16 + $0xfc] sm:$0xf]
          %v4135 = vld [vmem:[#allocation18] sm:$0x1]
          %v4137 = vlaneseq
          %v4138 = vshrl.u32 %v4137, 7
          %v4139 = vsub.s32 0, %v4138
          %v4140 = vrot.slane %v4135, %v4139
          %v4206 = vunpack.c.l.b16 %v4071
          %v4207 = vunpack.c.l.b16 %v4072
          %v4208 = vunpack.c.l.b16 %v4073
          %v4209 = vunpack.c.l.b16 %v4074
          %v4210 = vunpack.c.l.b16 %v4075
          %v4211 = vunpack.c.l.b16 %v4076
          %v4212 = vunpack.c.l.b16 %v4077
          %v4213 = vunpack.c.l.b16 %v4078
          %v4214 = vunpack.c.l.b16 %v4079
          %v4215 = vunpack.c.l.b16 %v4080
          %v4216 = vunpack.c.l.b16 %v4081
          %v4217 = vunpack.c.l.b16 %v4082
          %v4218 = vunpack.c.l.b16 %v4083
          %v4219 = vunpack.c.l.b16 %v4084
          %v4220 = vunpack.c.l.b16 %v4085
          %v4221 = vunpack.c.l.b16 %v4086
          %v4222 = vunpack.c.l.b16 %v4087
          %v4223 = vunpack.c.l.b16 %v4088
          %v4224 = vunpack.c.l.b16 %v4089
          %v4225 = vunpack.c.l.b16 %v4090
          %v4226 = vunpack.c.l.b16 %v4091
          %v4227 = vunpack.c.l.b16 %v4092
          %v4228 = vunpack.c.l.b16 %v4093
          %v4229 = vunpack.c.l.b16 %v4094
          %v4230 = vunpack.c.l.b16 %v4095
          %v4231 = vunpack.c.l.b16 %v4096
          %v4232 = vunpack.c.l.b16 %v4097
          %v4233 = vunpack.c.l.b16 %v4098
          %v4234 = vunpack.c.l.b16 %v4099
          %v4235 = vunpack.c.l.b16 %v4100
          %v4236 = vunpack.c.l.b16 %v4101
          %v4237 = vunpack.c.l.b16 %v4102
          %v4238 = vunpack.c.l.b16 %v4103
          %v4239 = vunpack.c.l.b16 %v4104
          %v4240 = vunpack.c.l.b16 %v4105
          %v4241 = vunpack.c.l.b16 %v4106
          %v4242 = vunpack.c.l.b16 %v4107
          %v4243 = vunpack.c.l.b16 %v4108
          %v4244 = vunpack.c.l.b16 %v4109
          %v4245 = vunpack.c.l.b16 %v4110
          %v4246 = vunpack.c.l.b16 %v4111
          %v4247 = vunpack.c.l.b16 %v4112
          %v4248 = vunpack.c.l.b16 %v4113
          %v4249 = vunpack.c.l.b16 %v4114
          %v4250 = vunpack.c.l.b16 %v4115
          %v4251 = vunpack.c.l.b16 %v4116
          %v4252 = vunpack.c.l.b16 %v4117
          %v4253 = vunpack.c.l.b16 %v4118
          %v4254 = vunpack.c.l.b16 %v4119
          %v4255 = vunpack.c.l.b16 %v4120
          %v4256 = vunpack.c.l.b16 %v4121
          %v4257 = vunpack.c.l.b16 %v4122
          %v4258 = vunpack.c.l.b16 %v4123
          %v4259 = vunpack.c.l.b16 %v4124
          %v4260 = vunpack.c.l.b16 %v4125
          %v4261 = vunpack.c.l.b16 %v4126
          %v4262 = vunpack.c.l.b16 %v4127
          %v4263 = vunpack.c.l.b16 %v4128
          %v4264 = vunpack.c.l.b16 %v4129
          %v4265 = vunpack.c.l.b16 %v4130
          %v4266 = vunpack.c.l.b16 %v4131
          %v4267 = vunpack.c.l.b16 %v4132
          %v4268 = vunpack.c.l.b16 %v4133
          %v4269 = vunpack.c.l.b16 %v4134
          %v4270 = vpack.c.b16 %v4207, %v4206
          %v4271 = vpack.c.b16 %v4209, %v4208
          %v4272 = vpack.c.b16 %v4211, %v4210
          %v4273 = vpack.c.b16 %v4213, %v4212
          %v4274 = vpack.c.b16 %v4215, %v4214
          %v4275 = vpack.c.b16 %v4217, %v4216
          %v4276 = vpack.c.b16 %v4219, %v4218
          %v4277 = vpack.c.b16 %v4221, %v4220
          %v4278 = vpack.c.b16 %v4223, %v4222
          %v4279 = vpack.c.b16 %v4225, %v4224
          %v4280 = vpack.c.b16 %v4227, %v4226
          %v4281 = vpack.c.b16 %v4229, %v4228
          %v4282 = vpack.c.b16 %v4231, %v4230
          %v4283 = vpack.c.b16 %v4233, %v4232
          %v4284 = vpack.c.b16 %v4235, %v4234
          %v4285 = vpack.c.b16 %v4237, %v4236
          %v4286 = vpack.c.b16 %v4239, %v4238
          %v4287 = vpack.c.b16 %v4241, %v4240
          %v4288 = vpack.c.b16 %v4243, %v4242
          %v4289 = vpack.c.b16 %v4245, %v4244
          %v4290 = vpack.c.b16 %v4247, %v4246
          %v4291 = vpack.c.b16 %v4249, %v4248
          %v4292 = vpack.c.b16 %v4251, %v4250
          %v4293 = vpack.c.b16 %v4253, %v4252
          %v4294 = vpack.c.b16 %v4255, %v4254
          %v4295 = vpack.c.b16 %v4257, %v4256
          %v4296 = vpack.c.b16 %v4259, %v4258
          %v4297 = vpack.c.b16 %v4261, %v4260
          %v4298 = vpack.c.b16 %v4263, %v4262
          %v4299 = vpack.c.b16 %v4265, %v4264
          %v4300 = vpack.c.b16 %v4267, %v4266
          %v4301 = vpack.c.b16 %v4269, %v4268
          %4334 = vmatprep.subr.bf16.mxu0 0
          %4335 = vmatpush1.bf16.msra.mxu0 %v4270
          %4336 = vmatprep.subr.bf16.mxu0 0
          %4337 = vmatpush1.bf16.msra.mxu0 %v4271
          %4338 = vmatprep.subr.bf16.mxu0 0
          %4339 = vmatpush1.bf16.msra.mxu0 %v4272
          %4340 = vmatprep.subr.bf16.mxu0 0
          %4341 = vmatpush1.bf16.msra.mxu0 %v4273
          %4342 = vmatprep.subr.bf16.mxu0 0
          %4343 = vmatpush1.bf16.msra.mxu0 %v4274
          %4344 = vmatprep.subr.bf16.mxu0 0
          %4345 = vmatpush1.bf16.msra.mxu0 %v4275
          %4346 = vmatprep.subr.bf16.mxu0 0
          %4347 = vmatpush1.bf16.msra.mxu0 %v4276
          %4348 = vmatprep.subr.bf16.mxu0 0
          %4349 = vmatpush1.bf16.msra.mxu0 %v4277
          %4350 = vmatprep.subr.bf16.mxu0 0
          %4351 = vmatpush1.bf16.msra.mxu0 %v4278
          %4352 = vmatprep.subr.bf16.mxu0 0
          %4353 = vmatpush1.bf16.msra.mxu0 %v4279
          %4354 = vmatprep.subr.bf16.mxu0 0
          %4355 = vmatpush1.bf16.msra.mxu0 %v4280
          %4356 = vmatprep.subr.bf16.mxu0 0
          %4357 = vmatpush1.bf16.msra.mxu0 %v4281
          %4358 = vmatprep.subr.bf16.mxu0 0
          %4359 = vmatpush1.bf16.msra.mxu0 %v4282
          %4360 = vmatprep.subr.bf16.mxu0 0
          %4361 = vmatpush1.bf16.msra.mxu0 %v4283
          %4362 = vmatprep.subr.bf16.mxu0 0
          %4363 = vmatpush1.bf16.msra.mxu0 %v4284
          %4364 = vmatprep.subr.bf16.mxu0 0
          %4365 = vmatpush1.bf16.msra.mxu0 %v4285
          %4366 = vmatprep.mubr.bf16.mxu0 %v4068
          %4367 = vmatmul.mubr.bf16.gmra.mrb[0].mxu0 %v4067
          %v4368 = vpop.f32.mrb[0].mxu0
          %v4369 = vadd.f32 %v4140, %v4368
          %v4370 = vpop.f32.mrb[0].mxu0
          %v4371 = vpop.f32.mrb[0].mxu0
          %v4372 = vpop.f32.mrb[0].mxu0
          %4373 = vdwg.mxu0
          %4374 = vmatprep.subr.bf16.mxu0 0
          %4375 = vmatpush1.bf16.msra.mxu0 %v4286
          %4376 = vmatprep.subr.bf16.mxu0 0
          %4377 = vmatpush1.bf16.msra.mxu0 %v4287
          %4378 = vmatprep.subr.bf16.mxu0 0
          %4379 = vmatpush1.bf16.msra.mxu0 %v4288
          %4380 = vmatprep.subr.bf16.mxu0 0
          %4381 = vmatpush1.bf16.msra.mxu0 %v4289
          %4382 = vmatprep.subr.bf16.mxu0 0
          %4383 = vmatpush1.bf16.msra.mxu0 %v4290
          %4384 = vmatprep.subr.bf16.mxu0 0
          %4385 = vmatpush1.bf16.msra.mxu0 %v4291
          %4386 = vmatprep.subr.bf16.mxu0 0
          %4387 = vmatpush1.bf16.msra.mxu0 %v4292
          %4388 = vmatprep.subr.bf16.mxu0 0
          %4389 = vmatpush1.bf16.msra.mxu0 %v4293
          %4390 = vmatprep.subr.bf16.mxu0 0
          %4391 = vmatpush1.bf16.msra.mxu0 %v4294
          %4392 = vmatprep.subr.bf16.mxu0 0
          %4393 = vmatpush1.bf16.msra.mxu0 %v4295
          %4394 = vmatprep.subr.bf16.mxu0 0
          %4395 = vmatpush1.bf16.msra.mxu0 %v4296
          %4396 = vmatprep.subr.bf16.mxu0 0
          %4397 = vmatpush1.bf16.msra.mxu0 %v4297
          %4398 = vmatprep.subr.bf16.mxu0 0
          %4399 = vmatpush1.bf16.msra.mxu0 %v4298
          %4400 = vmatprep.subr.bf16.mxu0 0
          %4401 = vmatpush1.bf16.msra.mxu0 %v4299
          %4402 = vmatprep.subr.bf16.mxu0 0
          %4403 = vmatpush1.bf16.msra.mxu0 %v4300
          %4404 = vmatprep.subr.bf16.mxu0 0
          %4405 = vmatpush1.bf16.msra.mxu0 %v4301
          %4406 = vmatprep.mubr.bf16.mxu0 %v4070
          %4407 = vmatmul.mubr.bf16.gmra.mrb[0].mxu0 %v4069
          %v4408 = vpop.f32.mrb[0].mxu0
          %v4409 = vadd.f32 %v4369, %v4408
          %v4410 = vpop.f32.mrb[0].mxu0
          %v4411 = vpop.f32.mrb[0].mxu0
          %v4412 = vpop.f32.mrb[0].mxu0
          %4413 = vdwg.mxu0
          %4414 = vst [vmem:[#allocation19] sm:$0xff] %v4409
        $region100: #{tpu_custom_call.1} parent=55 // pred_fallthru
          _
        // Predicated region
        $region101: #{tpu_custom_call.1} parent=55 // pred_check
          %p4415 = pneg %p235
        $region102: #{tpu_custom_call.1} parent=55 // pred_check_branch
          %4417 = sbr.rel (%p4415) target = $region104
        $region103: #{tpu_custom_call.1} parent=55 // pred_region
          %s4419 = ssub.s32 128, 128
          %4420 = vsyncadd [#allocation6], %s4419
          %s4422 = sshll.u32 [#allocation19], 4
          %s4423 = int_to_ptr.vmem [resolvable:$true] %s4422
          %4425 = dma.vmem_to_hbm [thread:$0]  %s4423, 128, %s9, [#allocation6]
        $region104: #{tpu_custom_call.1} parent=55 // pred_fallthru
          _
        // Predicated region
        $region105: #{tpu_custom_call.1} parent=55 // pred_check
          %p4426 = pneg %p235
        $region106: #{tpu_custom_call.1} parent=55 // pred_check_branch
          %4428 = sbr.rel (%p4426) target = $region108
        $region107: #{tpu_custom_call.1} parent=55 // pred_region
          %4429 = dma.done [#allocation6], 128
        $region108: #{tpu_custom_call.1} parent=55 // pred_fallthru
          _
      $region56: #{tpu_custom_call.1} parent=5 // pred_fallthru
        _
      %p4430 = scmp.le.s32.totalorder 2, %s23
      // Predicated region
      $region109: #{tpu_custom_call.1} parent=5 // pred_check
        %p4431 = pneg %p4430
      $region110: #{tpu_custom_call.1} parent=5 // pred_check_branch
        %4433 = sbr.rel (%p4431) target = $region112
      $region111: #{tpu_custom_call.1} parent=5 // pred_region
        %s4434 = ssub.s32 %s23, 2
      $region112: #{tpu_custom_call.1} parent=5 // pred_fallthru
        _
    $region6: #{tpu_custom_call.1} parent=1 // loop_footer
      %s27 = sadd.s32 1, %s23
    $region7: #{tpu_custom_call.1} parent=1 // loop_footer_branch
      %22 = sbr.rel target = $region3
    $region8: #{tpu_custom_call.1} parent=1 // loop_exit
      _
    %4435 = vsyncpa [#allocation5], 1
    %s4436 = scalar_lea.sflag [#allocation5], 1
    %4437 = vsyncpa %s4436, 1
    %4438 = vsyncpa [#allocation8], 1
    %4439 = vsyncpa [#allocation11], 1
    %s4440 = scalar_lea.sflag [#allocation11], 1
    %4441 = vsyncpa %s4440, 1
    %4442 = vsyncpa [#allocation14], 1
    %4443 = vsyncpa [#allocation17], 1
    %4444 = vsyncpa [#allocation6], 1
    %s4445 = scalar_lea.sflag [#allocation6], 1
    %4446 = vsyncpa %s4445, 1

</llo_original>
